<compile_context>
chip_gen: v7x
topology: tpu7x:2x2x1
jax: 0.10.0
libtpu: 0.0.40
codegen_flags: <defaults>
</compile_context>

<pallas_src>
import jax
import jax.numpy as jnp
import numpy as np
from jax.experimental import pallas as pl
from jax.experimental.pallas import tpu as pltpu

# -----------------------------------------------------------------------------
# Config (small, consistent with the module's __init__)
# -----------------------------------------------------------------------------
VOCAB_SIZE = 50
EMBED_DIM = 16
HIDDEN_SIZE = 32
OUTPUT_SIZE = 4
NUM_LAYERS = 2
TYPE_RNN = "gru"   # this script implements the GRU branch of the module
BATCH = 4
SEQ_LEN = 8


# -----------------------------------------------------------------------------
# Fused Pallas kernel: (embedding . layer-0 proj) -> NUM_LAYERS x GRU -> FC
# -----------------------------------------------------------------------------
def make_fused_kernel(num_layers, T, B, H):
    def kernel(ids_ref, mask_ref, e0_ref, whh0_ref, bhn0_ref, *rest):
        # rest = [wih_l, bx_l, whh_l, bhn_l] * (num_layers-1) + [fcw, fcb]
        #        + [out_ref] + [x_buf scratch]
        n_up = 4 * (num_layers - 1)
        upper = rest[:n_up]
        fcw_ref, fcb_ref = rest[n_up], rest[n_up + 1]
        out_ref = rest[n_up + 2]
        x_buf = rest[n_up + 3]                                  # VMEM (T*B, H)

        TB = T * B
        V = e0_ref.shape[0]

        # ---- embedding gather as one-hot matmul, with layer-0 W_ih + bias ----
        # already folded into the (V, 3H) table E0 (each one-hot row sums to 1).
        ids = ids_ref[...]                                      # (T*B, 1) i32
        iota_v = jax.lax.broadcasted_iota(jnp.int32, (TB, V), 1)
        onehot = (iota_v == ids).astype(jnp.float32)            # (T*B, V)
        gx = jnp.dot(onehot, e0_ref[...],
                     preferred_element_type=jnp.float32)        # (T*B, 3H)

        # ---- hoisted freeze mask (valid-step) and its complement ----
        m_all = mask_ref[...]                                   # (T*B, 1) in {0,1}
        nm_all = 1.0 - m_all

        h_final = None
        for l in range(num_layers):
            if l == 0:
                whh = whh0_ref[...]                             # (H, 3H) fused r|z|n
                bhn = bhn0_ref[...]                             # (1, H)
            else:
                wih_ref, bx_ref, whh_ref, bhn_ref = upper[4 * (l - 1): 4 * l]
                # hoisted fused input projection for ALL timesteps at once
                gx = jnp.dot(x_buf[...], wih_ref[...],
                             preferred_element_type=jnp.float32) + bx_ref[...]
                whh = whh_ref[...]
                bhn = bhn_ref[...]

            write_seq = (l + 1 < num_layers)
            h = jnp.zeros((B, H), jnp.float32)
            for t in range(T):      # static unroll: only h @ W_hh on serial chain
                lo = t * B                                      # 8-aligned rows
                gx_t = gx[lo:lo + B, :]                         # (B, 3H)
                gh = jnp.dot(h, whh,
                             preferred_element_type=jnp.float32)  # (B, 3H), 1 dot
                rz = jax.nn.sigmoid(gx_t[:, :2 * H] + gh[:, :2 * H])  # one EUP slab
                r = rz[:, :H]
                z = rz[:, H:2 * H]
                n = jnp.tanh(gx_t[:, 2 * H:] + r * (gh[:, 2 * H:] + bhn))
                h_new = (1.0 - z) * n + z * h
                # packed-sequence semantics: freeze h once t >= lengths[b]
                # (exact blend for mask in {0,1})
                m = m_all[lo:lo + B, :]
                nm = nm_all[lo:lo + B, :]
                h = m * h_new + nm * h
                if write_seq:
                    x_buf[pl.ds(lo, B), :] = h                  # input to next layer
            h_final = h

        # out = fc(hidden[-1]); written once at the very end.
        out_ref[...] = (jnp.dot(h_final, fcw_ref[...],
                                preferred_element_type=jnp.float32) + fcb_ref[...])

    return kernel


# -----------------------------------------------------------------------------
# Parameter packing (done once, outside the jitted forward)
# -----------------------------------------------------------------------------
def pack_params(params):
    """PyTorch-layout params -> fused, pre-transposed kernel operands.

    Gate order along the fused lane axis is [r | z | n] (PyTorch GRU order).
    Layer 0's W_ih and combined bias are folded into the embedding table.
    """
    emb = params["embedding"].astype(jnp.float32)                  # (V, E)
    packed = []
    for l, (w_ih, w_hh, b_ih, b_hh) in enumerate(params["gru"]):
        H = w_hh.shape[1]
        wih_f = w_ih.T.astype(jnp.float32)                         # (In, 3H)
        whh_f = w_hh.T.astype(jnp.float32)                         # (H, 3H)
        bx_f = jnp.concatenate([
            b_ih[0:H] + b_hh[0:H],              # r: b_ir + b_hr
            b_ih[H:2 * H] + b_hh[H:2 * H],      # z: b_iz + b_hz
            b_ih[2 * H:3 * H],                  # n: b_in
        ]).reshape(1, 3 * H).astype(jnp.float32)                   # (1, 3H)
        bhn = b_hh[2 * H:3 * H].reshape(1, H).astype(jnp.float32)  # (1, H)

        if l == 0:
            # Constant-fold embedding + layer-0 input proj + bias: one (V,3H) table.
            e0 = (emb @ wih_f + bx_f).astype(jnp.float32)          # (V, 3H)
            packed += [e0, whh_f, bhn]
        else:
            packed += [wih_f, bx_f, whh_f, bhn]

    packed.append(params["fc_w"].T.astype(jnp.float32))            # (H, O)
    packed.append(params["fc_b"].reshape(1, -1).astype(jnp.float32))  # (1, O)
    return tuple(packed)


# -----------------------------------------------------------------------------
# Forward wrapper (single grid-less pallas_call)
# -----------------------------------------------------------------------------
@jax.jit
def text_classifier_forward(text, lengths, packed):
    B, T = text.shape
    B_pad = ((B + 7) // 8) * 8                 # sublane-align the batch
    pad = B_pad - B
    text_p = jnp.pad(text.astype(jnp.int32), ((0, pad), (0, 0)))   # pad token = 0
    len_p = jnp.pad(lengths.astype(jnp.int32), (0, pad))           # pad length = 0

    # time-major flatten: row index = t * B_pad + b
    ids_tb = jnp.transpose(text_p).reshape(T * B_pad, 1)
    # hoisted packed-sequence freeze mask: mask[t*B+b] = (t < lengths[b])
    mask_tb = (jnp.arange(T, dtype=jnp.int32)[:, None] < len_p[None, :]
               ).astype(jnp.float32).reshape(T * B_pad, 1)

    O = packed[-1].shape[-1]
    args = (ids_tb, mask_tb) + tuple(packed)

    out = pl.pallas_call(
        make_fused_kernel(NUM_LAYERS, T, B_pad, HIDDEN_SIZE),
        out_shape=jax.ShapeDtypeStruct((B_pad, O), jnp.float32),
        in_specs=[pl.BlockSpec(memory_space=pltpu.MemorySpace.VMEM)] * len(args),
        out_specs=pl.BlockSpec(memory_space=pltpu.MemorySpace.VMEM),
        scratch_shapes=[pltpu.VMEM((T * B_pad, HIDDEN_SIZE), jnp.float32)],
    )(*args)
    return out[:B]


# -----------------------------------------------------------------------------
# Pure-JAX reference (same math) for a correctness check
# -----------------------------------------------------------------------------
def gru_ref_layer(x_tbe, lengths, w_ih, w_hh, b_ih, b_hh):
    T, B, _ = x_tbe.shape
    H = w_hh.shape[1]

    def step(h, inp):
        x_t, t = inp
        gx = x_t @ w_ih.T + b_ih
        gh = h @ w_hh.T + b_hh
        r = jax.nn.sigmoid(gx[:, :H] + gh[:, :H])
        z = jax.nn.sigmoid(gx[:, H:2 * H] + gh[:, H:2 * H])
        n = jnp.tanh(gx[:, 2 * H:] + r * gh[:, 2 * H:])
        h_new = (1.0 - z) * n + z * h
        h = jnp.where((t < lengths)[:, None], h_new, h)
        return h, h

    h0 = jnp.zeros((B, H), jnp.float32)
    hT, hseq = jax.lax.scan(step, h0, (x_tbe, jnp.arange(T)))
    return hseq, hT


def reference_forward(text, lengths, params):
    emb = jnp.take(params["embedding"], text, axis=0)
    x = jnp.transpose(emb, (1, 0, 2)).astype(jnp.float32)
    h_final = None
    for l in range(NUM_LAYERS):
        w_ih, w_hh, b_ih, b_hh = params["gru"][l]
        x, h_final = gru_ref_layer(x, lengths, w_ih, w_hh, b_ih, b_hh)
    return h_final @ params["fc_w"].T + params["fc_b"]


# -----------------------------------------------------------------------------
# Deterministic parameter init (PyTorch-style uniform(-1/sqrt(H), 1/sqrt(H)))
# -----------------------------------------------------------------------------
def init_params(key):
    keys = jax.random.split(key, 3 + 4 * NUM_LAYERS)
    k = 1.0 / np.sqrt(HIDDEN_SIZE)

    emb = jax.random.normal(keys[0], (VOCAB_SIZE, EMBED_DIM), jnp.float32)
    emb = emb.at[0].set(0.0)  # padding_idx=0

    gru = []
    for l in range(NUM_LAYERS):
        in_dim = EMBED_DIM if l == 0 else HIDDEN_SIZE
        kk = keys[3 + 4 * l: 3 + 4 * (l + 1)]
        w_ih = jax.random.uniform(kk[0], (3 * HIDDEN_SIZE, in_dim), jnp.float32, -k, k)
        w_hh = jax.random.uniform(kk[1], (3 * HIDDEN_SIZE, HIDDEN_SIZE), jnp.float32, -k, k)
        b_ih = jax.random.uniform(kk[2], (3 * HIDDEN_SIZE,), jnp.float32, -k, k)
        b_hh = jax.random.uniform(kk[3], (3 * HIDDEN_SIZE,), jnp.float32, -k, k)
        gru.append((w_ih, w_hh, b_ih, b_hh))

    fc_w = jax.random.uniform(keys[1], (OUTPUT_SIZE, HIDDEN_SIZE), jnp.float32, -k, k)
    fc_b = jax.random.uniform(keys[2], (OUTPUT_SIZE,), jnp.float32, -k, k)
    return {"embedding": emb, "gru": gru, "fc_w": fc_w, "fc_b": fc_b}


# -----------------------------------------------------------------------------
if __name__ == "__main__":
    root = jax.random.PRNGKey(0)
    k_params, k_tok = jax.random.split(root)
    params = init_params(k_params)
    packed = pack_params(params)

    # token ids in [1, VOCAB); positions >= length use padding index 0
    lengths = jnp.array([8, 5, 3, 6], dtype=jnp.int32)            # (B,)
    tok = jax.random.randint(k_tok, (BATCH, SEQ_LEN), 1, VOCAB_SIZE)
    pos = jnp.arange(SEQ_LEN)[None, :]
    text = jnp.where(pos < lengths[:, None], tok, 0).astype(jnp.int32)  # (B, T)

    logits = text_classifier_forward(text, lengths, packed)
    jax.block_until_ready(logits)

    ref = reference_forward(text, lengths, params)
    np.testing.assert_allclose(np.asarray(logits), np.asarray(ref),
                               rtol=1e-4, atol=1e-4)

    assert logits.shape == (BATCH, OUTPUT_SIZE)
    print("KERNEL_OK")
</pallas_src>

<mosaic_0001>
module attributes {stable_mosaic.version = 11 : i64} {
  func.func @kernel(%arg0: memref<64x1xi32, #tpu.memory_space<vmem>>, %arg1: memref<64x1xf32, #tpu.memory_space<vmem>>, %arg2: memref<50x96xf32, #tpu.memory_space<vmem>>, %arg3: memref<32x96xf32, #tpu.memory_space<vmem>>, %arg4: memref<1x32xf32, #tpu.memory_space<vmem>>, %arg5: memref<32x96xf32, #tpu.memory_space<vmem>>, %arg6: memref<1x96xf32, #tpu.memory_space<vmem>>, %arg7: memref<32x96xf32, #tpu.memory_space<vmem>>, %arg8: memref<1x32xf32, #tpu.memory_space<vmem>>, %arg9: memref<32x4xf32, #tpu.memory_space<vmem>>, %arg10: memref<1x4xf32, #tpu.memory_space<vmem>>, %arg11: memref<8x4xf32, #tpu.memory_space<vmem>>, %arg12: memref<64x32xf32, #tpu.memory_space<vmem>>) attributes {dimension_semantics = [], scalar_prefetch = 0 : i64, scratch_operands = 1 : i64, tpu.core_type = #tpu.core_type<tc>} {
    %c0 = arith.constant 0 : index
    %c0_0 = arith.constant 0 : index
    %0 = vector.load %arg0[%c0, %c0_0] : memref<64x1xi32, #tpu.memory_space<vmem>>, vector<64x1xi32>
    %1 = tpu.iota {dimensions = array<i32: 1>} : vector<64x50xi32>
    %2 = vector.broadcast %0 : vector<64x1xi32> to vector<64x50xi32>
    %3 = arith.cmpi eq, %1, %2 : vector<64x50xi32>
    %4 = arith.extui %3 : vector<64x50xi1> to vector<64x50xi32>
    %5 = arith.sitofp %4 : vector<64x50xi32> to vector<64x50xf32>
    %c0_1 = arith.constant 0 : index
    %c0_2 = arith.constant 0 : index
    %6 = vector.load %arg2[%c0_1, %c0_2] : memref<50x96xf32, #tpu.memory_space<vmem>>, vector<50x96xf32>
    %cst = arith.constant dense<0.000000e+00> : vector<64x96xf32>
    %7 = tpu.matmul %5, %6, %cst {dimension_numbers = #tpu.dot_dimension_numbers<[1], [0], [0], [1], [0, 0, 1, 1], [], []>} : vector<64x50xf32>, vector<50x96xf32>, vector<64x96xf32> -> vector<64x96xf32>
    %c0_3 = arith.constant 0 : index
    %c0_4 = arith.constant 0 : index
    %8 = vector.load %arg1[%c0_3, %c0_4] : memref<64x1xf32, #tpu.memory_space<vmem>>, vector<64x1xf32>
    %cst_5 = arith.constant 1.000000e+00 : f32
    %9 = vector.broadcast %cst_5 : f32 to vector<64x1xf32>
    %10 = arith.subf %9, %8 : vector<64x1xf32>
    %c0_6 = arith.constant 0 : index
    %c0_7 = arith.constant 0 : index
    %11 = vector.load %arg3[%c0_6, %c0_7] : memref<32x96xf32, #tpu.memory_space<vmem>>, vector<32x96xf32>
    %c0_8 = arith.constant 0 : index
    %c0_9 = arith.constant 0 : index
    %12 = vector.load %arg4[%c0_8, %c0_9] : memref<1x32xf32, #tpu.memory_space<vmem>>, vector<1x32xf32>
    %cst_10 = arith.constant 0.000000e+00 : f32
    %13 = vector.broadcast %cst_10 : f32 to vector<8x32xf32>
    %14 = vector.extract_strided_slice %7 {offsets = [0, 0], sizes = [8, 96], strides = [1, 1]} : vector<64x96xf32> to vector<8x96xf32>
    %cst_11 = arith.constant dense<0.000000e+00> : vector<8x96xf32>
    %15 = tpu.matmul %13, %11, %cst_11 {dimension_numbers = #tpu.dot_dimension_numbers<[1], [0], [0], [1], [0, 0, 1, 1], [], []>} : vector<8x32xf32>, vector<32x96xf32>, vector<8x96xf32> -> vector<8x96xf32>
    %16 = vector.extract_strided_slice %14 {offsets = [0, 0], sizes = [8, 64], strides = [1, 1]} : vector<8x96xf32> to vector<8x64xf32>
    %17 = vector.extract_strided_slice %15 {offsets = [0, 0], sizes = [8, 64], strides = [1, 1]} : vector<8x96xf32> to vector<8x64xf32>
    %18 = arith.addf %16, %17 : vector<8x64xf32>
    %19 = arith.negf %18 : vector<8x64xf32>
    %20 = math.exp %19 : vector<8x64xf32>
    %cst_12 = arith.constant 1.000000e+00 : f32
    %21 = vector.broadcast %cst_12 : f32 to vector<8x64xf32>
    %22 = arith.addf %21, %20 : vector<8x64xf32>
    %23 = arith.divf %21, %22 : vector<8x64xf32>
    %24 = vector.extract_strided_slice %23 {offsets = [0, 0], sizes = [8, 32], strides = [1, 1]} : vector<8x64xf32> to vector<8x32xf32>
    %25 = vector.extract_strided_slice %23 {offsets = [0, 32], sizes = [8, 32], strides = [1, 1]} : vector<8x64xf32> to vector<8x32xf32>
    %26 = vector.extract_strided_slice %14 {offsets = [0, 64], sizes = [8, 32], strides = [1, 1]} : vector<8x96xf32> to vector<8x32xf32>
    %27 = vector.extract_strided_slice %15 {offsets = [0, 64], sizes = [8, 32], strides = [1, 1]} : vector<8x96xf32> to vector<8x32xf32>
    %28 = vector.broadcast %12 : vector<1x32xf32> to vector<8x32xf32>
    %29 = arith.addf %27, %28 : vector<8x32xf32>
    %30 = arith.mulf %24, %29 : vector<8x32xf32>
    %31 = arith.addf %26, %30 : vector<8x32xf32>
    %32 = math.tanh %31 : vector<8x32xf32>
    %cst_13 = arith.constant 1.000000e+00 : f32
    %33 = vector.broadcast %cst_13 : f32 to vector<8x32xf32>
    %34 = arith.subf %33, %25 : vector<8x32xf32>
    %35 = arith.mulf %34, %32 : vector<8x32xf32>
    %36 = arith.mulf %25, %13 : vector<8x32xf32>
    %37 = arith.addf %35, %36 : vector<8x32xf32>
    %38 = vector.extract_strided_slice %8 {offsets = [0, 0], sizes = [8, 1], strides = [1, 1]} : vector<64x1xf32> to vector<8x1xf32>
    %39 = vector.extract_strided_slice %10 {offsets = [0, 0], sizes = [8, 1], strides = [1, 1]} : vector<64x1xf32> to vector<8x1xf32>
    %40 = vector.broadcast %38 : vector<8x1xf32> to vector<8x32xf32>
    %41 = arith.mulf %40, %37 : vector<8x32xf32>
    %42 = vector.broadcast %39 : vector<8x1xf32> to vector<8x32xf32>
    %43 = arith.mulf %42, %13 : vector<8x32xf32>
    %44 = arith.addf %41, %43 : vector<8x32xf32>
    %c0_14 = arith.constant 0 : index
    %c0_15 = arith.constant 0 : index
    %45 = vector.load %arg12[%c0_14, %c0_15] : memref<64x32xf32, #tpu.memory_space<vmem>>, vector<8x32xf32>
    tpu.vector_store %arg12[%c0_14, %c0_15], %44 {strides = array<i32>} : memref<64x32xf32, #tpu.memory_space<vmem>>, vector<8x32xf32>,
    %46 = vector.extract_strided_slice %7 {offsets = [8, 0], sizes = [8, 96], strides = [1, 1]} : vector<64x96xf32> to vector<8x96xf32>
    %cst_16 = arith.constant dense<0.000000e+00> : vector<8x96xf32>
    %47 = tpu.matmul %44, %11, %cst_16 {dimension_numbers = #tpu.dot_dimension_numbers<[1], [0], [0], [1], [0, 0, 1, 1], [], []>} : vector<8x32xf32>, vector<32x96xf32>, vector<8x96xf32> -> vector<8x96xf32>
    %48 = vector.extract_strided_slice %46 {offsets = [0, 0], sizes = [8, 64], strides = [1, 1]} : vector<8x96xf32> to vector<8x64xf32>
    %49 = vector.extract_strided_slice %47 {offsets = [0, 0], sizes = [8, 64], strides = [1, 1]} : vector<8x96xf32> to vector<8x64xf32>
    %50 = arith.addf %48, %49 : vector<8x64xf32>
    %51 = arith.negf %50 : vector<8x64xf32>
    %52 = math.exp %51 : vector<8x64xf32>
    %cst_17 = arith.constant 1.000000e+00 : f32
    %53 = vector.broadcast %cst_17 : f32 to vector<8x64xf32>
    %54 = arith.addf %53, %52 : vector<8x64xf32>
    %55 = arith.divf %53, %54 : vector<8x64xf32>
    %56 = vector.extract_strided_slice %55 {offsets = [0, 0], sizes = [8, 32], strides = [1, 1]} : vector<8x64xf32> to vector<8x32xf32>
    %57 = vector.extract_strided_slice %55 {offsets = [0, 32], sizes = [8, 32], strides = [1, 1]} : vector<8x64xf32> to vector<8x32xf32>
    %58 = vector.extract_strided_slice %46 {offsets = [0, 64], sizes = [8, 32], strides = [1, 1]} : vector<8x96xf32> to vector<8x32xf32>
    %59 = vector.extract_strided_slice %47 {offsets = [0, 64], sizes = [8, 32], strides = [1, 1]} : vector<8x96xf32> to vector<8x32xf32>
    %60 = vector.broadcast %12 : vector<1x32xf32> to vector<8x32xf32>
    %61 = arith.addf %59, %60 : vector<8x32xf32>
    %62 = arith.mulf %56, %61 : vector<8x32xf32>
    %63 = arith.addf %58, %62 : vector<8x32xf32>
    %64 = math.tanh %63 : vector<8x32xf32>
    %cst_18 = arith.constant 1.000000e+00 : f32
    %65 = vector.broadcast %cst_18 : f32 to vector<8x32xf32>
    %66 = arith.subf %65, %57 : vector<8x32xf32>
    %67 = arith.mulf %66, %64 : vector<8x32xf32>
    %68 = arith.mulf %57, %44 : vector<8x32xf32>
    %69 = arith.addf %67, %68 : vector<8x32xf32>
    %70 = vector.extract_strided_slice %8 {offsets = [8, 0], sizes = [8, 1], strides = [1, 1]} : vector<64x1xf32> to vector<8x1xf32>
    %71 = vector.extract_strided_slice %10 {offsets = [8, 0], sizes = [8, 1], strides = [1, 1]} : vector<64x1xf32> to vector<8x1xf32>
    %72 = vector.broadcast %70 : vector<8x1xf32> to vector<8x32xf32>
    %73 = arith.mulf %72, %69 : vector<8x32xf32>
    %74 = vector.broadcast %71 : vector<8x1xf32> to vector<8x32xf32>
    %75 = arith.mulf %74, %44 : vector<8x32xf32>
    %76 = arith.addf %73, %75 : vector<8x32xf32>
    %c8 = arith.constant 8 : index
    %c0_19 = arith.constant 0 : index
    %77 = vector.load %arg12[%c8, %c0_19] : memref<64x32xf32, #tpu.memory_space<vmem>>, vector<8x32xf32>
    tpu.vector_store %arg12[%c8, %c0_19], %76 {strides = array<i32>} : memref<64x32xf32, #tpu.memory_space<vmem>>, vector<8x32xf32>,
    %78 = vector.extract_strided_slice %7 {offsets = [16, 0], sizes = [8, 96], strides = [1, 1]} : vector<64x96xf32> to vector<8x96xf32>
    %cst_20 = arith.constant dense<0.000000e+00> : vector<8x96xf32>
    %79 = tpu.matmul %76, %11, %cst_20 {dimension_numbers = #tpu.dot_dimension_numbers<[1], [0], [0], [1], [0, 0, 1, 1], [], []>} : vector<8x32xf32>, vector<32x96xf32>, vector<8x96xf32> -> vector<8x96xf32>
    %80 = vector.extract_strided_slice %78 {offsets = [0, 0], sizes = [8, 64], strides = [1, 1]} : vector<8x96xf32> to vector<8x64xf32>
    %81 = vector.extract_strided_slice %79 {offsets = [0, 0], sizes = [8, 64], strides = [1, 1]} : vector<8x96xf32> to vector<8x64xf32>
    %82 = arith.addf %80, %81 : vector<8x64xf32>
    %83 = arith.negf %82 : vector<8x64xf32>
    %84 = math.exp %83 : vector<8x64xf32>
    %cst_21 = arith.constant 1.000000e+00 : f32
    %85 = vector.broadcast %cst_21 : f32 to vector<8x64xf32>
    %86 = arith.addf %85, %84 : vector<8x64xf32>
    %87 = arith.divf %85, %86 : vector<8x64xf32>
    %88 = vector.extract_strided_slice %87 {offsets = [0, 0], sizes = [8, 32], strides = [1, 1]} : vector<8x64xf32> to vector<8x32xf32>
    %89 = vector.extract_strided_slice %87 {offsets = [0, 32], sizes = [8, 32], strides = [1, 1]} : vector<8x64xf32> to vector<8x32xf32>
    %90 = vector.extract_strided_slice %78 {offsets = [0, 64], sizes = [8, 32], strides = [1, 1]} : vector<8x96xf32> to vector<8x32xf32>
    %91 = vector.extract_strided_slice %79 {offsets = [0, 64], sizes = [8, 32], strides = [1, 1]} : vector<8x96xf32> to vector<8x32xf32>
    %92 = vector.broadcast %12 : vector<1x32xf32> to vector<8x32xf32>
    %93 = arith.addf %91, %92 : vector<8x32xf32>
    %94 = arith.mulf %88, %93 : vector<8x32xf32>
    %95 = arith.addf %90, %94 : vector<8x32xf32>
    %96 = math.tanh %95 : vector<8x32xf32>
    %cst_22 = arith.constant 1.000000e+00 : f32
    %97 = vector.broadcast %cst_22 : f32 to vector<8x32xf32>
    %98 = arith.subf %97, %89 : vector<8x32xf32>
    %99 = arith.mulf %98, %96 : vector<8x32xf32>
    %100 = arith.mulf %89, %76 : vector<8x32xf32>
    %101 = arith.addf %99, %100 : vector<8x32xf32>
    %102 = vector.extract_strided_slice %8 {offsets = [16, 0], sizes = [8, 1], strides = [1, 1]} : vector<64x1xf32> to vector<8x1xf32>
    %103 = vector.extract_strided_slice %10 {offsets = [16, 0], sizes = [8, 1], strides = [1, 1]} : vector<64x1xf32> to vector<8x1xf32>
    %104 = vector.broadcast %102 : vector<8x1xf32> to vector<8x32xf32>
    %105 = arith.mulf %104, %101 : vector<8x32xf32>
    %106 = vector.broadcast %103 : vector<8x1xf32> to vector<8x32xf32>
    %107 = arith.mulf %106, %76 : vector<8x32xf32>
    %108 = arith.addf %105, %107 : vector<8x32xf32>
    %c16 = arith.constant 16 : index
    %c0_23 = arith.constant 0 : index
    %109 = vector.load %arg12[%c16, %c0_23] : memref<64x32xf32, #tpu.memory_space<vmem>>, vector<8x32xf32>
    tpu.vector_store %arg12[%c16, %c0_23], %108 {strides = array<i32>} : memref<64x32xf32, #tpu.memory_space<vmem>>, vector<8x32xf32>,
    %110 = vector.extract_strided_slice %7 {offsets = [24, 0], sizes = [8, 96], strides = [1, 1]} : vector<64x96xf32> to vector<8x96xf32>
    %cst_24 = arith.constant dense<0.000000e+00> : vector<8x96xf32>
    %111 = tpu.matmul %108, %11, %cst_24 {dimension_numbers = #tpu.dot_dimension_numbers<[1], [0], [0], [1], [0, 0, 1, 1], [], []>} : vector<8x32xf32>, vector<32x96xf32>, vector<8x96xf32> -> vector<8x96xf32>
    %112 = vector.extract_strided_slice %110 {offsets = [0, 0], sizes = [8, 64], strides = [1, 1]} : vector<8x96xf32> to vector<8x64xf32>
    %113 = vector.extract_strided_slice %111 {offsets = [0, 0], sizes = [8, 64], strides = [1, 1]} : vector<8x96xf32> to vector<8x64xf32>
    %114 = arith.addf %112, %113 : vector<8x64xf32>
    %115 = arith.negf %114 : vector<8x64xf32>
    %116 = math.exp %115 : vector<8x64xf32>
    %cst_25 = arith.constant 1.000000e+00 : f32
    %117 = vector.broadcast %cst_25 : f32 to vector<8x64xf32>
    %118 = arith.addf %117, %116 : vector<8x64xf32>
    %119 = arith.divf %117, %118 : vector<8x64xf32>
    %120 = vector.extract_strided_slice %119 {offsets = [0, 0], sizes = [8, 32], strides = [1, 1]} : vector<8x64xf32> to vector<8x32xf32>
    %121 = vector.extract_strided_slice %119 {offsets = [0, 32], sizes = [8, 32], strides = [1, 1]} : vector<8x64xf32> to vector<8x32xf32>
    %122 = vector.extract_strided_slice %110 {offsets = [0, 64], sizes = [8, 32], strides = [1, 1]} : vector<8x96xf32> to vector<8x32xf32>
    %123 = vector.extract_strided_slice %111 {offsets = [0, 64], sizes = [8, 32], strides = [1, 1]} : vector<8x96xf32> to vector<8x32xf32>
    %124 = vector.broadcast %12 : vector<1x32xf32> to vector<8x32xf32>
    %125 = arith.addf %123, %124 : vector<8x32xf32>
    %126 = arith.mulf %120, %125 : vector<8x32xf32>
    %127 = arith.addf %122, %126 : vector<8x32xf32>
    %128 = math.tanh %127 : vector<8x32xf32>
    %cst_26 = arith.constant 1.000000e+00 : f32
    %129 = vector.broadcast %cst_26 : f32 to vector<8x32xf32>
    %130 = arith.subf %129, %121 : vector<8x32xf32>
    %131 = arith.mulf %130, %128 : vector<8x32xf32>
    %132 = arith.mulf %121, %108 : vector<8x32xf32>
    %133 = arith.addf %131, %132 : vector<8x32xf32>
    %134 = vector.extract_strided_slice %8 {offsets = [24, 0], sizes = [8, 1], strides = [1, 1]} : vector<64x1xf32> to vector<8x1xf32>
    %135 = vector.extract_strided_slice %10 {offsets = [24, 0], sizes = [8, 1], strides = [1, 1]} : vector<64x1xf32> to vector<8x1xf32>
    %136 = vector.broadcast %134 : vector<8x1xf32> to vector<8x32xf32>
    %137 = arith.mulf %136, %133 : vector<8x32xf32>
    %138 = vector.broadcast %135 : vector<8x1xf32> to vector<8x32xf32>
    %139 = arith.mulf %138, %108 : vector<8x32xf32>
    %140 = arith.addf %137, %139 : vector<8x32xf32>
    %c24 = arith.constant 24 : index
    %c0_27 = arith.constant 0 : index
    %141 = vector.load %arg12[%c24, %c0_27] : memref<64x32xf32, #tpu.memory_space<vmem>>, vector<8x32xf32>
    tpu.vector_store %arg12[%c24, %c0_27], %140 {strides = array<i32>} : memref<64x32xf32, #tpu.memory_space<vmem>>, vector<8x32xf32>,
    %142 = vector.extract_strided_slice %7 {offsets = [32, 0], sizes = [8, 96], strides = [1, 1]} : vector<64x96xf32> to vector<8x96xf32>
    %cst_28 = arith.constant dense<0.000000e+00> : vector<8x96xf32>
    %143 = tpu.matmul %140, %11, %cst_28 {dimension_numbers = #tpu.dot_dimension_numbers<[1], [0], [0], [1], [0, 0, 1, 1], [], []>} : vector<8x32xf32>, vector<32x96xf32>, vector<8x96xf32> -> vector<8x96xf32>
    %144 = vector.extract_strided_slice %142 {offsets = [0, 0], sizes = [8, 64], strides = [1, 1]} : vector<8x96xf32> to vector<8x64xf32>
    %145 = vector.extract_strided_slice %143 {offsets = [0, 0], sizes = [8, 64], strides = [1, 1]} : vector<8x96xf32> to vector<8x64xf32>
    %146 = arith.addf %144, %145 : vector<8x64xf32>
    %147 = arith.negf %146 : vector<8x64xf32>
    %148 = math.exp %147 : vector<8x64xf32>
    %cst_29 = arith.constant 1.000000e+00 : f32
    %149 = vector.broadcast %cst_29 : f32 to vector<8x64xf32>
    %150 = arith.addf %149, %148 : vector<8x64xf32>
    %151 = arith.divf %149, %150 : vector<8x64xf32>
    %152 = vector.extract_strided_slice %151 {offsets = [0, 0], sizes = [8, 32], strides = [1, 1]} : vector<8x64xf32> to vector<8x32xf32>
    %153 = vector.extract_strided_slice %151 {offsets = [0, 32], sizes = [8, 32], strides = [1, 1]} : vector<8x64xf32> to vector<8x32xf32>
    %154 = vector.extract_strided_slice %142 {offsets = [0, 64], sizes = [8, 32], strides = [1, 1]} : vector<8x96xf32> to vector<8x32xf32>
    %155 = vector.extract_strided_slice %143 {offsets = [0, 64], sizes = [8, 32], strides = [1, 1]} : vector<8x96xf32> to vector<8x32xf32>
    %156 = vector.broadcast %12 : vector<1x32xf32> to vector<8x32xf32>
    %157 = arith.addf %155, %156 : vector<8x32xf32>
    %158 = arith.mulf %152, %157 : vector<8x32xf32>
    %159 = arith.addf %154, %158 : vector<8x32xf32>
    %160 = math.tanh %159 : vector<8x32xf32>
    %cst_30 = arith.constant 1.000000e+00 : f32
    %161 = vector.broadcast %cst_30 : f32 to vector<8x32xf32>
    %162 = arith.subf %161, %153 : vector<8x32xf32>
    %163 = arith.mulf %162, %160 : vector<8x32xf32>
    %164 = arith.mulf %153, %140 : vector<8x32xf32>
    %165 = arith.addf %163, %164 : vector<8x32xf32>
    %166 = vector.extract_strided_slice %8 {offsets = [32, 0], sizes = [8, 1], strides = [1, 1]} : vector<64x1xf32> to vector<8x1xf32>
    %167 = vector.extract_strided_slice %10 {offsets = [32, 0], sizes = [8, 1], strides = [1, 1]} : vector<64x1xf32> to vector<8x1xf32>
    %168 = vector.broadcast %166 : vector<8x1xf32> to vector<8x32xf32>
    %169 = arith.mulf %168, %165 : vector<8x32xf32>
    %170 = vector.broadcast %167 : vector<8x1xf32> to vector<8x32xf32>
    %171 = arith.mulf %170, %140 : vector<8x32xf32>
    %172 = arith.addf %169, %171 : vector<8x32xf32>
    %c32 = arith.constant 32 : index
    %c0_31 = arith.constant 0 : index
    %173 = vector.load %arg12[%c32, %c0_31] : memref<64x32xf32, #tpu.memory_space<vmem>>, vector<8x32xf32>
    tpu.vector_store %arg12[%c32, %c0_31], %172 {strides = array<i32>} : memref<64x32xf32, #tpu.memory_space<vmem>>, vector<8x32xf32>,
    %174 = vector.extract_strided_slice %7 {offsets = [40, 0], sizes = [8, 96], strides = [1, 1]} : vector<64x96xf32> to vector<8x96xf32>
    %cst_32 = arith.constant dense<0.000000e+00> : vector<8x96xf32>
    %175 = tpu.matmul %172, %11, %cst_32 {dimension_numbers = #tpu.dot_dimension_numbers<[1], [0], [0], [1], [0, 0, 1, 1], [], []>} : vector<8x32xf32>, vector<32x96xf32>, vector<8x96xf32> -> vector<8x96xf32>
    %176 = vector.extract_strided_slice %174 {offsets = [0, 0], sizes = [8, 64], strides = [1, 1]} : vector<8x96xf32> to vector<8x64xf32>
    %177 = vector.extract_strided_slice %175 {offsets = [0, 0], sizes = [8, 64], strides = [1, 1]} : vector<8x96xf32> to vector<8x64xf32>
    %178 = arith.addf %176, %177 : vector<8x64xf32>
    %179 = arith.negf %178 : vector<8x64xf32>
    %180 = math.exp %179 : vector<8x64xf32>
    %cst_33 = arith.constant 1.000000e+00 : f32
    %181 = vector.broadcast %cst_33 : f32 to vector<8x64xf32>
    %182 = arith.addf %181, %180 : vector<8x64xf32>
    %183 = arith.divf %181, %182 : vector<8x64xf32>
    %184 = vector.extract_strided_slice %183 {offsets = [0, 0], sizes = [8, 32], strides = [1, 1]} : vector<8x64xf32> to vector<8x32xf32>
    %185 = vector.extract_strided_slice %183 {offsets = [0, 32], sizes = [8, 32], strides = [1, 1]} : vector<8x64xf32> to vector<8x32xf32>
    %186 = vector.extract_strided_slice %174 {offsets = [0, 64], sizes = [8, 32], strides = [1, 1]} : vector<8x96xf32> to vector<8x32xf32>
    %187 = vector.extract_strided_slice %175 {offsets = [0, 64], sizes = [8, 32], strides = [1, 1]} : vector<8x96xf32> to vector<8x32xf32>
    %188 = vector.broadcast %12 : vector<1x32xf32> to vector<8x32xf32>
    %189 = arith.addf %187, %188 : vector<8x32xf32>
    %190 = arith.mulf %184, %189 : vector<8x32xf32>
    %191 = arith.addf %186, %190 : vector<8x32xf32>
    %192 = math.tanh %191 : vector<8x32xf32>
    %cst_34 = arith.constant 1.000000e+00 : f32
    %193 = vector.broadcast %cst_34 : f32 to vector<8x32xf32>
    %194 = arith.subf %193, %185 : vector<8x32xf32>
    %195 = arith.mulf %194, %192 : vector<8x32xf32>
    %196 = arith.mulf %185, %172 : vector<8x32xf32>
    %197 = arith.addf %195, %196 : vector<8x32xf32>
    %198 = vector.extract_strided_slice %8 {offsets = [40, 0], sizes = [8, 1], strides = [1, 1]} : vector<64x1xf32> to vector<8x1xf32>
    %199 = vector.extract_strided_slice %10 {offsets = [40, 0], sizes = [8, 1], strides = [1, 1]} : vector<64x1xf32> to vector<8x1xf32>
    %200 = vector.broadcast %198 : vector<8x1xf32> to vector<8x32xf32>
    %201 = arith.mulf %200, %197 : vector<8x32xf32>
    %202 = vector.broadcast %199 : vector<8x1xf32> to vector<8x32xf32>
    %203 = arith.mulf %202, %172 : vector<8x32xf32>
    %204 = arith.addf %201, %203 : vector<8x32xf32>
    %c40 = arith.constant 40 : index
    %c0_35 = arith.constant 0 : index
    %205 = vector.load %arg12[%c40, %c0_35] : memref<64x32xf32, #tpu.memory_space<vmem>>, vector<8x32xf32>
    tpu.vector_store %arg12[%c40, %c0_35], %204 {strides = array<i32>} : memref<64x32xf32, #tpu.memory_space<vmem>>, vector<8x32xf32>,
    %206 = vector.extract_strided_slice %7 {offsets = [48, 0], sizes = [8, 96], strides = [1, 1]} : vector<64x96xf32> to vector<8x96xf32>
    %cst_36 = arith.constant dense<0.000000e+00> : vector<8x96xf32>
    %207 = tpu.matmul %204, %11, %cst_36 {dimension_numbers = #tpu.dot_dimension_numbers<[1], [0], [0], [1], [0, 0, 1, 1], [], []>} : vector<8x32xf32>, vector<32x96xf32>, vector<8x96xf32> -> vector<8x96xf32>
    %208 = vector.extract_strided_slice %206 {offsets = [0, 0], sizes = [8, 64], strides = [1, 1]} : vector<8x96xf32> to vector<8x64xf32>
    %209 = vector.extract_strided_slice %207 {offsets = [0, 0], sizes = [8, 64], strides = [1, 1]} : vector<8x96xf32> to vector<8x64xf32>
    %210 = arith.addf %208, %209 : vector<8x64xf32>
    %211 = arith.negf %210 : vector<8x64xf32>
    %212 = math.exp %211 : vector<8x64xf32>
    %cst_37 = arith.constant 1.000000e+00 : f32
    %213 = vector.broadcast %cst_37 : f32 to vector<8x64xf32>
    %214 = arith.addf %213, %212 : vector<8x64xf32>
    %215 = arith.divf %213, %214 : vector<8x64xf32>
    %216 = vector.extract_strided_slice %215 {offsets = [0, 0], sizes = [8, 32], strides = [1, 1]} : vector<8x64xf32> to vector<8x32xf32>
    %217 = vector.extract_strided_slice %215 {offsets = [0, 32], sizes = [8, 32], strides = [1, 1]} : vector<8x64xf32> to vector<8x32xf32>
    %218 = vector.extract_strided_slice %206 {offsets = [0, 64], sizes = [8, 32], strides = [1, 1]} : vector<8x96xf32> to vector<8x32xf32>
    %219 = vector.extract_strided_slice %207 {offsets = [0, 64], sizes = [8, 32], strides = [1, 1]} : vector<8x96xf32> to vector<8x32xf32>
    %220 = vector.broadcast %12 : vector<1x32xf32> to vector<8x32xf32>
    %221 = arith.addf %219, %220 : vector<8x32xf32>
    %222 = arith.mulf %216, %221 : vector<8x32xf32>
    %223 = arith.addf %218, %222 : vector<8x32xf32>
    %224 = math.tanh %223 : vector<8x32xf32>
    %cst_38 = arith.constant 1.000000e+00 : f32
    %225 = vector.broadcast %cst_38 : f32 to vector<8x32xf32>
    %226 = arith.subf %225, %217 : vector<8x32xf32>
    %227 = arith.mulf %226, %224 : vector<8x32xf32>
    %228 = arith.mulf %217, %204 : vector<8x32xf32>
    %229 = arith.addf %227, %228 : vector<8x32xf32>
    %230 = vector.extract_strided_slice %8 {offsets = [48, 0], sizes = [8, 1], strides = [1, 1]} : vector<64x1xf32> to vector<8x1xf32>
    %231 = vector.extract_strided_slice %10 {offsets = [48, 0], sizes = [8, 1], strides = [1, 1]} : vector<64x1xf32> to vector<8x1xf32>
    %232 = vector.broadcast %230 : vector<8x1xf32> to vector<8x32xf32>
    %233 = arith.mulf %232, %229 : vector<8x32xf32>
    %234 = vector.broadcast %231 : vector<8x1xf32> to vector<8x32xf32>
    %235 = arith.mulf %234, %204 : vector<8x32xf32>
    %236 = arith.addf %233, %235 : vector<8x32xf32>
    %c48 = arith.constant 48 : index
    %c0_39 = arith.constant 0 : index
    %237 = vector.load %arg12[%c48, %c0_39] : memref<64x32xf32, #tpu.memory_space<vmem>>, vector<8x32xf32>
    tpu.vector_store %arg12[%c48, %c0_39], %236 {strides = array<i32>} : memref<64x32xf32, #tpu.memory_space<vmem>>, vector<8x32xf32>,
    %238 = vector.extract_strided_slice %7 {offsets = [56, 0], sizes = [8, 96], strides = [1, 1]} : vector<64x96xf32> to vector<8x96xf32>
    %cst_40 = arith.constant dense<0.000000e+00> : vector<8x96xf32>
    %239 = tpu.matmul %236, %11, %cst_40 {dimension_numbers = #tpu.dot_dimension_numbers<[1], [0], [0], [1], [0, 0, 1, 1], [], []>} : vector<8x32xf32>, vector<32x96xf32>, vector<8x96xf32> -> vector<8x96xf32>
    %240 = vector.extract_strided_slice %238 {offsets = [0, 0], sizes = [8, 64], strides = [1, 1]} : vector<8x96xf32> to vector<8x64xf32>
    %241 = vector.extract_strided_slice %239 {offsets = [0, 0], sizes = [8, 64], strides = [1, 1]} : vector<8x96xf32> to vector<8x64xf32>
    %242 = arith.addf %240, %241 : vector<8x64xf32>
    %243 = arith.negf %242 : vector<8x64xf32>
    %244 = math.exp %243 : vector<8x64xf32>
    %cst_41 = arith.constant 1.000000e+00 : f32
    %245 = vector.broadcast %cst_41 : f32 to vector<8x64xf32>
    %246 = arith.addf %245, %244 : vector<8x64xf32>
    %247 = arith.divf %245, %246 : vector<8x64xf32>
    %248 = vector.extract_strided_slice %247 {offsets = [0, 0], sizes = [8, 32], strides = [1, 1]} : vector<8x64xf32> to vector<8x32xf32>
    %249 = vector.extract_strided_slice %247 {offsets = [0, 32], sizes = [8, 32], strides = [1, 1]} : vector<8x64xf32> to vector<8x32xf32>
    %250 = vector.extract_strided_slice %238 {offsets = [0, 64], sizes = [8, 32], strides = [1, 1]} : vector<8x96xf32> to vector<8x32xf32>
    %251 = vector.extract_strided_slice %239 {offsets = [0, 64], sizes = [8, 32], strides = [1, 1]} : vector<8x96xf32> to vector<8x32xf32>
    %252 = vector.broadcast %12 : vector<1x32xf32> to vector<8x32xf32>
    %253 = arith.addf %251, %252 : vector<8x32xf32>
    %254 = arith.mulf %248, %253 : vector<8x32xf32>
    %255 = arith.addf %250, %254 : vector<8x32xf32>
    %256 = math.tanh %255 : vector<8x32xf32>
    %cst_42 = arith.constant 1.000000e+00 : f32
    %257 = vector.broadcast %cst_42 : f32 to vector<8x32xf32>
    %258 = arith.subf %257, %249 : vector<8x32xf32>
    %259 = arith.mulf %258, %256 : vector<8x32xf32>
    %260 = arith.mulf %249, %236 : vector<8x32xf32>
    %261 = arith.addf %259, %260 : vector<8x32xf32>
    %262 = vector.extract_strided_slice %8 {offsets = [56, 0], sizes = [8, 1], strides = [1, 1]} : vector<64x1xf32> to vector<8x1xf32>
    %263 = vector.extract_strided_slice %10 {offsets = [56, 0], sizes = [8, 1], strides = [1, 1]} : vector<64x1xf32> to vector<8x1xf32>
    %264 = vector.broadcast %262 : vector<8x1xf32> to vector<8x32xf32>
    %265 = arith.mulf %264, %261 : vector<8x32xf32>
    %266 = vector.broadcast %263 : vector<8x1xf32> to vector<8x32xf32>
    %267 = arith.mulf %266, %236 : vector<8x32xf32>
    %268 = arith.addf %265, %267 : vector<8x32xf32>
    %c56 = arith.constant 56 : index
    %c0_43 = arith.constant 0 : index
    %269 = vector.load %arg12[%c56, %c0_43] : memref<64x32xf32, #tpu.memory_space<vmem>>, vector<8x32xf32>
    tpu.vector_store %arg12[%c56, %c0_43], %268 {strides = array<i32>} : memref<64x32xf32, #tpu.memory_space<vmem>>, vector<8x32xf32>,
    %c0_44 = arith.constant 0 : index
    %c0_45 = arith.constant 0 : index
    %270 = vector.load %arg12[%c0_44, %c0_45] : memref<64x32xf32, #tpu.memory_space<vmem>>, vector<64x32xf32>
    %c0_46 = arith.constant 0 : index
    %c0_47 = arith.constant 0 : index
    %271 = vector.load %arg5[%c0_46, %c0_47] : memref<32x96xf32, #tpu.memory_space<vmem>>, vector<32x96xf32>
    %cst_48 = arith.constant dense<0.000000e+00> : vector<64x96xf32>
    %272 = tpu.matmul %270, %271, %cst_48 {dimension_numbers = #tpu.dot_dimension_numbers<[1], [0], [0], [1], [0, 0, 1, 1], [], []>} : vector<64x32xf32>, vector<32x96xf32>, vector<64x96xf32> -> vector<64x96xf32>
    %c0_49 = arith.constant 0 : index
    %c0_50 = arith.constant 0 : index
    %273 = vector.load %arg6[%c0_49, %c0_50] : memref<1x96xf32, #tpu.memory_space<vmem>>, vector<1x96xf32>
    %274 = vector.broadcast %273 : vector<1x96xf32> to vector<64x96xf32>
    %275 = arith.addf %272, %274 : vector<64x96xf32>
    %c0_51 = arith.constant 0 : index
    %c0_52 = arith.constant 0 : index
    %276 = vector.load %arg7[%c0_51, %c0_52] : memref<32x96xf32, #tpu.memory_space<vmem>>, vector<32x96xf32>
    %c0_53 = arith.constant 0 : index
    %c0_54 = arith.constant 0 : index
    %277 = vector.load %arg8[%c0_53, %c0_54] : memref<1x32xf32, #tpu.memory_space<vmem>>, vector<1x32xf32>
    %cst_55 = arith.constant 0.000000e+00 : f32
    %278 = vector.broadcast %cst_55 : f32 to vector<8x32xf32>
    %279 = vector.extract_strided_slice %275 {offsets = [0, 0], sizes = [8, 96], strides = [1, 1]} : vector<64x96xf32> to vector<8x96xf32>
    %cst_56 = arith.constant dense<0.000000e+00> : vector<8x96xf32>
    %280 = tpu.matmul %278, %276, %cst_56 {dimension_numbers = #tpu.dot_dimension_numbers<[1], [0], [0], [1], [0, 0, 1, 1], [], []>} : vector<8x32xf32>, vector<32x96xf32>, vector<8x96xf32> -> vector<8x96xf32>
    %281 = vector.extract_strided_slice %279 {offsets = [0, 0], sizes = [8, 64], strides = [1, 1]} : vector<8x96xf32> to vector<8x64xf32>
    %282 = vector.extract_strided_slice %280 {offsets = [0, 0], sizes = [8, 64], strides = [1, 1]} : vector<8x96xf32> to vector<8x64xf32>
    %283 = arith.addf %281, %282 : vector<8x64xf32>
    %284 = arith.negf %283 : vector<8x64xf32>
    %285 = math.exp %284 : vector<8x64xf32>
    %cst_57 = arith.constant 1.000000e+00 : f32
    %286 = vector.broadcast %cst_57 : f32 to vector<8x64xf32>
    %287 = arith.addf %286, %285 : vector<8x64xf32>
    %288 = arith.divf %286, %287 : vector<8x64xf32>
    %289 = vector.extract_strided_slice %288 {offsets = [0, 0], sizes = [8, 32], strides = [1, 1]} : vector<8x64xf32> to vector<8x32xf32>
    %290 = vector.extract_strided_slice %288 {offsets = [0, 32], sizes = [8, 32], strides = [1, 1]} : vector<8x64xf32> to vector<8x32xf32>
    %291 = vector.extract_strided_slice %279 {offsets = [0, 64], sizes = [8, 32], strides = [1, 1]} : vector<8x96xf32> to vector<8x32xf32>
    %292 = vector.extract_strided_slice %280 {offsets = [0, 64], sizes = [8, 32], strides = [1, 1]} : vector<8x96xf32> to vector<8x32xf32>
    %293 = vector.broadcast %277 : vector<1x32xf32> to vector<8x32xf32>
    %294 = arith.addf %292, %293 : vector<8x32xf32>
    %295 = arith.mulf %289, %294 : vector<8x32xf32>
    %296 = arith.addf %291, %295 : vector<8x32xf32>
    %297 = math.tanh %296 : vector<8x32xf32>
    %cst_58 = arith.constant 1.000000e+00 : f32
    %298 = vector.broadcast %cst_58 : f32 to vector<8x32xf32>
    %299 = arith.subf %298, %290 : vector<8x32xf32>
    %300 = arith.mulf %299, %297 : vector<8x32xf32>
    %301 = arith.mulf %290, %278 : vector<8x32xf32>
    %302 = arith.addf %300, %301 : vector<8x32xf32>
    %303 = vector.extract_strided_slice %8 {offsets = [0, 0], sizes = [8, 1], strides = [1, 1]} : vector<64x1xf32> to vector<8x1xf32>
    %304 = vector.extract_strided_slice %10 {offsets = [0, 0], sizes = [8, 1], strides = [1, 1]} : vector<64x1xf32> to vector<8x1xf32>
    %305 = vector.broadcast %303 : vector<8x1xf32> to vector<8x32xf32>
    %306 = arith.mulf %305, %302 : vector<8x32xf32>
    %307 = vector.broadcast %304 : vector<8x1xf32> to vector<8x32xf32>
    %308 = arith.mulf %307, %278 : vector<8x32xf32>
    %309 = arith.addf %306, %308 : vector<8x32xf32>
    %310 = vector.extract_strided_slice %275 {offsets = [8, 0], sizes = [8, 96], strides = [1, 1]} : vector<64x96xf32> to vector<8x96xf32>
    %cst_59 = arith.constant dense<0.000000e+00> : vector<8x96xf32>
    %311 = tpu.matmul %309, %276, %cst_59 {dimension_numbers = #tpu.dot_dimension_numbers<[1], [0], [0], [1], [0, 0, 1, 1], [], []>} : vector<8x32xf32>, vector<32x96xf32>, vector<8x96xf32> -> vector<8x96xf32>
    %312 = vector.extract_strided_slice %310 {offsets = [0, 0], sizes = [8, 64], strides = [1, 1]} : vector<8x96xf32> to vector<8x64xf32>
    %313 = vector.extract_strided_slice %311 {offsets = [0, 0], sizes = [8, 64], strides = [1, 1]} : vector<8x96xf32> to vector<8x64xf32>
    %314 = arith.addf %312, %313 : vector<8x64xf32>
    %315 = arith.negf %314 : vector<8x64xf32>
    %316 = math.exp %315 : vector<8x64xf32>
    %cst_60 = arith.constant 1.000000e+00 : f32
    %317 = vector.broadcast %cst_60 : f32 to vector<8x64xf32>
    %318 = arith.addf %317, %316 : vector<8x64xf32>
    %319 = arith.divf %317, %318 : vector<8x64xf32>
    %320 = vector.extract_strided_slice %319 {offsets = [0, 0], sizes = [8, 32], strides = [1, 1]} : vector<8x64xf32> to vector<8x32xf32>
    %321 = vector.extract_strided_slice %319 {offsets = [0, 32], sizes = [8, 32], strides = [1, 1]} : vector<8x64xf32> to vector<8x32xf32>
    %322 = vector.extract_strided_slice %310 {offsets = [0, 64], sizes = [8, 32], strides = [1, 1]} : vector<8x96xf32> to vector<8x32xf32>
    %323 = vector.extract_strided_slice %311 {offsets = [0, 64], sizes = [8, 32], strides = [1, 1]} : vector<8x96xf32> to vector<8x32xf32>
    %324 = vector.broadcast %277 : vector<1x32xf32> to vector<8x32xf32>
    %325 = arith.addf %323, %324 : vector<8x32xf32>
    %326 = arith.mulf %320, %325 : vector<8x32xf32>
    %327 = arith.addf %322, %326 : vector<8x32xf32>
    %328 = math.tanh %327 : vector<8x32xf32>
    %cst_61 = arith.constant 1.000000e+00 : f32
    %329 = vector.broadcast %cst_61 : f32 to vector<8x32xf32>
    %330 = arith.subf %329, %321 : vector<8x32xf32>
    %331 = arith.mulf %330, %328 : vector<8x32xf32>
    %332 = arith.mulf %321, %309 : vector<8x32xf32>
    %333 = arith.addf %331, %332 : vector<8x32xf32>
    %334 = vector.extract_strided_slice %8 {offsets = [8, 0], sizes = [8, 1], strides = [1, 1]} : vector<64x1xf32> to vector<8x1xf32>
    %335 = vector.extract_strided_slice %10 {offsets = [8, 0], sizes = [8, 1], strides = [1, 1]} : vector<64x1xf32> to vector<8x1xf32>
    %336 = vector.broadcast %334 : vector<8x1xf32> to vector<8x32xf32>
    %337 = arith.mulf %336, %333 : vector<8x32xf32>
    %338 = vector.broadcast %335 : vector<8x1xf32> to vector<8x32xf32>
    %339 = arith.mulf %338, %309 : vector<8x32xf32>
    %340 = arith.addf %337, %339 : vector<8x32xf32>
    %341 = vector.extract_strided_slice %275 {offsets = [16, 0], sizes = [8, 96], strides = [1, 1]} : vector<64x96xf32> to vector<8x96xf32>
    %cst_62 = arith.constant dense<0.000000e+00> : vector<8x96xf32>
    %342 = tpu.matmul %340, %276, %cst_62 {dimension_numbers = #tpu.dot_dimension_numbers<[1], [0], [0], [1], [0, 0, 1, 1], [], []>} : vector<8x32xf32>, vector<32x96xf32>, vector<8x96xf32> -> vector<8x96xf32>
    %343 = vector.extract_strided_slice %341 {offsets = [0, 0], sizes = [8, 64], strides = [1, 1]} : vector<8x96xf32> to vector<8x64xf32>
    %344 = vector.extract_strided_slice %342 {offsets = [0, 0], sizes = [8, 64], strides = [1, 1]} : vector<8x96xf32> to vector<8x64xf32>
    %345 = arith.addf %343, %344 : vector<8x64xf32>
    %346 = arith.negf %345 : vector<8x64xf32>
    %347 = math.exp %346 : vector<8x64xf32>
    %cst_63 = arith.constant 1.000000e+00 : f32
    %348 = vector.broadcast %cst_63 : f32 to vector<8x64xf32>
    %349 = arith.addf %348, %347 : vector<8x64xf32>
    %350 = arith.divf %348, %349 : vector<8x64xf32>
    %351 = vector.extract_strided_slice %350 {offsets = [0, 0], sizes = [8, 32], strides = [1, 1]} : vector<8x64xf32> to vector<8x32xf32>
    %352 = vector.extract_strided_slice %350 {offsets = [0, 32], sizes = [8, 32], strides = [1, 1]} : vector<8x64xf32> to vector<8x32xf32>
    %353 = vector.extract_strided_slice %341 {offsets = [0, 64], sizes = [8, 32], strides = [1, 1]} : vector<8x96xf32> to vector<8x32xf32>
    %354 = vector.extract_strided_slice %342 {offsets = [0, 64], sizes = [8, 32], strides = [1, 1]} : vector<8x96xf32> to vector<8x32xf32>
    %355 = vector.broadcast %277 : vector<1x32xf32> to vector<8x32xf32>
    %356 = arith.addf %354, %355 : vector<8x32xf32>
    %357 = arith.mulf %351, %356 : vector<8x32xf32>
    %358 = arith.addf %353, %357 : vector<8x32xf32>
    %359 = math.tanh %358 : vector<8x32xf32>
    %cst_64 = arith.constant 1.000000e+00 : f32
    %360 = vector.broadcast %cst_64 : f32 to vector<8x32xf32>
    %361 = arith.subf %360, %352 : vector<8x32xf32>
    %362 = arith.mulf %361, %359 : vector<8x32xf32>
    %363 = arith.mulf %352, %340 : vector<8x32xf32>
    %364 = arith.addf %362, %363 : vector<8x32xf32>
    %365 = vector.extract_strided_slice %8 {offsets = [16, 0], sizes = [8, 1], strides = [1, 1]} : vector<64x1xf32> to vector<8x1xf32>
    %366 = vector.extract_strided_slice %10 {offsets = [16, 0], sizes = [8, 1], strides = [1, 1]} : vector<64x1xf32> to vector<8x1xf32>
    %367 = vector.broadcast %365 : vector<8x1xf32> to vector<8x32xf32>
    %368 = arith.mulf %367, %364 : vector<8x32xf32>
    %369 = vector.broadcast %366 : vector<8x1xf32> to vector<8x32xf32>
    %370 = arith.mulf %369, %340 : vector<8x32xf32>
    %371 = arith.addf %368, %370 : vector<8x32xf32>
    %372 = vector.extract_strided_slice %275 {offsets = [24, 0], sizes = [8, 96], strides = [1, 1]} : vector<64x96xf32> to vector<8x96xf32>
    %cst_65 = arith.constant dense<0.000000e+00> : vector<8x96xf32>
    %373 = tpu.matmul %371, %276, %cst_65 {dimension_numbers = #tpu.dot_dimension_numbers<[1], [0], [0], [1], [0, 0, 1, 1], [], []>} : vector<8x32xf32>, vector<32x96xf32>, vector<8x96xf32> -> vector<8x96xf32>
    %374 = vector.extract_strided_slice %372 {offsets = [0, 0], sizes = [8, 64], strides = [1, 1]} : vector<8x96xf32> to vector<8x64xf32>
    %375 = vector.extract_strided_slice %373 {offsets = [0, 0], sizes = [8, 64], strides = [1, 1]} : vector<8x96xf32> to vector<8x64xf32>
    %376 = arith.addf %374, %375 : vector<8x64xf32>
    %377 = arith.negf %376 : vector<8x64xf32>
    %378 = math.exp %377 : vector<8x64xf32>
    %cst_66 = arith.constant 1.000000e+00 : f32
    %379 = vector.broadcast %cst_66 : f32 to vector<8x64xf32>
    %380 = arith.addf %379, %378 : vector<8x64xf32>
    %381 = arith.divf %379, %380 : vector<8x64xf32>
    %382 = vector.extract_strided_slice %381 {offsets = [0, 0], sizes = [8, 32], strides = [1, 1]} : vector<8x64xf32> to vector<8x32xf32>
    %383 = vector.extract_strided_slice %381 {offsets = [0, 32], sizes = [8, 32], strides = [1, 1]} : vector<8x64xf32> to vector<8x32xf32>
    %384 = vector.extract_strided_slice %372 {offsets = [0, 64], sizes = [8, 32], strides = [1, 1]} : vector<8x96xf32> to vector<8x32xf32>
    %385 = vector.extract_strided_slice %373 {offsets = [0, 64], sizes = [8, 32], strides = [1, 1]} : vector<8x96xf32> to vector<8x32xf32>
    %386 = vector.broadcast %277 : vector<1x32xf32> to vector<8x32xf32>
    %387 = arith.addf %385, %386 : vector<8x32xf32>
    %388 = arith.mulf %382, %387 : vector<8x32xf32>
    %389 = arith.addf %384, %388 : vector<8x32xf32>
    %390 = math.tanh %389 : vector<8x32xf32>
    %cst_67 = arith.constant 1.000000e+00 : f32
    %391 = vector.broadcast %cst_67 : f32 to vector<8x32xf32>
    %392 = arith.subf %391, %383 : vector<8x32xf32>
    %393 = arith.mulf %392, %390 : vector<8x32xf32>
    %394 = arith.mulf %383, %371 : vector<8x32xf32>
    %395 = arith.addf %393, %394 : vector<8x32xf32>
    %396 = vector.extract_strided_slice %8 {offsets = [24, 0], sizes = [8, 1], strides = [1, 1]} : vector<64x1xf32> to vector<8x1xf32>
    %397 = vector.extract_strided_slice %10 {offsets = [24, 0], sizes = [8, 1], strides = [1, 1]} : vector<64x1xf32> to vector<8x1xf32>
    %398 = vector.broadcast %396 : vector<8x1xf32> to vector<8x32xf32>
    %399 = arith.mulf %398, %395 : vector<8x32xf32>
    %400 = vector.broadcast %397 : vector<8x1xf32> to vector<8x32xf32>
    %401 = arith.mulf %400, %371 : vector<8x32xf32>
    %402 = arith.addf %399, %401 : vector<8x32xf32>
    %403 = vector.extract_strided_slice %275 {offsets = [32, 0], sizes = [8, 96], strides = [1, 1]} : vector<64x96xf32> to vector<8x96xf32>
    %cst_68 = arith.constant dense<0.000000e+00> : vector<8x96xf32>
    %404 = tpu.matmul %402, %276, %cst_68 {dimension_numbers = #tpu.dot_dimension_numbers<[1], [0], [0], [1], [0, 0, 1, 1], [], []>} : vector<8x32xf32>, vector<32x96xf32>, vector<8x96xf32> -> vector<8x96xf32>
    %405 = vector.extract_strided_slice %403 {offsets = [0, 0], sizes = [8, 64], strides = [1, 1]} : vector<8x96xf32> to vector<8x64xf32>
    %406 = vector.extract_strided_slice %404 {offsets = [0, 0], sizes = [8, 64], strides = [1, 1]} : vector<8x96xf32> to vector<8x64xf32>
    %407 = arith.addf %405, %406 : vector<8x64xf32>
    %408 = arith.negf %407 : vector<8x64xf32>
    %409 = math.exp %408 : vector<8x64xf32>
    %cst_69 = arith.constant 1.000000e+00 : f32
    %410 = vector.broadcast %cst_69 : f32 to vector<8x64xf32>
    %411 = arith.addf %410, %409 : vector<8x64xf32>
    %412 = arith.divf %410, %411 : vector<8x64xf32>
    %413 = vector.extract_strided_slice %412 {offsets = [0, 0], sizes = [8, 32], strides = [1, 1]} : vector<8x64xf32> to vector<8x32xf32>
    %414 = vector.extract_strided_slice %412 {offsets = [0, 32], sizes = [8, 32], strides = [1, 1]} : vector<8x64xf32> to vector<8x32xf32>
    %415 = vector.extract_strided_slice %403 {offsets = [0, 64], sizes = [8, 32], strides = [1, 1]} : vector<8x96xf32> to vector<8x32xf32>
    %416 = vector.extract_strided_slice %404 {offsets = [0, 64], sizes = [8, 32], strides = [1, 1]} : vector<8x96xf32> to vector<8x32xf32>
    %417 = vector.broadcast %277 : vector<1x32xf32> to vector<8x32xf32>
    %418 = arith.addf %416, %417 : vector<8x32xf32>
    %419 = arith.mulf %413, %418 : vector<8x32xf32>
    %420 = arith.addf %415, %419 : vector<8x32xf32>
    %421 = math.tanh %420 : vector<8x32xf32>
    %cst_70 = arith.constant 1.000000e+00 : f32
    %422 = vector.broadcast %cst_70 : f32 to vector<8x32xf32>
    %423 = arith.subf %422, %414 : vector<8x32xf32>
    %424 = arith.mulf %423, %421 : vector<8x32xf32>
    %425 = arith.mulf %414, %402 : vector<8x32xf32>
    %426 = arith.addf %424, %425 : vector<8x32xf32>
    %427 = vector.extract_strided_slice %8 {offsets = [32, 0], sizes = [8, 1], strides = [1, 1]} : vector<64x1xf32> to vector<8x1xf32>
    %428 = vector.extract_strided_slice %10 {offsets = [32, 0], sizes = [8, 1], strides = [1, 1]} : vector<64x1xf32> to vector<8x1xf32>
    %429 = vector.broadcast %427 : vector<8x1xf32> to vector<8x32xf32>
    %430 = arith.mulf %429, %426 : vector<8x32xf32>
    %431 = vector.broadcast %428 : vector<8x1xf32> to vector<8x32xf32>
    %432 = arith.mulf %431, %402 : vector<8x32xf32>
    %433 = arith.addf %430, %432 : vector<8x32xf32>
    %434 = vector.extract_strided_slice %275 {offsets = [40, 0], sizes = [8, 96], strides = [1, 1]} : vector<64x96xf32> to vector<8x96xf32>
    %cst_71 = arith.constant dense<0.000000e+00> : vector<8x96xf32>
    %435 = tpu.matmul %433, %276, %cst_71 {dimension_numbers = #tpu.dot_dimension_numbers<[1], [0], [0], [1], [0, 0, 1, 1], [], []>} : vector<8x32xf32>, vector<32x96xf32>, vector<8x96xf32> -> vector<8x96xf32>
    %436 = vector.extract_strided_slice %434 {offsets = [0, 0], sizes = [8, 64], strides = [1, 1]} : vector<8x96xf32> to vector<8x64xf32>
    %437 = vector.extract_strided_slice %435 {offsets = [0, 0], sizes = [8, 64], strides = [1, 1]} : vector<8x96xf32> to vector<8x64xf32>
    %438 = arith.addf %436, %437 : vector<8x64xf32>
    %439 = arith.negf %438 : vector<8x64xf32>
    %440 = math.exp %439 : vector<8x64xf32>
    %cst_72 = arith.constant 1.000000e+00 : f32
    %441 = vector.broadcast %cst_72 : f32 to vector<8x64xf32>
    %442 = arith.addf %441, %440 : vector<8x64xf32>
    %443 = arith.divf %441, %442 : vector<8x64xf32>
    %444 = vector.extract_strided_slice %443 {offsets = [0, 0], sizes = [8, 32], strides = [1, 1]} : vector<8x64xf32> to vector<8x32xf32>
    %445 = vector.extract_strided_slice %443 {offsets = [0, 32], sizes = [8, 32], strides = [1, 1]} : vector<8x64xf32> to vector<8x32xf32>
    %446 = vector.extract_strided_slice %434 {offsets = [0, 64], sizes = [8, 32], strides = [1, 1]} : vector<8x96xf32> to vector<8x32xf32>
    %447 = vector.extract_strided_slice %435 {offsets = [0, 64], sizes = [8, 32], strides = [1, 1]} : vector<8x96xf32> to vector<8x32xf32>
    %448 = vector.broadcast %277 : vector<1x32xf32> to vector<8x32xf32>
    %449 = arith.addf %447, %448 : vector<8x32xf32>
    %450 = arith.mulf %444, %449 : vector<8x32xf32>
    %451 = arith.addf %446, %450 : vector<8x32xf32>
    %452 = math.tanh %451 : vector<8x32xf32>
    %cst_73 = arith.constant 1.000000e+00 : f32
    %453 = vector.broadcast %cst_73 : f32 to vector<8x32xf32>
    %454 = arith.subf %453, %445 : vector<8x32xf32>
    %455 = arith.mulf %454, %452 : vector<8x32xf32>
    %456 = arith.mulf %445, %433 : vector<8x32xf32>
    %457 = arith.addf %455, %456 : vector<8x32xf32>
    %458 = vector.extract_strided_slice %8 {offsets = [40, 0], sizes = [8, 1], strides = [1, 1]} : vector<64x1xf32> to vector<8x1xf32>
    %459 = vector.extract_strided_slice %10 {offsets = [40, 0], sizes = [8, 1], strides = [1, 1]} : vector<64x1xf32> to vector<8x1xf32>
    %460 = vector.broadcast %458 : vector<8x1xf32> to vector<8x32xf32>
    %461 = arith.mulf %460, %457 : vector<8x32xf32>
    %462 = vector.broadcast %459 : vector<8x1xf32> to vector<8x32xf32>
    %463 = arith.mulf %462, %433 : vector<8x32xf32>
    %464 = arith.addf %461, %463 : vector<8x32xf32>
    %465 = vector.extract_strided_slice %275 {offsets = [48, 0], sizes = [8, 96], strides = [1, 1]} : vector<64x96xf32> to vector<8x96xf32>
    %cst_74 = arith.constant dense<0.000000e+00> : vector<8x96xf32>
    %466 = tpu.matmul %464, %276, %cst_74 {dimension_numbers = #tpu.dot_dimension_numbers<[1], [0], [0], [1], [0, 0, 1, 1], [], []>} : vector<8x32xf32>, vector<32x96xf32>, vector<8x96xf32> -> vector<8x96xf32>
    %467 = vector.extract_strided_slice %465 {offsets = [0, 0], sizes = [8, 64], strides = [1, 1]} : vector<8x96xf32> to vector<8x64xf32>
    %468 = vector.extract_strided_slice %466 {offsets = [0, 0], sizes = [8, 64], strides = [1, 1]} : vector<8x96xf32> to vector<8x64xf32>
    %469 = arith.addf %467, %468 : vector<8x64xf32>
    %470 = arith.negf %469 : vector<8x64xf32>
    %471 = math.exp %470 : vector<8x64xf32>
    %cst_75 = arith.constant 1.000000e+00 : f32
    %472 = vector.broadcast %cst_75 : f32 to vector<8x64xf32>
    %473 = arith.addf %472, %471 : vector<8x64xf32>
    %474 = arith.divf %472, %473 : vector<8x64xf32>
    %475 = vector.extract_strided_slice %474 {offsets = [0, 0], sizes = [8, 32], strides = [1, 1]} : vector<8x64xf32> to vector<8x32xf32>
    %476 = vector.extract_strided_slice %474 {offsets = [0, 32], sizes = [8, 32], strides = [1, 1]} : vector<8x64xf32> to vector<8x32xf32>
    %477 = vector.extract_strided_slice %465 {offsets = [0, 64], sizes = [8, 32], strides = [1, 1]} : vector<8x96xf32> to vector<8x32xf32>
    %478 = vector.extract_strided_slice %466 {offsets = [0, 64], sizes = [8, 32], strides = [1, 1]} : vector<8x96xf32> to vector<8x32xf32>
    %479 = vector.broadcast %277 : vector<1x32xf32> to vector<8x32xf32>
    %480 = arith.addf %478, %479 : vector<8x32xf32>
    %481 = arith.mulf %475, %480 : vector<8x32xf32>
    %482 = arith.addf %477, %481 : vector<8x32xf32>
    %483 = math.tanh %482 : vector<8x32xf32>
    %cst_76 = arith.constant 1.000000e+00 : f32
    %484 = vector.broadcast %cst_76 : f32 to vector<8x32xf32>
    %485 = arith.subf %484, %476 : vector<8x32xf32>
    %486 = arith.mulf %485, %483 : vector<8x32xf32>
    %487 = arith.mulf %476, %464 : vector<8x32xf32>
    %488 = arith.addf %486, %487 : vector<8x32xf32>
    %489 = vector.extract_strided_slice %8 {offsets = [48, 0], sizes = [8, 1], strides = [1, 1]} : vector<64x1xf32> to vector<8x1xf32>
    %490 = vector.extract_strided_slice %10 {offsets = [48, 0], sizes = [8, 1], strides = [1, 1]} : vector<64x1xf32> to vector<8x1xf32>
    %491 = vector.broadcast %489 : vector<8x1xf32> to vector<8x32xf32>
    %492 = arith.mulf %491, %488 : vector<8x32xf32>
    %493 = vector.broadcast %490 : vector<8x1xf32> to vector<8x32xf32>
    %494 = arith.mulf %493, %464 : vector<8x32xf32>
    %495 = arith.addf %492, %494 : vector<8x32xf32>
    %496 = vector.extract_strided_slice %275 {offsets = [56, 0], sizes = [8, 96], strides = [1, 1]} : vector<64x96xf32> to vector<8x96xf32>
    %cst_77 = arith.constant dense<0.000000e+00> : vector<8x96xf32>
    %497 = tpu.matmul %495, %276, %cst_77 {dimension_numbers = #tpu.dot_dimension_numbers<[1], [0], [0], [1], [0, 0, 1, 1], [], []>} : vector<8x32xf32>, vector<32x96xf32>, vector<8x96xf32> -> vector<8x96xf32>
    %498 = vector.extract_strided_slice %496 {offsets = [0, 0], sizes = [8, 64], strides = [1, 1]} : vector<8x96xf32> to vector<8x64xf32>
    %499 = vector.extract_strided_slice %497 {offsets = [0, 0], sizes = [8, 64], strides = [1, 1]} : vector<8x96xf32> to vector<8x64xf32>
    %500 = arith.addf %498, %499 : vector<8x64xf32>
    %501 = arith.negf %500 : vector<8x64xf32>
    %502 = math.exp %501 : vector<8x64xf32>
    %cst_78 = arith.constant 1.000000e+00 : f32
    %503 = vector.broadcast %cst_78 : f32 to vector<8x64xf32>
    %504 = arith.addf %503, %502 : vector<8x64xf32>
    %505 = arith.divf %503, %504 : vector<8x64xf32>
    %506 = vector.extract_strided_slice %505 {offsets = [0, 0], sizes = [8, 32], strides = [1, 1]} : vector<8x64xf32> to vector<8x32xf32>
    %507 = vector.extract_strided_slice %505 {offsets = [0, 32], sizes = [8, 32], strides = [1, 1]} : vector<8x64xf32> to vector<8x32xf32>
    %508 = vector.extract_strided_slice %496 {offsets = [0, 64], sizes = [8, 32], strides = [1, 1]} : vector<8x96xf32> to vector<8x32xf32>
    %509 = vector.extract_strided_slice %497 {offsets = [0, 64], sizes = [8, 32], strides = [1, 1]} : vector<8x96xf32> to vector<8x32xf32>
    %510 = vector.broadcast %277 : vector<1x32xf32> to vector<8x32xf32>
    %511 = arith.addf %509, %510 : vector<8x32xf32>
    %512 = arith.mulf %506, %511 : vector<8x32xf32>
    %513 = arith.addf %508, %512 : vector<8x32xf32>
    %514 = math.tanh %513 : vector<8x32xf32>
    %cst_79 = arith.constant 1.000000e+00 : f32
    %515 = vector.broadcast %cst_79 : f32 to vector<8x32xf32>
    %516 = arith.subf %515, %507 : vector<8x32xf32>
    %517 = arith.mulf %516, %514 : vector<8x32xf32>
    %518 = arith.mulf %507, %495 : vector<8x32xf32>
    %519 = arith.addf %517, %518 : vector<8x32xf32>
    %520 = vector.extract_strided_slice %8 {offsets = [56, 0], sizes = [8, 1], strides = [1, 1]} : vector<64x1xf32> to vector<8x1xf32>
    %521 = vector.extract_strided_slice %10 {offsets = [56, 0], sizes = [8, 1], strides = [1, 1]} : vector<64x1xf32> to vector<8x1xf32>
    %522 = vector.broadcast %520 : vector<8x1xf32> to vector<8x32xf32>
    %523 = arith.mulf %522, %519 : vector<8x32xf32>
    %524 = vector.broadcast %521 : vector<8x1xf32> to vector<8x32xf32>
    %525 = arith.mulf %524, %495 : vector<8x32xf32>
    %526 = arith.addf %523, %525 : vector<8x32xf32>
    %c0_80 = arith.constant 0 : index
    %c0_81 = arith.constant 0 : index
    %527 = vector.load %arg9[%c0_80, %c0_81] : memref<32x4xf32, #tpu.memory_space<vmem>>, vector<32x4xf32>
    %cst_82 = arith.constant dense<0.000000e+00> : vector<8x4xf32>
    %528 = tpu.matmul %526, %527, %cst_82 {dimension_numbers = #tpu.dot_dimension_numbers<[1], [0], [0], [1], [0, 0, 1, 1], [], []>} : vector<8x32xf32>, vector<32x4xf32>, vector<8x4xf32> -> vector<8x4xf32>
    %c0_83 = arith.constant 0 : index
    %c0_84 = arith.constant 0 : index
    %529 = vector.load %arg10[%c0_83, %c0_84] : memref<1x4xf32, #tpu.memory_space<vmem>>, vector<1x4xf32>
    %530 = vector.broadcast %529 : vector<1x4xf32> to vector<8x4xf32>
    %531 = arith.addf %528, %530 : vector<8x4xf32>
    %c0_85 = arith.constant 0 : index
    %c0_86 = arith.constant 0 : index
    %532 = vector.load %arg11[%c0_85, %c0_86] : memref<8x4xf32, #tpu.memory_space<vmem>>, vector<8x4xf32>
    tpu.vector_store %arg11[%c0_85, %c0_86], %531 {strides = array<i32>} : memref<8x4xf32, #tpu.memory_space<vmem>>, vector<8x4xf32>,
    return
  }
}

</mosaic_0001>

<llo_original>
// kernel: text_classifier_forward.1
$region0: #{text_classifier_forward.1}
  #allocation0 [shape = 'u32[]', space=smem, size = 0x4, offset = 0x4, fixed_abs, tag = 'smem constant byte address 0x4 - core index']
  #allocation1 [shape = 'u32[144,128]{1,0:T(1,128)}', space=vmem, size = 0x12000, scoped, tag = 'internal scratch']
  #allocation2 [shape = 'f32[64,32]{1,0:T(8,128)}', space=vmem, size = 0x8000, scoped, tag = 'scratch operand']
  %s0 = inlined_call_operand.vmem [shape: s32[64,1], index: 0, kind: input, shape index: {}]
  %s1 = inlined_call_operand.vmem [shape: f32[64,1], index: 1, kind: input, shape index: {}]
  %s2 = inlined_call_operand.vmem [shape: f32[50,96], index: 2, kind: input, shape index: {}]
  %s3 = inlined_call_operand.vmem [shape: f32[32,96], index: 3, kind: input, shape index: {}]
  %s4 = inlined_call_operand.vmem [shape: f32[1,32], index: 4, kind: input, shape index: {}]
  %s5 = inlined_call_operand.vmem [shape: f32[32,96], index: 5, kind: input, shape index: {}]
  %s6 = inlined_call_operand.vmem [shape: f32[1,96], index: 6, kind: input, shape index: {}]
  %s7 = inlined_call_operand.vmem [shape: f32[32,96], index: 7, kind: input, shape index: {}]
  %s8 = inlined_call_operand.vmem [shape: f32[1,32], index: 8, kind: input, shape index: {}]
  %s9 = inlined_call_operand.vmem [shape: f32[32,4], index: 9, kind: input, shape index: {}]
  %s10 = inlined_call_operand.vmem [shape: f32[1,4], index: 10, kind: input, shape index: {}]
  %s11 = inlined_call_operand.vmem [shape: f32[8,4], index: 11, kind: output, shape index: {}]
  %s12 = sld [smem:[#allocation0]]
  $region54: #{text_classifier_forward.1} parent=0
    _
  %s14 = ssub.s32 1, %s12
  %s15 = scalar_select 0, %s14, %s12
  // Predicated region
  $region2: #{text_classifier_forward.1} parent=0 // pred_check
    _
  $region3: #{text_classifier_forward.1} parent=0 // pred_check_branch
    %17 = sbr.rel (0) target = $region5
  $region4: #{text_classifier_forward.1} parent=0 // pred_region
    _
  $region5: #{text_classifier_forward.1} parent=0 // pred_fallthru
    _
  // Predicated region
  $region6: #{text_classifier_forward.1} parent=0 // pred_check
    _
  $region7: #{text_classifier_forward.1} parent=0 // pred_check_branch
    %19 = sbr.rel (0) target = $region9
  $region8: #{text_classifier_forward.1} parent=0 // pred_region
    _
  $region9: #{text_classifier_forward.1} parent=0 // pred_fallthru
    _
  // Predicated region
  $region10: #{text_classifier_forward.1} parent=0 // pred_check
    _
  $region11: #{text_classifier_forward.1} parent=0 // pred_check_branch
    %21 = sbr.rel (0) target = $region13
  $region12: #{text_classifier_forward.1} parent=0 // pred_region
    _
  $region13: #{text_classifier_forward.1} parent=0 // pred_fallthru
    _
  // Predicated region
  $region14: #{text_classifier_forward.1} parent=0 // pred_check
    _
  $region15: #{text_classifier_forward.1} parent=0 // pred_check_branch
    %23 = sbr.rel (0) target = $region17
  $region16: #{text_classifier_forward.1} parent=0 // pred_region
    _
  $region17: #{text_classifier_forward.1} parent=0 // pred_fallthru
    _
  // Predicated region
  $region18: #{text_classifier_forward.1} parent=0 // pred_check
    _
  $region19: #{text_classifier_forward.1} parent=0 // pred_check_branch
    %25 = sbr.rel (0) target = $region21
  $region20: #{text_classifier_forward.1} parent=0 // pred_region
    _
  $region21: #{text_classifier_forward.1} parent=0 // pred_fallthru
    _
  // Predicated region
  $region22: #{text_classifier_forward.1} parent=0 // pred_check
    _
  $region23: #{text_classifier_forward.1} parent=0 // pred_check_branch
    %27 = sbr.rel (0) target = $region25
  $region24: #{text_classifier_forward.1} parent=0 // pred_region
    _
  $region25: #{text_classifier_forward.1} parent=0 // pred_fallthru
    _
  // Predicated region
  $region26: #{text_classifier_forward.1} parent=0 // pred_check
    _
  $region27: #{text_classifier_forward.1} parent=0 // pred_check_branch
    %29 = sbr.rel (0) target = $region29
  $region28: #{text_classifier_forward.1} parent=0 // pred_region
    _
  $region29: #{text_classifier_forward.1} parent=0 // pred_fallthru
    _
  // Predicated region
  $region30: #{text_classifier_forward.1} parent=0 // pred_check
    _
  $region31: #{text_classifier_forward.1} parent=0 // pred_check_branch
    %31 = sbr.rel (0) target = $region33
  $region32: #{text_classifier_forward.1} parent=0 // pred_region
    _
  $region33: #{text_classifier_forward.1} parent=0 // pred_fallthru
    _
  // Predicated region
  $region34: #{text_classifier_forward.1} parent=0 // pred_check
    _
  $region35: #{text_classifier_forward.1} parent=0 // pred_check_branch
    %33 = sbr.rel (0) target = $region37
  $region36: #{text_classifier_forward.1} parent=0 // pred_region
    _
  $region37: #{text_classifier_forward.1} parent=0 // pred_fallthru
    _
  // Predicated region
  $region38: #{text_classifier_forward.1} parent=0 // pred_check
    _
  $region39: #{text_classifier_forward.1} parent=0 // pred_check_branch
    %35 = sbr.rel (0) target = $region41
  $region40: #{text_classifier_forward.1} parent=0 // pred_region
    _
  $region41: #{text_classifier_forward.1} parent=0 // pred_fallthru
    _
  // Predicated region
  $region42: #{text_classifier_forward.1} parent=0 // pred_check
    _
  $region43: #{text_classifier_forward.1} parent=0 // pred_check_branch
    %37 = sbr.rel (0) target = $region45
  $region44: #{text_classifier_forward.1} parent=0 // pred_region
    _
  $region45: #{text_classifier_forward.1} parent=0 // pred_fallthru
    _
  %v38 = vld [vmem:[%s0] sm:$0xff]
  %v39 = vld [vmem:[%s0 + $0x8] sm:$0xff]
  %v40 = vld [vmem:[%s0 + $0x10] sm:$0xff]
  %v41 = vld [vmem:[%s0 + $0x18] sm:$0xff]
  %v42 = vld [vmem:[%s0 + $0x20] sm:$0xff]
  %v43 = vld [vmem:[%s0 + $0x28] sm:$0xff]
  %v44 = vld [vmem:[%s0 + $0x30] sm:$0xff]
  %v45 = vld [vmem:[%s0 + $0x38] sm:$0xff]
  %v46 = vlaneseq
  %v47 = vand.u32 %v46, 127
  %48 = vset.pattern.permute.xlu0 0
  %49 = vperm.xlu0 %48, %v38
  %v50 = vpop.permute.xlu0 %49
  %51 = vset.pattern.permute.xlu0 0
  %52 = vperm.xlu0 %51, %v39
  %v53 = vpop.permute.xlu0 %52
  %54 = vset.pattern.permute.xlu0 0
  %55 = vperm.xlu0 %54, %v40
  %v56 = vpop.permute.xlu0 %55
  %57 = vset.pattern.permute.xlu0 0
  %58 = vperm.xlu0 %57, %v41
  %v59 = vpop.permute.xlu0 %58
  %60 = vset.pattern.permute.xlu0 0
  %61 = vperm.xlu0 %60, %v42
  %v62 = vpop.permute.xlu0 %61
  %63 = vset.pattern.permute.xlu0 0
  %64 = vperm.xlu0 %63, %v43
  %v65 = vpop.permute.xlu0 %64
  %66 = vset.pattern.permute.xlu0 0
  %67 = vperm.xlu0 %66, %v44
  %v68 = vpop.permute.xlu0 %67
  %69 = vset.pattern.permute.xlu0 0
  %70 = vperm.xlu0 %69, %v45
  %v71 = vpop.permute.xlu0 %70
  %vm72 = vcmp.eq.s32.totalorder %v47, %v50
  %vm73 = vcmp.eq.s32.totalorder %v47, %v53
  %vm74 = vcmp.eq.s32.totalorder %v47, %v56
  %vm75 = vcmp.eq.s32.totalorder %v47, %v59
  %vm76 = vcmp.eq.s32.totalorder %v47, %v62
  %vm77 = vcmp.eq.s32.totalorder %v47, %v65
  %vm78 = vcmp.eq.s32.totalorder %v47, %v68
  %vm79 = vcmp.eq.s32.totalorder %v47, %v71
  %v80 = vsel %vm72, 1, 0
  %v81 = vsel %vm73, 1, 0
  %v82 = vsel %vm74, 1, 0
  %v83 = vsel %vm75, 1, 0
  %v84 = vsel %vm76, 1, 0
  %v85 = vsel %vm77, 1, 0
  %v86 = vsel %vm78, 1, 0
  %v87 = vsel %vm79, 1, 0
  %v88 = vcvt.s32.f32 %v80
  %v89 = vcvt.s32.f32 %v81
  %v90 = vcvt.s32.f32 %v82
  %v91 = vcvt.s32.f32 %v83
  %v92 = vcvt.s32.f32 %v84
  %v93 = vcvt.s32.f32 %v85
  %v94 = vcvt.s32.f32 %v86
  %v95 = vcvt.s32.f32 %v87
  %v96 = vld [vmem:[%s2] sm:$0xff]
  %v97 = vld [vmem:[%s2 + $0x8] sm:$0xff]
  %v98 = vld [vmem:[%s2 + $0x10] sm:$0xff]
  %v99 = vld [vmem:[%s2 + $0x18] sm:$0xff]
  %v100 = vld [vmem:[%s2 + $0x20] sm:$0xff]
  %v101 = vld [vmem:[%s2 + $0x28] sm:$0xff]
  %v102 = vld [vmem:[%s2 + $0x30] sm:$0x3]
  %vm103 = vcmask 408576
  %v105 = vsel %vm103, %v88, 0
  %v108 = vsel %vm103, %v89, 0
  %v111 = vsel %vm103, %v90, 0
  %v114 = vsel %vm103, %v91, 0
  %v117 = vsel %vm103, %v92, 0
  %v120 = vsel %vm103, %v93, 0
  %v123 = vsel %vm103, %v94, 0
  %v126 = vsel %vm103, %v95, 0
  %vm128 = vcmask 1041408
  %v130 = vsel %vm128, %v102, 0
  %132 = vmatprep.subr.mxu0 0.0
  %133 = vmatpush1.msra.mxu0 %v96
  %134 = vmatprep.subr.mxu0 0.0
  %135 = vmatpush1.msra.mxu0 %v97
  %136 = vmatprep.subr.mxu0 0.0
  %137 = vmatpush1.msra.mxu0 %v98
  %138 = vmatprep.subr.mxu0 0.0
  %139 = vmatpush1.msra.mxu0 %v99
  %140 = vmatprep.subr.mxu0 0.0
  %141 = vmatpush1.msra.mxu0 %v100
  %142 = vmatprep.subr.mxu0 0.0
  %143 = vmatpush1.msra.mxu0 %v101
  %144 = vmatprep.subr.mxu0 0.0
  %145 = vmatpush1.msra.mxu0 %v130
  %146 = vmatprep.subr.mxu0 0.0
  %147 = vmatpush1.msra.mxu0 0.0
  %148 = vmatprep.subr.mxu0 0.0
  %149 = vmatpush1.msra.mxu0 0.0
  %150 = vmatprep.subr.mxu0 0.0
  %151 = vmatpush1.msra.mxu0 0.0
  %152 = vmatprep.subr.mxu0 0.0
  %153 = vmatpush1.msra.mxu0 0.0
  %154 = vmatprep.subr.mxu0 0.0
  %155 = vmatpush1.msra.mxu0 0.0
  %156 = vmatprep.subr.mxu0 0.0
  %157 = vmatpush1.msra.mxu0 0.0
  %158 = vmatprep.subr.mxu0 0.0
  %159 = vmatpush1.msra.mxu0 0.0
  %160 = vmatprep.subr.mxu0 0.0
  %161 = vmatpush1.msra.mxu0 0.0
  %162 = vmatprep.subr.mxu0 0.0
  %163 = vmatpush1.msra.mxu0 0.0
  %164 = vmatprep.subr.mxu0 0.0
  %165 = vmatpush1.msra.mxu0 0.0
  %166 = vmatprep.subr.mxu0 0.0
  %167 = vmatpush1.msra.mxu0 0.0
  %168 = vmatprep.subr.mxu0 0.0
  %169 = vmatpush1.msra.mxu0 0.0
  %170 = vmatprep.subr.mxu0 0.0
  %171 = vmatpush1.msra.mxu0 0.0
  %172 = vmatprep.subr.mxu0 0.0
  %173 = vmatpush1.msra.mxu0 0.0
  %174 = vmatprep.subr.mxu0 0.0
  %175 = vmatpush1.msra.mxu0 0.0
  %176 = vmatprep.subr.mxu0 0.0
  %177 = vmatpush1.msra.mxu0 0.0
  %178 = vmatprep.subr.mxu0 0.0
  %179 = vmatpush1.msra.mxu0 0.0
  %180 = vmatprep.subr.mxu0 0.0
  %181 = vmatpush1.msra.mxu0 0.0
  %182 = vmatprep.subr.mxu0 0.0
  %183 = vmatpush1.msra.mxu0 0.0
  %184 = vmatprep.subr.mxu0 0.0
  %185 = vmatpush1.msra.mxu0 0.0
  %186 = vmatprep.subr.mxu0 0.0
  %187 = vmatpush1.msra.mxu0 0.0
  %188 = vmatprep.subr.mxu0 0.0
  %189 = vmatpush1.msra.mxu0 0.0
  %190 = vmatprep.subr.mxu0 0.0
  %191 = vmatpush1.msra.mxu0 0.0
  %192 = vmatprep.subr.mxu0 0.0
  %193 = vmatpush1.msra.mxu0 0.0
  %194 = vmatprep.subr.mxu0 0.0
  %195 = vmatpush1.msra.mxu0 0.0
  %196 = vmatprep.mubr.f32.mxu0 0.0
  %197 = vmatmul.mubr.f32.gmra.mrb[0].mxu0 %v105
  %v198 = vpop.f32.mrb[0].mxu0
  %v199 = vadd.f32 0.0, %v198
  %v200 = vpop.f32.mrb[0].mxu0
  %201 = vmatprep.mubr.f32.mxu0 0.0
  %202 = vmatmul.mubr.f32.gmra.mrb[0].mxu0 %v108
  %v203 = vpop.f32.mrb[0].mxu0
  %v204 = vadd.f32 0.0, %v203
  %v205 = vpop.f32.mrb[0].mxu0
  %206 = vmatprep.mubr.f32.mxu0 0.0
  %207 = vmatmul.mubr.f32.gmra.mrb[0].mxu0 %v111
  %v208 = vpop.f32.mrb[0].mxu0
  %v209 = vadd.f32 0.0, %v208
  %v210 = vpop.f32.mrb[0].mxu0
  %211 = vmatprep.mubr.f32.mxu0 0.0
  %212 = vmatmul.mubr.f32.gmra.mrb[0].mxu0 %v114
  %v213 = vpop.f32.mrb[0].mxu0
  %v214 = vadd.f32 0.0, %v213
  %v215 = vpop.f32.mrb[0].mxu0
  %216 = vmatprep.mubr.f32.mxu0 0.0
  %217 = vmatmul.mubr.f32.gmra.mrb[0].mxu0 %v117
  %v218 = vpop.f32.mrb[0].mxu0
  %v219 = vadd.f32 0.0, %v218
  %v220 = vpop.f32.mrb[0].mxu0
  %221 = vmatprep.mubr.f32.mxu0 0.0
  %222 = vmatmul.mubr.f32.gmra.mrb[0].mxu0 %v120
  %v223 = vpop.f32.mrb[0].mxu0
  %v224 = vadd.f32 0.0, %v223
  %v225 = vpop.f32.mrb[0].mxu0
  %226 = vmatprep.mubr.f32.mxu0 0.0
  %227 = vmatmul.mubr.f32.gmra.mrb[0].mxu0 %v123
  %v228 = vpop.f32.mrb[0].mxu0
  %v229 = vadd.f32 0.0, %v228
  %v230 = vpop.f32.mrb[0].mxu0
  %231 = vmatprep.mubr.f32.mxu0 0.0
  %232 = vmatmul.mubr.f32.gmra.mrb[0].mxu0 %v126
  %v233 = vpop.f32.mrb[0].mxu0
  %v234 = vadd.f32 0.0, %v233
  %v235 = vpop.f32.mrb[0].mxu0
  %236 = vdwg.mxu0
  %v237 = vld [vmem:[%s1] sm:$0xff]
  %v238 = vld [vmem:[%s1 + $0x8] sm:$0xff]
  %v239 = vld [vmem:[%s1 + $0x10] sm:$0xff]
  %v240 = vld [vmem:[%s1 + $0x18] sm:$0xff]
  %v241 = vld [vmem:[%s1 + $0x20] sm:$0xff]
  %v242 = vld [vmem:[%s1 + $0x28] sm:$0xff]
  %v243 = vld [vmem:[%s1 + $0x30] sm:$0xff]
  %v244 = vld [vmem:[%s1 + $0x38] sm:$0xff]
  %v245 = vsub.f32 1.0, %v237
  %v246 = vsub.f32 1.0, %v238
  %v247 = vsub.f32 1.0, %v239
  %v248 = vsub.f32 1.0, %v240
  %v249 = vsub.f32 1.0, %v241
  %v250 = vsub.f32 1.0, %v242
  %v251 = vsub.f32 1.0, %v243
  %v252 = vsub.f32 1.0, %v244
  %v253 = vld [vmem:[%s3] sm:$0xff]
  %v254 = vld [vmem:[%s3 + $0x8] sm:$0xff]
  %v255 = vld [vmem:[%s3 + $0x10] sm:$0xff]
  %v256 = vld [vmem:[%s3 + $0x18] sm:$0xff]
  %v257 = vld [vmem:[%s4] sm:$0x1]
  %vm258 = vcmask 261120
  %v260 = vsel %vm258, 0.0, 0
  %262 = vmatprep.subr.mxu0 0.0
  %263 = vmatpush1.msra.mxu0 %v253
  %264 = vmatprep.subr.mxu0 0.0
  %265 = vmatpush1.msra.mxu0 %v254
  %266 = vmatprep.subr.mxu0 0.0
  %267 = vmatpush1.msra.mxu0 %v255
  %268 = vmatprep.subr.mxu0 0.0
  %269 = vmatpush1.msra.mxu0 %v256
  %270 = vmatprep.subr.mxu0 0.0
  %271 = vmatpush1.msra.mxu0 0.0
  %272 = vmatprep.subr.mxu0 0.0
  %273 = vmatpush1.msra.mxu0 0.0
  %274 = vmatprep.subr.mxu0 0.0
  %275 = vmatpush1.msra.mxu0 0.0
  %276 = vmatprep.subr.mxu0 0.0
  %277 = vmatpush1.msra.mxu0 0.0
  %278 = vmatprep.subr.mxu0 0.0
  %279 = vmatpush1.msra.mxu0 0.0
  %280 = vmatprep.subr.mxu0 0.0
  %281 = vmatpush1.msra.mxu0 0.0
  %282 = vmatprep.subr.mxu0 0.0
  %283 = vmatpush1.msra.mxu0 0.0
  %284 = vmatprep.subr.mxu0 0.0
  %285 = vmatpush1.msra.mxu0 0.0
  %286 = vmatprep.subr.mxu0 0.0
  %287 = vmatpush1.msra.mxu0 0.0
  %288 = vmatprep.subr.mxu0 0.0
  %289 = vmatpush1.msra.mxu0 0.0
  %290 = vmatprep.subr.mxu0 0.0
  %291 = vmatpush1.msra.mxu0 0.0
  %292 = vmatprep.subr.mxu0 0.0
  %293 = vmatpush1.msra.mxu0 0.0
  %294 = vmatprep.subr.mxu0 0.0
  %295 = vmatpush1.msra.mxu0 0.0
  %296 = vmatprep.subr.mxu0 0.0
  %297 = vmatpush1.msra.mxu0 0.0
  %298 = vmatprep.subr.mxu0 0.0
  %299 = vmatpush1.msra.mxu0 0.0
  %300 = vmatprep.subr.mxu0 0.0
  %301 = vmatpush1.msra.mxu0 0.0
  %302 = vmatprep.subr.mxu0 0.0
  %303 = vmatpush1.msra.mxu0 0.0
  %304 = vmatprep.subr.mxu0 0.0
  %305 = vmatpush1.msra.mxu0 0.0
  %306 = vmatprep.subr.mxu0 0.0
  %307 = vmatpush1.msra.mxu0 0.0
  %308 = vmatprep.subr.mxu0 0.0
  %309 = vmatpush1.msra.mxu0 0.0
  %310 = vmatprep.subr.mxu0 0.0
  %311 = vmatpush1.msra.mxu0 0.0
  %312 = vmatprep.subr.mxu0 0.0
  %313 = vmatpush1.msra.mxu0 0.0
  %314 = vmatprep.subr.mxu0 0.0
  %315 = vmatpush1.msra.mxu0 0.0
  %316 = vmatprep.subr.mxu0 0.0
  %317 = vmatpush1.msra.mxu0 0.0
  %318 = vmatprep.subr.mxu0 0.0
  %319 = vmatpush1.msra.mxu0 0.0
  %320 = vmatprep.subr.mxu0 0.0
  %321 = vmatpush1.msra.mxu0 0.0
  %322 = vmatprep.subr.mxu0 0.0
  %323 = vmatpush1.msra.mxu0 0.0
  %324 = vmatprep.subr.mxu0 0.0
  %325 = vmatpush1.msra.mxu0 0.0
  %326 = vmatprep.mubr.f32.mxu0 0.0
  %327 = vmatmul.mubr.f32.gmra.mrb[0].mxu0 %v260
  %v328 = vpop.f32.mrb[0].mxu0
  %v329 = vadd.f32 0.0, %v328
  %v330 = vpop.f32.mrb[0].mxu0
  %331 = vdwg.mxu0
  %v332 = vadd.f32 %v199, %v329
  %v333 = vxor.u32 %v332, 2147483648
  %v334 = vmul.f32 %v333, 1.442695
  %v335 = vpow.pop %v334
  %v336 = vadd.f32 %v335, 1.0
  %v337 = vrcp.pop %v336
  %v338 = vmul.f32 1.0, %v337
  %v340 = vlaneseq
  %v341 = vshrl.u32 %v340, 7
  %v342 = vsub.s32 0, %v341
  %v343 = vrot.slane %v257, %v342
  %344 = vrot.lane.b32.xlu0 %v343, 64
  %v345 = vpop.permute.xlu0 %344
  %v347 = vadd.f32 %v329, %v345
  %349 = vrot.lane.b32.xlu0 %v347, 64
  %v350 = vpop.permute.xlu0 %349
  %v352 = vmul.f32 %v338, %v350
  %354 = vrot.lane.b32.xlu0 %v352, 64
  %v355 = vpop.permute.xlu0 %354
  %v357 = vadd.f32 %v199, %v355
  %v358 = vtanh.pop %v357
  %v359 = vsub.f32 1.0, %v338
  %361 = vrot.lane.b32.xlu0 %v358, 96
  %v362 = vpop.permute.xlu0 %361
  %v364 = vmul.f32 %v359, %v362
  %v365 = vmul.f32 %v338, 0.0
  %v366 = vadd.f32 %v364, %v365
  %368 = vset.pattern.permute.xlu0 0
  %369 = vperm.xlu0 %368, %v237
  %v370 = vpop.permute.xlu0 %369
  %v372 = vmul.f32 %v370, %v366
  %374 = vset.pattern.permute.xlu0 0
  %375 = vperm.xlu0 %374, %v245
  %v376 = vpop.permute.xlu0 %375
  %v378 = vmul.f32 %v376, 0.0
  %v379 = vadd.f32 %v372, %v378
  %381 = vrot.lane.b32.xlu0 %v379, 96
  %v382 = vpop.permute.xlu0 %381
  %384 = vst.msk [vmem:[#allocation2] sm:$0xff] %vm258, %v382
  %v385 = vsel %vm258, %v382, 0
  %387 = vmatprep.subr.mxu0 0.0
  %388 = vmatpush1.msra.mxu0 %v253
  %389 = vmatprep.subr.mxu0 0.0
  %390 = vmatpush1.msra.mxu0 %v254
  %391 = vmatprep.subr.mxu0 0.0
  %392 = vmatpush1.msra.mxu0 %v255
  %393 = vmatprep.subr.mxu0 0.0
  %394 = vmatpush1.msra.mxu0 %v256
  %395 = vmatprep.subr.mxu0 0.0
  %396 = vmatpush1.msra.mxu0 0.0
  %397 = vmatprep.subr.mxu0 0.0
  %398 = vmatpush1.msra.mxu0 0.0
  %399 = vmatprep.subr.mxu0 0.0
  %400 = vmatpush1.msra.mxu0 0.0
  %401 = vmatprep.subr.mxu0 0.0
  %402 = vmatpush1.msra.mxu0 0.0
  %403 = vmatprep.subr.mxu0 0.0
  %404 = vmatpush1.msra.mxu0 0.0
  %405 = vmatprep.subr.mxu0 0.0
  %406 = vmatpush1.msra.mxu0 0.0
  %407 = vmatprep.subr.mxu0 0.0
  %408 = vmatpush1.msra.mxu0 0.0
  %409 = vmatprep.subr.mxu0 0.0
  %410 = vmatpush1.msra.mxu0 0.0
  %411 = vmatprep.subr.mxu0 0.0
  %412 = vmatpush1.msra.mxu0 0.0
  %413 = vmatprep.subr.mxu0 0.0
  %414 = vmatpush1.msra.mxu0 0.0
  %415 = vmatprep.subr.mxu0 0.0
  %416 = vmatpush1.msra.mxu0 0.0
  %417 = vmatprep.subr.mxu0 0.0
  %418 = vmatpush1.msra.mxu0 0.0
  %419 = vmatprep.subr.mxu0 0.0
  %420 = vmatpush1.msra.mxu0 0.0
  %421 = vmatprep.subr.mxu0 0.0
  %422 = vmatpush1.msra.mxu0 0.0
  %423 = vmatprep.subr.mxu0 0.0
  %424 = vmatpush1.msra.mxu0 0.0
  %425 = vmatprep.subr.mxu0 0.0
  %426 = vmatpush1.msra.mxu0 0.0
  %427 = vmatprep.subr.mxu0 0.0
  %428 = vmatpush1.msra.mxu0 0.0
  %429 = vmatprep.subr.mxu0 0.0
  %430 = vmatpush1.msra.mxu0 0.0
  %431 = vmatprep.subr.mxu0 0.0
  %432 = vmatpush1.msra.mxu0 0.0
  %433 = vmatprep.subr.mxu0 0.0
  %434 = vmatpush1.msra.mxu0 0.0
  %435 = vmatprep.subr.mxu0 0.0
  %436 = vmatpush1.msra.mxu0 0.0
  %437 = vmatprep.subr.mxu0 0.0
  %438 = vmatpush1.msra.mxu0 0.0
  %439 = vmatprep.subr.mxu0 0.0
  %440 = vmatpush1.msra.mxu0 0.0
  %441 = vmatprep.subr.mxu0 0.0
  %442 = vmatpush1.msra.mxu0 0.0
  %443 = vmatprep.subr.mxu0 0.0
  %444 = vmatpush1.msra.mxu0 0.0
  %445 = vmatprep.subr.mxu0 0.0
  %446 = vmatpush1.msra.mxu0 0.0
  %447 = vmatprep.subr.mxu0 0.0
  %448 = vmatpush1.msra.mxu0 0.0
  %449 = vmatprep.subr.mxu0 0.0
  %450 = vmatpush1.msra.mxu0 0.0
  %451 = vmatprep.mubr.f32.mxu0 0.0
  %452 = vmatmul.mubr.f32.gmra.mrb[0].mxu0 %v385
  %v453 = vpop.f32.mrb[0].mxu0
  %v454 = vadd.f32 0.0, %v453
  %v455 = vpop.f32.mrb[0].mxu0
  %456 = vdwg.mxu0
  %v457 = vadd.f32 %v204, %v454
  %v458 = vxor.u32 %v457, 2147483648
  %v459 = vmul.f32 %v458, 1.442695
  %v460 = vpow.pop %v459
  %v461 = vadd.f32 %v460, 1.0
  %v462 = vrcp.pop %v461
  %v463 = vmul.f32 1.0, %v462
  %v464 = vadd.f32 %v454, %v345
  %466 = vrot.lane.b32.xlu0 %v464, 64
  %v467 = vpop.permute.xlu0 %466
  %v469 = vmul.f32 %v463, %v467
  %471 = vrot.lane.b32.xlu0 %v469, 64
  %v472 = vpop.permute.xlu0 %471
  %v474 = vadd.f32 %v204, %v472
  %v475 = vtanh.pop %v474
  %v476 = vsub.f32 1.0, %v463
  %478 = vrot.lane.b32.xlu0 %v475, 96
  %v479 = vpop.permute.xlu0 %478
  %v481 = vmul.f32 %v476, %v479
  %v482 = vmul.f32 %v463, %v379
  %v483 = vadd.f32 %v481, %v482
  %485 = vset.pattern.permute.xlu0 0
  %486 = vperm.xlu0 %485, %v238
  %v487 = vpop.permute.xlu0 %486
  %v489 = vmul.f32 %v487, %v483
  %491 = vset.pattern.permute.xlu0 0
  %492 = vperm.xlu0 %491, %v246
  %v493 = vpop.permute.xlu0 %492
  %v495 = vmul.f32 %v493, %v379
  %v496 = vadd.f32 %v489, %v495
  %498 = vrot.lane.b32.xlu0 %v496, 96
  %v499 = vpop.permute.xlu0 %498
  %501 = vst.msk [vmem:[#allocation2 + $0x8] sm:$0xff] %vm258, %v499
  %v502 = vsel %vm258, %v499, 0
  %504 = vmatprep.subr.mxu0 0.0
  %505 = vmatpush1.msra.mxu0 %v253
  %506 = vmatprep.subr.mxu0 0.0
  %507 = vmatpush1.msra.mxu0 %v254
  %508 = vmatprep.subr.mxu0 0.0
  %509 = vmatpush1.msra.mxu0 %v255
  %510 = vmatprep.subr.mxu0 0.0
  %511 = vmatpush1.msra.mxu0 %v256
  %512 = vmatprep.subr.mxu0 0.0
  %513 = vmatpush1.msra.mxu0 0.0
  %514 = vmatprep.subr.mxu0 0.0
  %515 = vmatpush1.msra.mxu0 0.0
  %516 = vmatprep.subr.mxu0 0.0
  %517 = vmatpush1.msra.mxu0 0.0
  %518 = vmatprep.subr.mxu0 0.0
  %519 = vmatpush1.msra.mxu0 0.0
  %520 = vmatprep.subr.mxu0 0.0
  %521 = vmatpush1.msra.mxu0 0.0
  %522 = vmatprep.subr.mxu0 0.0
  %523 = vmatpush1.msra.mxu0 0.0
  %524 = vmatprep.subr.mxu0 0.0
  %525 = vmatpush1.msra.mxu0 0.0
  %526 = vmatprep.subr.mxu0 0.0
  %527 = vmatpush1.msra.mxu0 0.0
  %528 = vmatprep.subr.mxu0 0.0
  %529 = vmatpush1.msra.mxu0 0.0
  %530 = vmatprep.subr.mxu0 0.0
  %531 = vmatpush1.msra.mxu0 0.0
  %532 = vmatprep.subr.mxu0 0.0
  %533 = vmatpush1.msra.mxu0 0.0
  %534 = vmatprep.subr.mxu0 0.0
  %535 = vmatpush1.msra.mxu0 0.0
  %536 = vmatprep.subr.mxu0 0.0
  %537 = vmatpush1.msra.mxu0 0.0
  %538 = vmatprep.subr.mxu0 0.0
  %539 = vmatpush1.msra.mxu0 0.0
  %540 = vmatprep.subr.mxu0 0.0
  %541 = vmatpush1.msra.mxu0 0.0
  %542 = vmatprep.subr.mxu0 0.0
  %543 = vmatpush1.msra.mxu0 0.0
  %544 = vmatprep.subr.mxu0 0.0
  %545 = vmatpush1.msra.mxu0 0.0
  %546 = vmatprep.subr.mxu0 0.0
  %547 = vmatpush1.msra.mxu0 0.0
  %548 = vmatprep.subr.mxu0 0.0
  %549 = vmatpush1.msra.mxu0 0.0
  %550 = vmatprep.subr.mxu0 0.0
  %551 = vmatpush1.msra.mxu0 0.0
  %552 = vmatprep.subr.mxu0 0.0
  %553 = vmatpush1.msra.mxu0 0.0
  %554 = vmatprep.subr.mxu0 0.0
  %555 = vmatpush1.msra.mxu0 0.0
  %556 = vmatprep.subr.mxu0 0.0
  %557 = vmatpush1.msra.mxu0 0.0
  %558 = vmatprep.subr.mxu0 0.0
  %559 = vmatpush1.msra.mxu0 0.0
  %560 = vmatprep.subr.mxu0 0.0
  %561 = vmatpush1.msra.mxu0 0.0
  %562 = vmatprep.subr.mxu0 0.0
  %563 = vmatpush1.msra.mxu0 0.0
  %564 = vmatprep.subr.mxu0 0.0
  %565 = vmatpush1.msra.mxu0 0.0
  %566 = vmatprep.subr.mxu0 0.0
  %567 = vmatpush1.msra.mxu0 0.0
  %568 = vmatprep.mubr.f32.mxu0 0.0
  %569 = vmatmul.mubr.f32.gmra.mrb[0].mxu0 %v502
  %v570 = vpop.f32.mrb[0].mxu0
  %v571 = vadd.f32 0.0, %v570
  %v572 = vpop.f32.mrb[0].mxu0
  %573 = vdwg.mxu0
  %v574 = vadd.f32 %v209, %v571
  %v575 = vxor.u32 %v574, 2147483648
  %v576 = vmul.f32 %v575, 1.442695
  %v577 = vpow.pop %v576
  %v578 = vadd.f32 %v577, 1.0
  %v579 = vrcp.pop %v578
  %v580 = vmul.f32 1.0, %v579
  %v581 = vadd.f32 %v571, %v345
  %583 = vrot.lane.b32.xlu0 %v581, 64
  %v584 = vpop.permute.xlu0 %583
  %v586 = vmul.f32 %v580, %v584
  %588 = vrot.lane.b32.xlu0 %v586, 64
  %v589 = vpop.permute.xlu0 %588
  %v591 = vadd.f32 %v209, %v589
  %v592 = vtanh.pop %v591
  %v593 = vsub.f32 1.0, %v580
  %595 = vrot.lane.b32.xlu0 %v592, 96
  %v596 = vpop.permute.xlu0 %595
  %v598 = vmul.f32 %v593, %v596
  %v599 = vmul.f32 %v580, %v496
  %v600 = vadd.f32 %v598, %v599
  %602 = vset.pattern.permute.xlu0 0
  %603 = vperm.xlu0 %602, %v239
  %v604 = vpop.permute.xlu0 %603
  %v606 = vmul.f32 %v604, %v600
  %608 = vset.pattern.permute.xlu0 0
  %609 = vperm.xlu0 %608, %v247
  %v610 = vpop.permute.xlu0 %609
  %v612 = vmul.f32 %v610, %v496
  %v613 = vadd.f32 %v606, %v612
  %615 = vrot.lane.b32.xlu0 %v613, 96
  %v616 = vpop.permute.xlu0 %615
  %618 = vst.msk [vmem:[#allocation2 + $0x10] sm:$0xff] %vm258, %v616
  %v619 = vsel %vm258, %v616, 0
  %621 = vmatprep.subr.mxu0 0.0
  %622 = vmatpush1.msra.mxu0 %v253
  %623 = vmatprep.subr.mxu0 0.0
  %624 = vmatpush1.msra.mxu0 %v254
  %625 = vmatprep.subr.mxu0 0.0
  %626 = vmatpush1.msra.mxu0 %v255
  %627 = vmatprep.subr.mxu0 0.0
  %628 = vmatpush1.msra.mxu0 %v256
  %629 = vmatprep.subr.mxu0 0.0
  %630 = vmatpush1.msra.mxu0 0.0
  %631 = vmatprep.subr.mxu0 0.0
  %632 = vmatpush1.msra.mxu0 0.0
  %633 = vmatprep.subr.mxu0 0.0
  %634 = vmatpush1.msra.mxu0 0.0
  %635 = vmatprep.subr.mxu0 0.0
  %636 = vmatpush1.msra.mxu0 0.0
  %637 = vmatprep.subr.mxu0 0.0
  %638 = vmatpush1.msra.mxu0 0.0
  %639 = vmatprep.subr.mxu0 0.0
  %640 = vmatpush1.msra.mxu0 0.0
  %641 = vmatprep.subr.mxu0 0.0
  %642 = vmatpush1.msra.mxu0 0.0
  %643 = vmatprep.subr.mxu0 0.0
  %644 = vmatpush1.msra.mxu0 0.0
  %645 = vmatprep.subr.mxu0 0.0
  %646 = vmatpush1.msra.mxu0 0.0
  %647 = vmatprep.subr.mxu0 0.0
  %648 = vmatpush1.msra.mxu0 0.0
  %649 = vmatprep.subr.mxu0 0.0
  %650 = vmatpush1.msra.mxu0 0.0
  %651 = vmatprep.subr.mxu0 0.0
  %652 = vmatpush1.msra.mxu0 0.0
  %653 = vmatprep.subr.mxu0 0.0
  %654 = vmatpush1.msra.mxu0 0.0
  %655 = vmatprep.subr.mxu0 0.0
  %656 = vmatpush1.msra.mxu0 0.0
  %657 = vmatprep.subr.mxu0 0.0
  %658 = vmatpush1.msra.mxu0 0.0
  %659 = vmatprep.subr.mxu0 0.0
  %660 = vmatpush1.msra.mxu0 0.0
  %661 = vmatprep.subr.mxu0 0.0
  %662 = vmatpush1.msra.mxu0 0.0
  %663 = vmatprep.subr.mxu0 0.0
  %664 = vmatpush1.msra.mxu0 0.0
  %665 = vmatprep.subr.mxu0 0.0
  %666 = vmatpush1.msra.mxu0 0.0
  %667 = vmatprep.subr.mxu0 0.0
  %668 = vmatpush1.msra.mxu0 0.0
  %669 = vmatprep.subr.mxu0 0.0
  %670 = vmatpush1.msra.mxu0 0.0
  %671 = vmatprep.subr.mxu0 0.0
  %672 = vmatpush1.msra.mxu0 0.0
  %673 = vmatprep.subr.mxu0 0.0
  %674 = vmatpush1.msra.mxu0 0.0
  %675 = vmatprep.subr.mxu0 0.0
  %676 = vmatpush1.msra.mxu0 0.0
  %677 = vmatprep.subr.mxu0 0.0
  %678 = vmatpush1.msra.mxu0 0.0
  %679 = vmatprep.subr.mxu0 0.0
  %680 = vmatpush1.msra.mxu0 0.0
  %681 = vmatprep.subr.mxu0 0.0
  %682 = vmatpush1.msra.mxu0 0.0
  %683 = vmatprep.subr.mxu0 0.0
  %684 = vmatpush1.msra.mxu0 0.0
  %685 = vmatprep.mubr.f32.mxu0 0.0
  %686 = vmatmul.mubr.f32.gmra.mrb[0].mxu0 %v619
  %v687 = vpop.f32.mrb[0].mxu0
  %v688 = vadd.f32 0.0, %v687
  %v689 = vpop.f32.mrb[0].mxu0
  %690 = vdwg.mxu0
  %v691 = vadd.f32 %v214, %v688
  %v692 = vxor.u32 %v691, 2147483648
  %v693 = vmul.f32 %v692, 1.442695
  %v694 = vpow.pop %v693
  %v695 = vadd.f32 %v694, 1.0
  %v696 = vrcp.pop %v695
  %v697 = vmul.f32 1.0, %v696
  %v698 = vadd.f32 %v688, %v345
  %700 = vrot.lane.b32.xlu0 %v698, 64
  %v701 = vpop.permute.xlu0 %700
  %v703 = vmul.f32 %v697, %v701
  %705 = vrot.lane.b32.xlu0 %v703, 64
  %v706 = vpop.permute.xlu0 %705
  %v708 = vadd.f32 %v214, %v706
  %v709 = vtanh.pop %v708
  %v710 = vsub.f32 1.0, %v697
  %712 = vrot.lane.b32.xlu0 %v709, 96
  %v713 = vpop.permute.xlu0 %712
  %v715 = vmul.f32 %v710, %v713
  %v716 = vmul.f32 %v697, %v613
  %v717 = vadd.f32 %v715, %v716
  %719 = vset.pattern.permute.xlu0 0
  %720 = vperm.xlu0 %719, %v240
  %v721 = vpop.permute.xlu0 %720
  %v723 = vmul.f32 %v721, %v717
  %725 = vset.pattern.permute.xlu0 0
  %726 = vperm.xlu0 %725, %v248
  %v727 = vpop.permute.xlu0 %726
  %v729 = vmul.f32 %v727, %v613
  %v730 = vadd.f32 %v723, %v729
  %732 = vrot.lane.b32.xlu0 %v730, 96
  %v733 = vpop.permute.xlu0 %732
  %735 = vst.msk [vmem:[#allocation2 + $0x18] sm:$0xff] %vm258, %v733
  %v736 = vsel %vm258, %v733, 0
  %738 = vmatprep.subr.mxu0 0.0
  %739 = vmatpush1.msra.mxu0 %v253
  %740 = vmatprep.subr.mxu0 0.0
  %741 = vmatpush1.msra.mxu0 %v254
  %742 = vmatprep.subr.mxu0 0.0
  %743 = vmatpush1.msra.mxu0 %v255
  %744 = vmatprep.subr.mxu0 0.0
  %745 = vmatpush1.msra.mxu0 %v256
  %746 = vmatprep.subr.mxu0 0.0
  %747 = vmatpush1.msra.mxu0 0.0
  %748 = vmatprep.subr.mxu0 0.0
  %749 = vmatpush1.msra.mxu0 0.0
  %750 = vmatprep.subr.mxu0 0.0
  %751 = vmatpush1.msra.mxu0 0.0
  %752 = vmatprep.subr.mxu0 0.0
  %753 = vmatpush1.msra.mxu0 0.0
  %754 = vmatprep.subr.mxu0 0.0
  %755 = vmatpush1.msra.mxu0 0.0
  %756 = vmatprep.subr.mxu0 0.0
  %757 = vmatpush1.msra.mxu0 0.0
  %758 = vmatprep.subr.mxu0 0.0
  %759 = vmatpush1.msra.mxu0 0.0
  %760 = vmatprep.subr.mxu0 0.0
  %761 = vmatpush1.msra.mxu0 0.0
  %762 = vmatprep.subr.mxu0 0.0
  %763 = vmatpush1.msra.mxu0 0.0
  %764 = vmatprep.subr.mxu0 0.0
  %765 = vmatpush1.msra.mxu0 0.0
  %766 = vmatprep.subr.mxu0 0.0
  %767 = vmatpush1.msra.mxu0 0.0
  %768 = vmatprep.subr.mxu0 0.0
  %769 = vmatpush1.msra.mxu0 0.0
  %770 = vmatprep.subr.mxu0 0.0
  %771 = vmatpush1.msra.mxu0 0.0
  %772 = vmatprep.subr.mxu0 0.0
  %773 = vmatpush1.msra.mxu0 0.0
  %774 = vmatprep.subr.mxu0 0.0
  %775 = vmatpush1.msra.mxu0 0.0
  %776 = vmatprep.subr.mxu0 0.0
  %777 = vmatpush1.msra.mxu0 0.0
  %778 = vmatprep.subr.mxu0 0.0
  %779 = vmatpush1.msra.mxu0 0.0
  %780 = vmatprep.subr.mxu0 0.0
  %781 = vmatpush1.msra.mxu0 0.0
  %782 = vmatprep.subr.mxu0 0.0
  %783 = vmatpush1.msra.mxu0 0.0
  %784 = vmatprep.subr.mxu0 0.0
  %785 = vmatpush1.msra.mxu0 0.0
  %786 = vmatprep.subr.mxu0 0.0
  %787 = vmatpush1.msra.mxu0 0.0
  %788 = vmatprep.subr.mxu0 0.0
  %789 = vmatpush1.msra.mxu0 0.0
  %790 = vmatprep.subr.mxu0 0.0
  %791 = vmatpush1.msra.mxu0 0.0
  %792 = vmatprep.subr.mxu0 0.0
  %793 = vmatpush1.msra.mxu0 0.0
  %794 = vmatprep.subr.mxu0 0.0
  %795 = vmatpush1.msra.mxu0 0.0
  %796 = vmatprep.subr.mxu0 0.0
  %797 = vmatpush1.msra.mxu0 0.0
  %798 = vmatprep.subr.mxu0 0.0
  %799 = vmatpush1.msra.mxu0 0.0
  %800 = vmatprep.subr.mxu0 0.0
  %801 = vmatpush1.msra.mxu0 0.0
  %802 = vmatprep.mubr.f32.mxu0 0.0
  %803 = vmatmul.mubr.f32.gmra.mrb[0].mxu0 %v736
  %v804 = vpop.f32.mrb[0].mxu0
  %v805 = vadd.f32 0.0, %v804
  %v806 = vpop.f32.mrb[0].mxu0
  %807 = vdwg.mxu0
  %v808 = vadd.f32 %v219, %v805
  %v809 = vxor.u32 %v808, 2147483648
  %v810 = vmul.f32 %v809, 1.442695
  %v811 = vpow.pop %v810
  %v812 = vadd.f32 %v811, 1.0
  %v813 = vrcp.pop %v812
  %v814 = vmul.f32 1.0, %v813
  %v815 = vadd.f32 %v805, %v345
  %817 = vrot.lane.b32.xlu0 %v815, 64
  %v818 = vpop.permute.xlu0 %817
  %v820 = vmul.f32 %v814, %v818
  %822 = vrot.lane.b32.xlu0 %v820, 64
  %v823 = vpop.permute.xlu0 %822
  %v825 = vadd.f32 %v219, %v823
  %v826 = vtanh.pop %v825
  %v827 = vsub.f32 1.0, %v814
  %829 = vrot.lane.b32.xlu0 %v826, 96
  %v830 = vpop.permute.xlu0 %829
  %v832 = vmul.f32 %v827, %v830
  %v833 = vmul.f32 %v814, %v730
  %v834 = vadd.f32 %v832, %v833
  %836 = vset.pattern.permute.xlu0 0
  %837 = vperm.xlu0 %836, %v241
  %v838 = vpop.permute.xlu0 %837
  %v840 = vmul.f32 %v838, %v834
  %842 = vset.pattern.permute.xlu0 0
  %843 = vperm.xlu0 %842, %v249
  %v844 = vpop.permute.xlu0 %843
  %v846 = vmul.f32 %v844, %v730
  %v847 = vadd.f32 %v840, %v846
  %849 = vrot.lane.b32.xlu0 %v847, 96
  %v850 = vpop.permute.xlu0 %849
  %852 = vst.msk [vmem:[#allocation2 + $0x20] sm:$0xff] %vm258, %v850
  %v853 = vsel %vm258, %v850, 0
  %855 = vmatprep.subr.mxu0 0.0
  %856 = vmatpush1.msra.mxu0 %v253
  %857 = vmatprep.subr.mxu0 0.0
  %858 = vmatpush1.msra.mxu0 %v254
  %859 = vmatprep.subr.mxu0 0.0
  %860 = vmatpush1.msra.mxu0 %v255
  %861 = vmatprep.subr.mxu0 0.0
  %862 = vmatpush1.msra.mxu0 %v256
  %863 = vmatprep.subr.mxu0 0.0
  %864 = vmatpush1.msra.mxu0 0.0
  %865 = vmatprep.subr.mxu0 0.0
  %866 = vmatpush1.msra.mxu0 0.0
  %867 = vmatprep.subr.mxu0 0.0
  %868 = vmatpush1.msra.mxu0 0.0
  %869 = vmatprep.subr.mxu0 0.0
  %870 = vmatpush1.msra.mxu0 0.0
  %871 = vmatprep.subr.mxu0 0.0
  %872 = vmatpush1.msra.mxu0 0.0
  %873 = vmatprep.subr.mxu0 0.0
  %874 = vmatpush1.msra.mxu0 0.0
  %875 = vmatprep.subr.mxu0 0.0
  %876 = vmatpush1.msra.mxu0 0.0
  %877 = vmatprep.subr.mxu0 0.0
  %878 = vmatpush1.msra.mxu0 0.0
  %879 = vmatprep.subr.mxu0 0.0
  %880 = vmatpush1.msra.mxu0 0.0
  %881 = vmatprep.subr.mxu0 0.0
  %882 = vmatpush1.msra.mxu0 0.0
  %883 = vmatprep.subr.mxu0 0.0
  %884 = vmatpush1.msra.mxu0 0.0
  %885 = vmatprep.subr.mxu0 0.0
  %886 = vmatpush1.msra.mxu0 0.0
  %887 = vmatprep.subr.mxu0 0.0
  %888 = vmatpush1.msra.mxu0 0.0
  %889 = vmatprep.subr.mxu0 0.0
  %890 = vmatpush1.msra.mxu0 0.0
  %891 = vmatprep.subr.mxu0 0.0
  %892 = vmatpush1.msra.mxu0 0.0
  %893 = vmatprep.subr.mxu0 0.0
  %894 = vmatpush1.msra.mxu0 0.0
  %895 = vmatprep.subr.mxu0 0.0
  %896 = vmatpush1.msra.mxu0 0.0
  %897 = vmatprep.subr.mxu0 0.0
  %898 = vmatpush1.msra.mxu0 0.0
  %899 = vmatprep.subr.mxu0 0.0
  %900 = vmatpush1.msra.mxu0 0.0
  %901 = vmatprep.subr.mxu0 0.0
  %902 = vmatpush1.msra.mxu0 0.0
  %903 = vmatprep.subr.mxu0 0.0
  %904 = vmatpush1.msra.mxu0 0.0
  %905 = vmatprep.subr.mxu0 0.0
  %906 = vmatpush1.msra.mxu0 0.0
  %907 = vmatprep.subr.mxu0 0.0
  %908 = vmatpush1.msra.mxu0 0.0
  %909 = vmatprep.subr.mxu0 0.0
  %910 = vmatpush1.msra.mxu0 0.0
  %911 = vmatprep.subr.mxu0 0.0
  %912 = vmatpush1.msra.mxu0 0.0
  %913 = vmatprep.subr.mxu0 0.0
  %914 = vmatpush1.msra.mxu0 0.0
  %915 = vmatprep.subr.mxu0 0.0
  %916 = vmatpush1.msra.mxu0 0.0
  %917 = vmatprep.subr.mxu0 0.0
  %918 = vmatpush1.msra.mxu0 0.0
  %919 = vmatprep.mubr.f32.mxu0 0.0
  %920 = vmatmul.mubr.f32.gmra.mrb[0].mxu0 %v853
  %v921 = vpop.f32.mrb[0].mxu0
  %v922 = vadd.f32 0.0, %v921
  %v923 = vpop.f32.mrb[0].mxu0
  %924 = vdwg.mxu0
  %v925 = vadd.f32 %v224, %v922
  %v926 = vxor.u32 %v925, 2147483648
  %v927 = vmul.f32 %v926, 1.442695
  %v928 = vpow.pop %v927
  %v929 = vadd.f32 %v928, 1.0
  %v930 = vrcp.pop %v929
  %v931 = vmul.f32 1.0, %v930
  %v932 = vadd.f32 %v922, %v345
  %934 = vrot.lane.b32.xlu0 %v932, 64
  %v935 = vpop.permute.xlu0 %934
  %v937 = vmul.f32 %v931, %v935
  %939 = vrot.lane.b32.xlu0 %v937, 64
  %v940 = vpop.permute.xlu0 %939
  %v942 = vadd.f32 %v224, %v940
  %v943 = vtanh.pop %v942
  %v944 = vsub.f32 1.0, %v931
  %946 = vrot.lane.b32.xlu0 %v943, 96
  %v947 = vpop.permute.xlu0 %946
  %v949 = vmul.f32 %v944, %v947
  %v950 = vmul.f32 %v931, %v847
  %v951 = vadd.f32 %v949, %v950
  %953 = vset.pattern.permute.xlu0 0
  %954 = vperm.xlu0 %953, %v242
  %v955 = vpop.permute.xlu0 %954
  %v957 = vmul.f32 %v955, %v951
  %959 = vset.pattern.permute.xlu0 0
  %960 = vperm.xlu0 %959, %v250
  %v961 = vpop.permute.xlu0 %960
  %v963 = vmul.f32 %v961, %v847
  %v964 = vadd.f32 %v957, %v963
  %966 = vrot.lane.b32.xlu0 %v964, 96
  %v967 = vpop.permute.xlu0 %966
  %969 = vst.msk [vmem:[#allocation2 + $0x28] sm:$0xff] %vm258, %v967
  %v970 = vsel %vm258, %v967, 0
  %972 = vmatprep.subr.mxu0 0.0
  %973 = vmatpush1.msra.mxu0 %v253
  %974 = vmatprep.subr.mxu0 0.0
  %975 = vmatpush1.msra.mxu0 %v254
  %976 = vmatprep.subr.mxu0 0.0
  %977 = vmatpush1.msra.mxu0 %v255
  %978 = vmatprep.subr.mxu0 0.0
  %979 = vmatpush1.msra.mxu0 %v256
  %980 = vmatprep.subr.mxu0 0.0
  %981 = vmatpush1.msra.mxu0 0.0
  %982 = vmatprep.subr.mxu0 0.0
  %983 = vmatpush1.msra.mxu0 0.0
  %984 = vmatprep.subr.mxu0 0.0
  %985 = vmatpush1.msra.mxu0 0.0
  %986 = vmatprep.subr.mxu0 0.0
  %987 = vmatpush1.msra.mxu0 0.0
  %988 = vmatprep.subr.mxu0 0.0
  %989 = vmatpush1.msra.mxu0 0.0
  %990 = vmatprep.subr.mxu0 0.0
  %991 = vmatpush1.msra.mxu0 0.0
  %992 = vmatprep.subr.mxu0 0.0
  %993 = vmatpush1.msra.mxu0 0.0
  %994 = vmatprep.subr.mxu0 0.0
  %995 = vmatpush1.msra.mxu0 0.0
  %996 = vmatprep.subr.mxu0 0.0
  %997 = vmatpush1.msra.mxu0 0.0
  %998 = vmatprep.subr.mxu0 0.0
  %999 = vmatpush1.msra.mxu0 0.0
  %1000 = vmatprep.subr.mxu0 0.0
  %1001 = vmatpush1.msra.mxu0 0.0
  %1002 = vmatprep.subr.mxu0 0.0
  %1003 = vmatpush1.msra.mxu0 0.0
  %1004 = vmatprep.subr.mxu0 0.0
  %1005 = vmatpush1.msra.mxu0 0.0
  %1006 = vmatprep.subr.mxu0 0.0
  %1007 = vmatpush1.msra.mxu0 0.0
  %1008 = vmatprep.subr.mxu0 0.0
  %1009 = vmatpush1.msra.mxu0 0.0
  %1010 = vmatprep.subr.mxu0 0.0
  %1011 = vmatpush1.msra.mxu0 0.0
  %1012 = vmatprep.subr.mxu0 0.0
  %1013 = vmatpush1.msra.mxu0 0.0
  %1014 = vmatprep.subr.mxu0 0.0
  %1015 = vmatpush1.msra.mxu0 0.0
  %1016 = vmatprep.subr.mxu0 0.0
  %1017 = vmatpush1.msra.mxu0 0.0
  %1018 = vmatprep.subr.mxu0 0.0
  %1019 = vmatpush1.msra.mxu0 0.0
  %1020 = vmatprep.subr.mxu0 0.0
  %1021 = vmatpush1.msra.mxu0 0.0
  %1022 = vmatprep.subr.mxu0 0.0
  %1023 = vmatpush1.msra.mxu0 0.0
  %1024 = vmatprep.subr.mxu0 0.0
  %1025 = vmatpush1.msra.mxu0 0.0
  %1026 = vmatprep.subr.mxu0 0.0
  %1027 = vmatpush1.msra.mxu0 0.0
  %1028 = vmatprep.subr.mxu0 0.0
  %1029 = vmatpush1.msra.mxu0 0.0
  %1030 = vmatprep.subr.mxu0 0.0
  %1031 = vmatpush1.msra.mxu0 0.0
  %1032 = vmatprep.subr.mxu0 0.0
  %1033 = vmatpush1.msra.mxu0 0.0
  %1034 = vmatprep.subr.mxu0 0.0
  %1035 = vmatpush1.msra.mxu0 0.0
  %1036 = vmatprep.mubr.f32.mxu0 0.0
  %1037 = vmatmul.mubr.f32.gmra.mrb[0].mxu0 %v970
  %v1038 = vpop.f32.mrb[0].mxu0
  %v1039 = vadd.f32 0.0, %v1038
  %v1040 = vpop.f32.mrb[0].mxu0
  %1041 = vdwg.mxu0
  %v1042 = vadd.f32 %v229, %v1039
  %v1043 = vxor.u32 %v1042, 2147483648
  %v1044 = vmul.f32 %v1043, 1.442695
  %v1045 = vpow.pop %v1044
  %v1046 = vadd.f32 %v1045, 1.0
  %v1047 = vrcp.pop %v1046
  %v1048 = vmul.f32 1.0, %v1047
  %v1049 = vadd.f32 %v1039, %v345
  %1051 = vrot.lane.b32.xlu0 %v1049, 64
  %v1052 = vpop.permute.xlu0 %1051
  %v1054 = vmul.f32 %v1048, %v1052
  %1056 = vrot.lane.b32.xlu0 %v1054, 64
  %v1057 = vpop.permute.xlu0 %1056
  %v1059 = vadd.f32 %v229, %v1057
  %v1060 = vtanh.pop %v1059
  %v1061 = vsub.f32 1.0, %v1048
  %1063 = vrot.lane.b32.xlu0 %v1060, 96
  %v1064 = vpop.permute.xlu0 %1063
  %v1066 = vmul.f32 %v1061, %v1064
  %v1067 = vmul.f32 %v1048, %v964
  %v1068 = vadd.f32 %v1066, %v1067
  %1070 = vset.pattern.permute.xlu0 0
  %1071 = vperm.xlu0 %1070, %v243
  %v1072 = vpop.permute.xlu0 %1071
  %v1074 = vmul.f32 %v1072, %v1068
  %1076 = vset.pattern.permute.xlu0 0
  %1077 = vperm.xlu0 %1076, %v251
  %v1078 = vpop.permute.xlu0 %1077
  %v1080 = vmul.f32 %v1078, %v964
  %v1081 = vadd.f32 %v1074, %v1080
  %1083 = vrot.lane.b32.xlu0 %v1081, 96
  %v1084 = vpop.permute.xlu0 %1083
  %1086 = vst.msk [vmem:[#allocation2 + $0x30] sm:$0xff] %vm258, %v1084
  %v1087 = vsel %vm258, %v1084, 0
  %1089 = vmatprep.subr.mxu0 0.0
  %1090 = vmatpush1.msra.mxu0 %v253
  %1091 = vmatprep.subr.mxu0 0.0
  %1092 = vmatpush1.msra.mxu0 %v254
  %1093 = vmatprep.subr.mxu0 0.0
  %1094 = vmatpush1.msra.mxu0 %v255
  %1095 = vmatprep.subr.mxu0 0.0
  %1096 = vmatpush1.msra.mxu0 %v256
  %1097 = vmatprep.subr.mxu0 0.0
  %1098 = vmatpush1.msra.mxu0 0.0
  %1099 = vmatprep.subr.mxu0 0.0
  %1100 = vmatpush1.msra.mxu0 0.0
  %1101 = vmatprep.subr.mxu0 0.0
  %1102 = vmatpush1.msra.mxu0 0.0
  %1103 = vmatprep.subr.mxu0 0.0
  %1104 = vmatpush1.msra.mxu0 0.0
  %1105 = vmatprep.subr.mxu0 0.0
  %1106 = vmatpush1.msra.mxu0 0.0
  %1107 = vmatprep.subr.mxu0 0.0
  %1108 = vmatpush1.msra.mxu0 0.0
  %1109 = vmatprep.subr.mxu0 0.0
  %1110 = vmatpush1.msra.mxu0 0.0
  %1111 = vmatprep.subr.mxu0 0.0
  %1112 = vmatpush1.msra.mxu0 0.0
  %1113 = vmatprep.subr.mxu0 0.0
  %1114 = vmatpush1.msra.mxu0 0.0
  %1115 = vmatprep.subr.mxu0 0.0
  %1116 = vmatpush1.msra.mxu0 0.0
  %1117 = vmatprep.subr.mxu0 0.0
  %1118 = vmatpush1.msra.mxu0 0.0
  %1119 = vmatprep.subr.mxu0 0.0
  %1120 = vmatpush1.msra.mxu0 0.0
  %1121 = vmatprep.subr.mxu0 0.0
  %1122 = vmatpush1.msra.mxu0 0.0
  %1123 = vmatprep.subr.mxu0 0.0
  %1124 = vmatpush1.msra.mxu0 0.0
  %1125 = vmatprep.subr.mxu0 0.0
  %1126 = vmatpush1.msra.mxu0 0.0
  %1127 = vmatprep.subr.mxu0 0.0
  %1128 = vmatpush1.msra.mxu0 0.0
  %1129 = vmatprep.subr.mxu0 0.0
  %1130 = vmatpush1.msra.mxu0 0.0
  %1131 = vmatprep.subr.mxu0 0.0
  %1132 = vmatpush1.msra.mxu0 0.0
  %1133 = vmatprep.subr.mxu0 0.0
  %1134 = vmatpush1.msra.mxu0 0.0
  %1135 = vmatprep.subr.mxu0 0.0
  %1136 = vmatpush1.msra.mxu0 0.0
  %1137 = vmatprep.subr.mxu0 0.0
  %1138 = vmatpush1.msra.mxu0 0.0
  %1139 = vmatprep.subr.mxu0 0.0
  %1140 = vmatpush1.msra.mxu0 0.0
  %1141 = vmatprep.subr.mxu0 0.0
  %1142 = vmatpush1.msra.mxu0 0.0
  %1143 = vmatprep.subr.mxu0 0.0
  %1144 = vmatpush1.msra.mxu0 0.0
  %1145 = vmatprep.subr.mxu0 0.0
  %1146 = vmatpush1.msra.mxu0 0.0
  %1147 = vmatprep.subr.mxu0 0.0
  %1148 = vmatpush1.msra.mxu0 0.0
  %1149 = vmatprep.subr.mxu0 0.0
  %1150 = vmatpush1.msra.mxu0 0.0
  %1151 = vmatprep.subr.mxu0 0.0
  %1152 = vmatpush1.msra.mxu0 0.0
  %1153 = vmatprep.mubr.f32.mxu0 0.0
  %1154 = vmatmul.mubr.f32.gmra.mrb[0].mxu0 %v1087
  %v1155 = vpop.f32.mrb[0].mxu0
  %v1156 = vadd.f32 0.0, %v1155
  %v1157 = vpop.f32.mrb[0].mxu0
  %1158 = vdwg.mxu0
  %v1159 = vadd.f32 %v234, %v1156
  %v1160 = vxor.u32 %v1159, 2147483648
  %v1161 = vmul.f32 %v1160, 1.442695
  %v1162 = vpow.pop %v1161
  %v1163 = vadd.f32 %v1162, 1.0
  %v1164 = vrcp.pop %v1163
  %v1165 = vmul.f32 1.0, %v1164
  %v1166 = vadd.f32 %v1156, %v345
  %1168 = vrot.lane.b32.xlu0 %v1166, 64
  %v1169 = vpop.permute.xlu0 %1168
  %v1171 = vmul.f32 %v1165, %v1169
  %1173 = vrot.lane.b32.xlu0 %v1171, 64
  %v1174 = vpop.permute.xlu0 %1173
  %v1176 = vadd.f32 %v234, %v1174
  %v1177 = vtanh.pop %v1176
  %v1178 = vsub.f32 1.0, %v1165
  %1180 = vrot.lane.b32.xlu0 %v1177, 96
  %v1181 = vpop.permute.xlu0 %1180
  %v1183 = vmul.f32 %v1178, %v1181
  %v1184 = vmul.f32 %v1165, %v1081
  %v1185 = vadd.f32 %v1183, %v1184
  %1187 = vset.pattern.permute.xlu0 0
  %1188 = vperm.xlu0 %1187, %v244
  %v1189 = vpop.permute.xlu0 %1188
  %v1191 = vmul.f32 %v1189, %v1185
  %1193 = vset.pattern.permute.xlu0 0
  %1194 = vperm.xlu0 %1193, %v252
  %v1195 = vpop.permute.xlu0 %1194
  %v1197 = vmul.f32 %v1195, %v1081
  %v1198 = vadd.f32 %v1191, %v1197
  %1200 = vrot.lane.b32.xlu0 %v1198, 96
  %v1201 = vpop.permute.xlu0 %1200
  %1203 = vst.msk [vmem:[#allocation2 + $0x38] sm:$0xff] %vm258, %v1201
  %v1204 = vld [vmem:[#allocation2] sm:$0xff]
  %v1205 = vld [vmem:[#allocation2 + $0x8] sm:$0xff]
  %v1206 = vld [vmem:[#allocation2 + $0x10] sm:$0xff]
  %v1207 = vld [vmem:[#allocation2 + $0x18] sm:$0xff]
  %v1208 = vld [vmem:[#allocation2 + $0x20] sm:$0xff]
  %v1209 = vld [vmem:[#allocation2 + $0x28] sm:$0xff]
  %v1210 = vld [vmem:[#allocation2 + $0x30] sm:$0xff]
  %v1211 = vld [vmem:[#allocation2 + $0x38] sm:$0xff]
  %v1212 = vld [vmem:[%s5] sm:$0xff]
  %v1213 = vld [vmem:[%s5 + $0x8] sm:$0xff]
  %v1214 = vld [vmem:[%s5 + $0x10] sm:$0xff]
  %v1215 = vld [vmem:[%s5 + $0x18] sm:$0xff]
  %v1216 = vld [vmem:[%s6] sm:$0x1]
  %v1218 = vlaneseq
  %v1219 = vshrl.u32 %v1218, 7
  %v1220 = vsub.s32 0, %v1219
  %v1221 = vrot.slane %v1216, %v1220
  %v1224 = vsel %vm258, %v1204, 0
  %v1227 = vsel %vm258, %v1205, 0
  %v1230 = vsel %vm258, %v1206, 0
  %v1233 = vsel %vm258, %v1207, 0
  %v1236 = vsel %vm258, %v1208, 0
  %v1239 = vsel %vm258, %v1209, 0
  %v1242 = vsel %vm258, %v1210, 0
  %v1245 = vsel %vm258, %v1211, 0
  %1247 = vmatprep.subr.mxu0 0.0
  %1248 = vmatpush1.msra.mxu0 %v1212
  %1249 = vmatprep.subr.mxu0 0.0
  %1250 = vmatpush1.msra.mxu0 %v1213
  %1251 = vmatprep.subr.mxu0 0.0
  %1252 = vmatpush1.msra.mxu0 %v1214
  %1253 = vmatprep.subr.mxu0 0.0
  %1254 = vmatpush1.msra.mxu0 %v1215
  %1255 = vmatprep.subr.mxu0 0.0
  %1256 = vmatpush1.msra.mxu0 0.0
  %1257 = vmatprep.subr.mxu0 0.0
  %1258 = vmatpush1.msra.mxu0 0.0
  %1259 = vmatprep.subr.mxu0 0.0
  %1260 = vmatpush1.msra.mxu0 0.0
  %1261 = vmatprep.subr.mxu0 0.0
  %1262 = vmatpush1.msra.mxu0 0.0
  %1263 = vmatprep.subr.mxu0 0.0
  %1264 = vmatpush1.msra.mxu0 0.0
  %1265 = vmatprep.subr.mxu0 0.0
  %1266 = vmatpush1.msra.mxu0 0.0
  %1267 = vmatprep.subr.mxu0 0.0
  %1268 = vmatpush1.msra.mxu0 0.0
  %1269 = vmatprep.subr.mxu0 0.0
  %1270 = vmatpush1.msra.mxu0 0.0
  %1271 = vmatprep.subr.mxu0 0.0
  %1272 = vmatpush1.msra.mxu0 0.0
  %1273 = vmatprep.subr.mxu0 0.0
  %1274 = vmatpush1.msra.mxu0 0.0
  %1275 = vmatprep.subr.mxu0 0.0
  %1276 = vmatpush1.msra.mxu0 0.0
  %1277 = vmatprep.subr.mxu0 0.0
  %1278 = vmatpush1.msra.mxu0 0.0
  %1279 = vmatprep.subr.mxu0 0.0
  %1280 = vmatpush1.msra.mxu0 0.0
  %1281 = vmatprep.subr.mxu0 0.0
  %1282 = vmatpush1.msra.mxu0 0.0
  %1283 = vmatprep.subr.mxu0 0.0
  %1284 = vmatpush1.msra.mxu0 0.0
  %1285 = vmatprep.subr.mxu0 0.0
  %1286 = vmatpush1.msra.mxu0 0.0
  %1287 = vmatprep.subr.mxu0 0.0
  %1288 = vmatpush1.msra.mxu0 0.0
  %1289 = vmatprep.subr.mxu0 0.0
  %1290 = vmatpush1.msra.mxu0 0.0
  %1291 = vmatprep.subr.mxu0 0.0
  %1292 = vmatpush1.msra.mxu0 0.0
  %1293 = vmatprep.subr.mxu0 0.0
  %1294 = vmatpush1.msra.mxu0 0.0
  %1295 = vmatprep.subr.mxu0 0.0
  %1296 = vmatpush1.msra.mxu0 0.0
  %1297 = vmatprep.subr.mxu0 0.0
  %1298 = vmatpush1.msra.mxu0 0.0
  %1299 = vmatprep.subr.mxu0 0.0
  %1300 = vmatpush1.msra.mxu0 0.0
  %1301 = vmatprep.subr.mxu0 0.0
  %1302 = vmatpush1.msra.mxu0 0.0
  %1303 = vmatprep.subr.mxu0 0.0
  %1304 = vmatpush1.msra.mxu0 0.0
  %1305 = vmatprep.subr.mxu0 0.0
  %1306 = vmatpush1.msra.mxu0 0.0
  %1307 = vmatprep.subr.mxu0 0.0
  %1308 = vmatpush1.msra.mxu0 0.0
  %1309 = vmatprep.subr.mxu0 0.0
  %1310 = vmatpush1.msra.mxu0 0.0
  %1311 = vmatprep.mubr.f32.mxu0 0.0
  %1312 = vmatmul.mubr.f32.gmra.mrb[0].mxu0 %v1224
  %v1313 = vpop.f32.mrb[0].mxu0
  %v1314 = vadd.f32 %v1221, %v1313
  %v1315 = vpop.f32.mrb[0].mxu0
  %1316 = vmatprep.mubr.f32.mxu0 0.0
  %1317 = vmatmul.mubr.f32.gmra.mrb[0].mxu0 %v1227
  %v1318 = vpop.f32.mrb[0].mxu0
  %v1319 = vadd.f32 %v1221, %v1318
  %v1320 = vpop.f32.mrb[0].mxu0
  %1321 = vmatprep.mubr.f32.mxu0 0.0
  %1322 = vmatmul.mubr.f32.gmra.mrb[0].mxu0 %v1230
  %v1323 = vpop.f32.mrb[0].mxu0
  %v1324 = vadd.f32 %v1221, %v1323
  %v1325 = vpop.f32.mrb[0].mxu0
  %1326 = vmatprep.mubr.f32.mxu0 0.0
  %1327 = vmatmul.mubr.f32.gmra.mrb[0].mxu0 %v1233
  %v1328 = vpop.f32.mrb[0].mxu0
  %v1329 = vadd.f32 %v1221, %v1328
  %v1330 = vpop.f32.mrb[0].mxu0
  %1331 = vmatprep.mubr.f32.mxu0 0.0
  %1332 = vmatmul.mubr.f32.gmra.mrb[0].mxu0 %v1236
  %v1333 = vpop.f32.mrb[0].mxu0
  %v1334 = vadd.f32 %v1221, %v1333
  %v1335 = vpop.f32.mrb[0].mxu0
  %1336 = vmatprep.mubr.f32.mxu0 0.0
  %1337 = vmatmul.mubr.f32.gmra.mrb[0].mxu0 %v1239
  %v1338 = vpop.f32.mrb[0].mxu0
  %v1339 = vadd.f32 %v1221, %v1338
  %v1340 = vpop.f32.mrb[0].mxu0
  %1341 = vmatprep.mubr.f32.mxu0 0.0
  %1342 = vmatmul.mubr.f32.gmra.mrb[0].mxu0 %v1242
  %v1343 = vpop.f32.mrb[0].mxu0
  %v1344 = vadd.f32 %v1221, %v1343
  %v1345 = vpop.f32.mrb[0].mxu0
  %1346 = vmatprep.mubr.f32.mxu0 0.0
  %1347 = vmatmul.mubr.f32.gmra.mrb[0].mxu0 %v1245
  %v1348 = vpop.f32.mrb[0].mxu0
  %v1349 = vadd.f32 %v1221, %v1348
  %v1350 = vpop.f32.mrb[0].mxu0
  %1351 = vdwg.mxu0
  %v1352 = vld [vmem:[%s7] sm:$0xff]
  %v1353 = vld [vmem:[%s7 + $0x8] sm:$0xff]
  %v1354 = vld [vmem:[%s7 + $0x10] sm:$0xff]
  %v1355 = vld [vmem:[%s7 + $0x18] sm:$0xff]
  %v1356 = vld [vmem:[%s8] sm:$0x1]
  %1357 = vmatprep.subr.mxu0 0.0
  %1358 = vmatpush1.msra.mxu0 %v1352
  %1359 = vmatprep.subr.mxu0 0.0
  %1360 = vmatpush1.msra.mxu0 %v1353
  %1361 = vmatprep.subr.mxu0 0.0
  %1362 = vmatpush1.msra.mxu0 %v1354
  %1363 = vmatprep.subr.mxu0 0.0
  %1364 = vmatpush1.msra.mxu0 %v1355
  %1365 = vmatprep.subr.mxu0 0.0
  %1366 = vmatpush1.msra.mxu0 0.0
  %1367 = vmatprep.subr.mxu0 0.0
  %1368 = vmatpush1.msra.mxu0 0.0
  %1369 = vmatprep.subr.mxu0 0.0
  %1370 = vmatpush1.msra.mxu0 0.0
  %1371 = vmatprep.subr.mxu0 0.0
  %1372 = vmatpush1.msra.mxu0 0.0
  %1373 = vmatprep.subr.mxu0 0.0
  %1374 = vmatpush1.msra.mxu0 0.0
  %1375 = vmatprep.subr.mxu0 0.0
  %1376 = vmatpush1.msra.mxu0 0.0
  %1377 = vmatprep.subr.mxu0 0.0
  %1378 = vmatpush1.msra.mxu0 0.0
  %1379 = vmatprep.subr.mxu0 0.0
  %1380 = vmatpush1.msra.mxu0 0.0
  %1381 = vmatprep.subr.mxu0 0.0
  %1382 = vmatpush1.msra.mxu0 0.0
  %1383 = vmatprep.subr.mxu0 0.0
  %1384 = vmatpush1.msra.mxu0 0.0
  %1385 = vmatprep.subr.mxu0 0.0
  %1386 = vmatpush1.msra.mxu0 0.0
  %1387 = vmatprep.subr.mxu0 0.0
  %1388 = vmatpush1.msra.mxu0 0.0
  %1389 = vmatprep.subr.mxu0 0.0
  %1390 = vmatpush1.msra.mxu0 0.0
  %1391 = vmatprep.subr.mxu0 0.0
  %1392 = vmatpush1.msra.mxu0 0.0
  %1393 = vmatprep.subr.mxu0 0.0
  %1394 = vmatpush1.msra.mxu0 0.0
  %1395 = vmatprep.subr.mxu0 0.0
  %1396 = vmatpush1.msra.mxu0 0.0
  %1397 = vmatprep.subr.mxu0 0.0
  %1398 = vmatpush1.msra.mxu0 0.0
  %1399 = vmatprep.subr.mxu0 0.0
  %1400 = vmatpush1.msra.mxu0 0.0
  %1401 = vmatprep.subr.mxu0 0.0
  %1402 = vmatpush1.msra.mxu0 0.0
  %1403 = vmatprep.subr.mxu0 0.0
  %1404 = vmatpush1.msra.mxu0 0.0
  %1405 = vmatprep.subr.mxu0 0.0
  %1406 = vmatpush1.msra.mxu0 0.0
  %1407 = vmatprep.subr.mxu0 0.0
  %1408 = vmatpush1.msra.mxu0 0.0
  %1409 = vmatprep.subr.mxu0 0.0
  %1410 = vmatpush1.msra.mxu0 0.0
  %1411 = vmatprep.subr.mxu0 0.0
  %1412 = vmatpush1.msra.mxu0 0.0
  %1413 = vmatprep.subr.mxu0 0.0
  %1414 = vmatpush1.msra.mxu0 0.0
  %1415 = vmatprep.subr.mxu0 0.0
  %1416 = vmatpush1.msra.mxu0 0.0
  %1417 = vmatprep.subr.mxu0 0.0
  %1418 = vmatpush1.msra.mxu0 0.0
  %1419 = vmatprep.subr.mxu0 0.0
  %1420 = vmatpush1.msra.mxu0 0.0
  %1421 = vmatprep.mubr.f32.mxu0 0.0
  %1422 = vmatmul.mubr.f32.gmra.mrb[0].mxu0 %v260
  %v1423 = vpop.f32.mrb[0].mxu0
  %v1424 = vadd.f32 0.0, %v1423
  %v1425 = vpop.f32.mrb[0].mxu0
  %1426 = vdwg.mxu0
  %v1427 = vadd.f32 %v1314, %v1424
  %v1428 = vxor.u32 %v1427, 2147483648
  %v1429 = vmul.f32 %v1428, 1.442695
  %v1430 = vpow.pop %v1429
  %v1431 = vadd.f32 %v1430, 1.0
  %v1432 = vrcp.pop %v1431
  %v1433 = vmul.f32 1.0, %v1432
  %v1435 = vlaneseq
  %v1436 = vshrl.u32 %v1435, 7
  %v1437 = vsub.s32 0, %v1436
  %v1438 = vrot.slane %v1356, %v1437
  %1439 = vrot.lane.b32.xlu0 %v1438, 64
  %v1440 = vpop.permute.xlu0 %1439
  %v1442 = vadd.f32 %v1424, %v1440
  %1444 = vrot.lane.b32.xlu0 %v1442, 64
  %v1445 = vpop.permute.xlu0 %1444
  %v1447 = vmul.f32 %v1433, %v1445
  %1449 = vrot.lane.b32.xlu0 %v1447, 64
  %v1450 = vpop.permute.xlu0 %1449
  %v1452 = vadd.f32 %v1314, %v1450
  %v1453 = vtanh.pop %v1452
  %v1454 = vsub.f32 1.0, %v1433
  %1456 = vrot.lane.b32.xlu0 %v1453, 96
  %v1457 = vpop.permute.xlu0 %1456
  %v1459 = vmul.f32 %v1454, %v1457
  %v1460 = vmul.f32 %v1433, 0.0
  %v1461 = vadd.f32 %v1459, %v1460
  %v1462 = vmul.f32 %v370, %v1461
  %v1463 = vadd.f32 %v1462, %v378
  %1465 = vrot.lane.b32.xlu0 %v1463, 96
  %v1466 = vpop.permute.xlu0 %1465
  %v1467 = vsel %vm258, %v1466, 0
  %1469 = vmatprep.subr.mxu0 0.0
  %1470 = vmatpush1.msra.mxu0 %v1352
  %1471 = vmatprep.subr.mxu0 0.0
  %1472 = vmatpush1.msra.mxu0 %v1353
  %1473 = vmatprep.subr.mxu0 0.0
  %1474 = vmatpush1.msra.mxu0 %v1354
  %1475 = vmatprep.subr.mxu0 0.0
  %1476 = vmatpush1.msra.mxu0 %v1355
  %1477 = vmatprep.subr.mxu0 0.0
  %1478 = vmatpush1.msra.mxu0 0.0
  %1479 = vmatprep.subr.mxu0 0.0
  %1480 = vmatpush1.msra.mxu0 0.0
  %1481 = vmatprep.subr.mxu0 0.0
  %1482 = vmatpush1.msra.mxu0 0.0
  %1483 = vmatprep.subr.mxu0 0.0
  %1484 = vmatpush1.msra.mxu0 0.0
  %1485 = vmatprep.subr.mxu0 0.0
  %1486 = vmatpush1.msra.mxu0 0.0
  %1487 = vmatprep.subr.mxu0 0.0
  %1488 = vmatpush1.msra.mxu0 0.0
  %1489 = vmatprep.subr.mxu0 0.0
  %1490 = vmatpush1.msra.mxu0 0.0
  %1491 = vmatprep.subr.mxu0 0.0
  %1492 = vmatpush1.msra.mxu0 0.0
  %1493 = vmatprep.subr.mxu0 0.0
  %1494 = vmatpush1.msra.mxu0 0.0
  %1495 = vmatprep.subr.mxu0 0.0
  %1496 = vmatpush1.msra.mxu0 0.0
  %1497 = vmatprep.subr.mxu0 0.0
  %1498 = vmatpush1.msra.mxu0 0.0
  %1499 = vmatprep.subr.mxu0 0.0
  %1500 = vmatpush1.msra.mxu0 0.0
  %1501 = vmatprep.subr.mxu0 0.0
  %1502 = vmatpush1.msra.mxu0 0.0
  %1503 = vmatprep.subr.mxu0 0.0
  %1504 = vmatpush1.msra.mxu0 0.0
  %1505 = vmatprep.subr.mxu0 0.0
  %1506 = vmatpush1.msra.mxu0 0.0
  %1507 = vmatprep.subr.mxu0 0.0
  %1508 = vmatpush1.msra.mxu0 0.0
  %1509 = vmatprep.subr.mxu0 0.0
  %1510 = vmatpush1.msra.mxu0 0.0
  %1511 = vmatprep.subr.mxu0 0.0
  %1512 = vmatpush1.msra.mxu0 0.0
  %1513 = vmatprep.subr.mxu0 0.0
  %1514 = vmatpush1.msra.mxu0 0.0
  %1515 = vmatprep.subr.mxu0 0.0
  %1516 = vmatpush1.msra.mxu0 0.0
  %1517 = vmatprep.subr.mxu0 0.0
  %1518 = vmatpush1.msra.mxu0 0.0
  %1519 = vmatprep.subr.mxu0 0.0
  %1520 = vmatpush1.msra.mxu0 0.0
  %1521 = vmatprep.subr.mxu0 0.0
  %1522 = vmatpush1.msra.mxu0 0.0
  %1523 = vmatprep.subr.mxu0 0.0
  %1524 = vmatpush1.msra.mxu0 0.0
  %1525 = vmatprep.subr.mxu0 0.0
  %1526 = vmatpush1.msra.mxu0 0.0
  %1527 = vmatprep.subr.mxu0 0.0
  %1528 = vmatpush1.msra.mxu0 0.0
  %1529 = vmatprep.subr.mxu0 0.0
  %1530 = vmatpush1.msra.mxu0 0.0
  %1531 = vmatprep.subr.mxu0 0.0
  %1532 = vmatpush1.msra.mxu0 0.0
  %1533 = vmatprep.mubr.f32.mxu0 0.0
  %1534 = vmatmul.mubr.f32.gmra.mrb[0].mxu0 %v1467
  %v1535 = vpop.f32.mrb[0].mxu0
  %v1536 = vadd.f32 0.0, %v1535
  %v1537 = vpop.f32.mrb[0].mxu0
  %1538 = vdwg.mxu0
  %v1539 = vadd.f32 %v1319, %v1536
  %v1540 = vxor.u32 %v1539, 2147483648
  %v1541 = vmul.f32 %v1540, 1.442695
  %v1542 = vpow.pop %v1541
  %v1543 = vadd.f32 %v1542, 1.0
  %v1544 = vrcp.pop %v1543
  %v1545 = vmul.f32 1.0, %v1544
  %v1546 = vadd.f32 %v1536, %v1440
  %1548 = vrot.lane.b32.xlu0 %v1546, 64
  %v1549 = vpop.permute.xlu0 %1548
  %v1551 = vmul.f32 %v1545, %v1549
  %1553 = vrot.lane.b32.xlu0 %v1551, 64
  %v1554 = vpop.permute.xlu0 %1553
  %v1556 = vadd.f32 %v1319, %v1554
  %v1557 = vtanh.pop %v1556
  %v1558 = vsub.f32 1.0, %v1545
  %1560 = vrot.lane.b32.xlu0 %v1557, 96
  %v1561 = vpop.permute.xlu0 %1560
  %v1563 = vmul.f32 %v1558, %v1561
  %v1564 = vmul.f32 %v1545, %v1463
  %v1565 = vadd.f32 %v1563, %v1564
  %v1566 = vmul.f32 %v487, %v1565
  %v1567 = vmul.f32 %v493, %v1463
  %v1568 = vadd.f32 %v1566, %v1567
  %1570 = vrot.lane.b32.xlu0 %v1568, 96
  %v1571 = vpop.permute.xlu0 %1570
  %v1572 = vsel %vm258, %v1571, 0
  %1574 = vmatprep.subr.mxu0 0.0
  %1575 = vmatpush1.msra.mxu0 %v1352
  %1576 = vmatprep.subr.mxu0 0.0
  %1577 = vmatpush1.msra.mxu0 %v1353
  %1578 = vmatprep.subr.mxu0 0.0
  %1579 = vmatpush1.msra.mxu0 %v1354
  %1580 = vmatprep.subr.mxu0 0.0
  %1581 = vmatpush1.msra.mxu0 %v1355
  %1582 = vmatprep.subr.mxu0 0.0
  %1583 = vmatpush1.msra.mxu0 0.0
  %1584 = vmatprep.subr.mxu0 0.0
  %1585 = vmatpush1.msra.mxu0 0.0
  %1586 = vmatprep.subr.mxu0 0.0
  %1587 = vmatpush1.msra.mxu0 0.0
  %1588 = vmatprep.subr.mxu0 0.0
  %1589 = vmatpush1.msra.mxu0 0.0
  %1590 = vmatprep.subr.mxu0 0.0
  %1591 = vmatpush1.msra.mxu0 0.0
  %1592 = vmatprep.subr.mxu0 0.0
  %1593 = vmatpush1.msra.mxu0 0.0
  %1594 = vmatprep.subr.mxu0 0.0
  %1595 = vmatpush1.msra.mxu0 0.0
  %1596 = vmatprep.subr.mxu0 0.0
  %1597 = vmatpush1.msra.mxu0 0.0
  %1598 = vmatprep.subr.mxu0 0.0
  %1599 = vmatpush1.msra.mxu0 0.0
  %1600 = vmatprep.subr.mxu0 0.0
  %1601 = vmatpush1.msra.mxu0 0.0
  %1602 = vmatprep.subr.mxu0 0.0
  %1603 = vmatpush1.msra.mxu0 0.0
  %1604 = vmatprep.subr.mxu0 0.0
  %1605 = vmatpush1.msra.mxu0 0.0
  %1606 = vmatprep.subr.mxu0 0.0
  %1607 = vmatpush1.msra.mxu0 0.0
  %1608 = vmatprep.subr.mxu0 0.0
  %1609 = vmatpush1.msra.mxu0 0.0
  %1610 = vmatprep.subr.mxu0 0.0
  %1611 = vmatpush1.msra.mxu0 0.0
  %1612 = vmatprep.subr.mxu0 0.0
  %1613 = vmatpush1.msra.mxu0 0.0
  %1614 = vmatprep.subr.mxu0 0.0
  %1615 = vmatpush1.msra.mxu0 0.0
  %1616 = vmatprep.subr.mxu0 0.0
  %1617 = vmatpush1.msra.mxu0 0.0
  %1618 = vmatprep.subr.mxu0 0.0
  %1619 = vmatpush1.msra.mxu0 0.0
  %1620 = vmatprep.subr.mxu0 0.0
  %1621 = vmatpush1.msra.mxu0 0.0
  %1622 = vmatprep.subr.mxu0 0.0
  %1623 = vmatpush1.msra.mxu0 0.0
  %1624 = vmatprep.subr.mxu0 0.0
  %1625 = vmatpush1.msra.mxu0 0.0
  %1626 = vmatprep.subr.mxu0 0.0
  %1627 = vmatpush1.msra.mxu0 0.0
  %1628 = vmatprep.subr.mxu0 0.0
  %1629 = vmatpush1.msra.mxu0 0.0
  %1630 = vmatprep.subr.mxu0 0.0
  %1631 = vmatpush1.msra.mxu0 0.0
  %1632 = vmatprep.subr.mxu0 0.0
  %1633 = vmatpush1.msra.mxu0 0.0
  %1634 = vmatprep.subr.mxu0 0.0
  %1635 = vmatpush1.msra.mxu0 0.0
  %1636 = vmatprep.subr.mxu0 0.0
  %1637 = vmatpush1.msra.mxu0 0.0
  %1638 = vmatprep.mubr.f32.mxu0 0.0
  %1639 = vmatmul.mubr.f32.gmra.mrb[0].mxu0 %v1572
  %v1640 = vpop.f32.mrb[0].mxu0
  %v1641 = vadd.f32 0.0, %v1640
  %v1642 = vpop.f32.mrb[0].mxu0
  %1643 = vdwg.mxu0
  %v1644 = vadd.f32 %v1324, %v1641
  %v1645 = vxor.u32 %v1644, 2147483648
  %v1646 = vmul.f32 %v1645, 1.442695
  %v1647 = vpow.pop %v1646
  %v1648 = vadd.f32 %v1647, 1.0
  %v1649 = vrcp.pop %v1648
  %v1650 = vmul.f32 1.0, %v1649
  %v1651 = vadd.f32 %v1641, %v1440
  %1653 = vrot.lane.b32.xlu0 %v1651, 64
  %v1654 = vpop.permute.xlu0 %1653
  %v1656 = vmul.f32 %v1650, %v1654
  %1658 = vrot.lane.b32.xlu0 %v1656, 64
  %v1659 = vpop.permute.xlu0 %1658
  %v1661 = vadd.f32 %v1324, %v1659
  %v1662 = vtanh.pop %v1661
  %v1663 = vsub.f32 1.0, %v1650
  %1665 = vrot.lane.b32.xlu0 %v1662, 96
  %v1666 = vpop.permute.xlu0 %1665
  %v1668 = vmul.f32 %v1663, %v1666
  %v1669 = vmul.f32 %v1650, %v1568
  %v1670 = vadd.f32 %v1668, %v1669
  %v1671 = vmul.f32 %v604, %v1670
  %v1672 = vmul.f32 %v610, %v1568
  %v1673 = vadd.f32 %v1671, %v1672
  %1675 = vrot.lane.b32.xlu0 %v1673, 96
  %v1676 = vpop.permute.xlu0 %1675
  %v1677 = vsel %vm258, %v1676, 0
  %1679 = vmatprep.subr.mxu0 0.0
  %1680 = vmatpush1.msra.mxu0 %v1352
  %1681 = vmatprep.subr.mxu0 0.0
  %1682 = vmatpush1.msra.mxu0 %v1353
  %1683 = vmatprep.subr.mxu0 0.0
  %1684 = vmatpush1.msra.mxu0 %v1354
  %1685 = vmatprep.subr.mxu0 0.0
  %1686 = vmatpush1.msra.mxu0 %v1355
  %1687 = vmatprep.subr.mxu0 0.0
  %1688 = vmatpush1.msra.mxu0 0.0
  %1689 = vmatprep.subr.mxu0 0.0
  %1690 = vmatpush1.msra.mxu0 0.0
  %1691 = vmatprep.subr.mxu0 0.0
  %1692 = vmatpush1.msra.mxu0 0.0
  %1693 = vmatprep.subr.mxu0 0.0
  %1694 = vmatpush1.msra.mxu0 0.0
  %1695 = vmatprep.subr.mxu0 0.0
  %1696 = vmatpush1.msra.mxu0 0.0
  %1697 = vmatprep.subr.mxu0 0.0
  %1698 = vmatpush1.msra.mxu0 0.0
  %1699 = vmatprep.subr.mxu0 0.0
  %1700 = vmatpush1.msra.mxu0 0.0
  %1701 = vmatprep.subr.mxu0 0.0
  %1702 = vmatpush1.msra.mxu0 0.0
  %1703 = vmatprep.subr.mxu0 0.0
  %1704 = vmatpush1.msra.mxu0 0.0
  %1705 = vmatprep.subr.mxu0 0.0
  %1706 = vmatpush1.msra.mxu0 0.0
  %1707 = vmatprep.subr.mxu0 0.0
  %1708 = vmatpush1.msra.mxu0 0.0
  %1709 = vmatprep.subr.mxu0 0.0
  %1710 = vmatpush1.msra.mxu0 0.0
  %1711 = vmatprep.subr.mxu0 0.0
  %1712 = vmatpush1.msra.mxu0 0.0
  %1713 = vmatprep.subr.mxu0 0.0
  %1714 = vmatpush1.msra.mxu0 0.0
  %1715 = vmatprep.subr.mxu0 0.0
  %1716 = vmatpush1.msra.mxu0 0.0
  %1717 = vmatprep.subr.mxu0 0.0
  %1718 = vmatpush1.msra.mxu0 0.0
  %1719 = vmatprep.subr.mxu0 0.0
  %1720 = vmatpush1.msra.mxu0 0.0
  %1721 = vmatprep.subr.mxu0 0.0
  %1722 = vmatpush1.msra.mxu0 0.0
  %1723 = vmatprep.subr.mxu0 0.0
  %1724 = vmatpush1.msra.mxu0 0.0
  %1725 = vmatprep.subr.mxu0 0.0
  %1726 = vmatpush1.msra.mxu0 0.0
  %1727 = vmatprep.subr.mxu0 0.0
  %1728 = vmatpush1.msra.mxu0 0.0
  %1729 = vmatprep.subr.mxu0 0.0
  %1730 = vmatpush1.msra.mxu0 0.0
  %1731 = vmatprep.subr.mxu0 0.0
  %1732 = vmatpush1.msra.mxu0 0.0
  %1733 = vmatprep.subr.mxu0 0.0
  %1734 = vmatpush1.msra.mxu0 0.0
  %1735 = vmatprep.subr.mxu0 0.0
  %1736 = vmatpush1.msra.mxu0 0.0
  %1737 = vmatprep.subr.mxu0 0.0
  %1738 = vmatpush1.msra.mxu0 0.0
  %1739 = vmatprep.subr.mxu0 0.0
  %1740 = vmatpush1.msra.mxu0 0.0
  %1741 = vmatprep.subr.mxu0 0.0
  %1742 = vmatpush1.msra.mxu0 0.0
  %1743 = vmatprep.mubr.f32.mxu0 0.0
  %1744 = vmatmul.mubr.f32.gmra.mrb[0].mxu0 %v1677
  %v1745 = vpop.f32.mrb[0].mxu0
  %v1746 = vadd.f32 0.0, %v1745
  %v1747 = vpop.f32.mrb[0].mxu0
  %1748 = vdwg.mxu0
  %v1749 = vadd.f32 %v1329, %v1746
  %v1750 = vxor.u32 %v1749, 2147483648
  %v1751 = vmul.f32 %v1750, 1.442695
  %v1752 = vpow.pop %v1751
  %v1753 = vadd.f32 %v1752, 1.0
  %v1754 = vrcp.pop %v1753
  %v1755 = vmul.f32 1.0, %v1754
  %v1756 = vadd.f32 %v1746, %v1440
  %1758 = vrot.lane.b32.xlu0 %v1756, 64
  %v1759 = vpop.permute.xlu0 %1758
  %v1761 = vmul.f32 %v1755, %v1759
  %1763 = vrot.lane.b32.xlu0 %v1761, 64
  %v1764 = vpop.permute.xlu0 %1763
  %v1766 = vadd.f32 %v1329, %v1764
  %v1767 = vtanh.pop %v1766
  %v1768 = vsub.f32 1.0, %v1755
  %1770 = vrot.lane.b32.xlu0 %v1767, 96
  %v1771 = vpop.permute.xlu0 %1770
  %v1773 = vmul.f32 %v1768, %v1771
  %v1774 = vmul.f32 %v1755, %v1673
  %v1775 = vadd.f32 %v1773, %v1774
  %v1776 = vmul.f32 %v721, %v1775
  %v1777 = vmul.f32 %v727, %v1673
  %v1778 = vadd.f32 %v1776, %v1777
  %1780 = vrot.lane.b32.xlu0 %v1778, 96
  %v1781 = vpop.permute.xlu0 %1780
  %v1782 = vsel %vm258, %v1781, 0
  %1784 = vmatprep.subr.mxu0 0.0
  %1785 = vmatpush1.msra.mxu0 %v1352
  %1786 = vmatprep.subr.mxu0 0.0
  %1787 = vmatpush1.msra.mxu0 %v1353
  %1788 = vmatprep.subr.mxu0 0.0
  %1789 = vmatpush1.msra.mxu0 %v1354
  %1790 = vmatprep.subr.mxu0 0.0
  %1791 = vmatpush1.msra.mxu0 %v1355
  %1792 = vmatprep.subr.mxu0 0.0
  %1793 = vmatpush1.msra.mxu0 0.0
  %1794 = vmatprep.subr.mxu0 0.0
  %1795 = vmatpush1.msra.mxu0 0.0
  %1796 = vmatprep.subr.mxu0 0.0
  %1797 = vmatpush1.msra.mxu0 0.0
  %1798 = vmatprep.subr.mxu0 0.0
  %1799 = vmatpush1.msra.mxu0 0.0
  %1800 = vmatprep.subr.mxu0 0.0
  %1801 = vmatpush1.msra.mxu0 0.0
  %1802 = vmatprep.subr.mxu0 0.0
  %1803 = vmatpush1.msra.mxu0 0.0
  %1804 = vmatprep.subr.mxu0 0.0
  %1805 = vmatpush1.msra.mxu0 0.0
  %1806 = vmatprep.subr.mxu0 0.0
  %1807 = vmatpush1.msra.mxu0 0.0
  %1808 = vmatprep.subr.mxu0 0.0
  %1809 = vmatpush1.msra.mxu0 0.0
  %1810 = vmatprep.subr.mxu0 0.0
  %1811 = vmatpush1.msra.mxu0 0.0
  %1812 = vmatprep.subr.mxu0 0.0
  %1813 = vmatpush1.msra.mxu0 0.0
  %1814 = vmatprep.subr.mxu0 0.0
  %1815 = vmatpush1.msra.mxu0 0.0
  %1816 = vmatprep.subr.mxu0 0.0
  %1817 = vmatpush1.msra.mxu0 0.0
  %1818 = vmatprep.subr.mxu0 0.0
  %1819 = vmatpush1.msra.mxu0 0.0
  %1820 = vmatprep.subr.mxu0 0.0
  %1821 = vmatpush1.msra.mxu0 0.0
  %1822 = vmatprep.subr.mxu0 0.0
  %1823 = vmatpush1.msra.mxu0 0.0
  %1824 = vmatprep.subr.mxu0 0.0
  %1825 = vmatpush1.msra.mxu0 0.0
  %1826 = vmatprep.subr.mxu0 0.0
  %1827 = vmatpush1.msra.mxu0 0.0
  %1828 = vmatprep.subr.mxu0 0.0
  %1829 = vmatpush1.msra.mxu0 0.0
  %1830 = vmatprep.subr.mxu0 0.0
  %1831 = vmatpush1.msra.mxu0 0.0
  %1832 = vmatprep.subr.mxu0 0.0
  %1833 = vmatpush1.msra.mxu0 0.0
  %1834 = vmatprep.subr.mxu0 0.0
  %1835 = vmatpush1.msra.mxu0 0.0
  %1836 = vmatprep.subr.mxu0 0.0
  %1837 = vmatpush1.msra.mxu0 0.0
  %1838 = vmatprep.subr.mxu0 0.0
  %1839 = vmatpush1.msra.mxu0 0.0
  %1840 = vmatprep.subr.mxu0 0.0
  %1841 = vmatpush1.msra.mxu0 0.0
  %1842 = vmatprep.subr.mxu0 0.0
  %1843 = vmatpush1.msra.mxu0 0.0
  %1844 = vmatprep.subr.mxu0 0.0
  %1845 = vmatpush1.msra.mxu0 0.0
  %1846 = vmatprep.subr.mxu0 0.0
  %1847 = vmatpush1.msra.mxu0 0.0
  %1848 = vmatprep.mubr.f32.mxu0 0.0
  %1849 = vmatmul.mubr.f32.gmra.mrb[0].mxu0 %v1782
  %v1850 = vpop.f32.mrb[0].mxu0
  %v1851 = vadd.f32 0.0, %v1850
  %v1852 = vpop.f32.mrb[0].mxu0
  %1853 = vdwg.mxu0
  %v1854 = vadd.f32 %v1334, %v1851
  %v1855 = vxor.u32 %v1854, 2147483648
  %v1856 = vmul.f32 %v1855, 1.442695
  %v1857 = vpow.pop %v1856
  %v1858 = vadd.f32 %v1857, 1.0
  %v1859 = vrcp.pop %v1858
  %v1860 = vmul.f32 1.0, %v1859
  %v1861 = vadd.f32 %v1851, %v1440
  %1863 = vrot.lane.b32.xlu0 %v1861, 64
  %v1864 = vpop.permute.xlu0 %1863
  %v1866 = vmul.f32 %v1860, %v1864
  %1868 = vrot.lane.b32.xlu0 %v1866, 64
  %v1869 = vpop.permute.xlu0 %1868
  %v1871 = vadd.f32 %v1334, %v1869
  %v1872 = vtanh.pop %v1871
  %v1873 = vsub.f32 1.0, %v1860
  %1875 = vrot.lane.b32.xlu0 %v1872, 96
  %v1876 = vpop.permute.xlu0 %1875
  %v1878 = vmul.f32 %v1873, %v1876
  %v1879 = vmul.f32 %v1860, %v1778
  %v1880 = vadd.f32 %v1878, %v1879
  %v1881 = vmul.f32 %v838, %v1880
  %v1882 = vmul.f32 %v844, %v1778
  %v1883 = vadd.f32 %v1881, %v1882
  %1885 = vrot.lane.b32.xlu0 %v1883, 96
  %v1886 = vpop.permute.xlu0 %1885
  %v1887 = vsel %vm258, %v1886, 0
  %1889 = vmatprep.subr.mxu0 0.0
  %1890 = vmatpush1.msra.mxu0 %v1352
  %1891 = vmatprep.subr.mxu0 0.0
  %1892 = vmatpush1.msra.mxu0 %v1353
  %1893 = vmatprep.subr.mxu0 0.0
  %1894 = vmatpush1.msra.mxu0 %v1354
  %1895 = vmatprep.subr.mxu0 0.0
  %1896 = vmatpush1.msra.mxu0 %v1355
  %1897 = vmatprep.subr.mxu0 0.0
  %1898 = vmatpush1.msra.mxu0 0.0
  %1899 = vmatprep.subr.mxu0 0.0
  %1900 = vmatpush1.msra.mxu0 0.0
  %1901 = vmatprep.subr.mxu0 0.0
  %1902 = vmatpush1.msra.mxu0 0.0
  %1903 = vmatprep.subr.mxu0 0.0
  %1904 = vmatpush1.msra.mxu0 0.0
  %1905 = vmatprep.subr.mxu0 0.0
  %1906 = vmatpush1.msra.mxu0 0.0
  %1907 = vmatprep.subr.mxu0 0.0
  %1908 = vmatpush1.msra.mxu0 0.0
  %1909 = vmatprep.subr.mxu0 0.0
  %1910 = vmatpush1.msra.mxu0 0.0
  %1911 = vmatprep.subr.mxu0 0.0
  %1912 = vmatpush1.msra.mxu0 0.0
  %1913 = vmatprep.subr.mxu0 0.0
  %1914 = vmatpush1.msra.mxu0 0.0
  %1915 = vmatprep.subr.mxu0 0.0
  %1916 = vmatpush1.msra.mxu0 0.0
  %1917 = vmatprep.subr.mxu0 0.0
  %1918 = vmatpush1.msra.mxu0 0.0
  %1919 = vmatprep.subr.mxu0 0.0
  %1920 = vmatpush1.msra.mxu0 0.0
  %1921 = vmatprep.subr.mxu0 0.0
  %1922 = vmatpush1.msra.mxu0 0.0
  %1923 = vmatprep.subr.mxu0 0.0
  %1924 = vmatpush1.msra.mxu0 0.0
  %1925 = vmatprep.subr.mxu0 0.0
  %1926 = vmatpush1.msra.mxu0 0.0
  %1927 = vmatprep.subr.mxu0 0.0
  %1928 = vmatpush1.msra.mxu0 0.0
  %1929 = vmatprep.subr.mxu0 0.0
  %1930 = vmatpush1.msra.mxu0 0.0
  %1931 = vmatprep.subr.mxu0 0.0
  %1932 = vmatpush1.msra.mxu0 0.0
  %1933 = vmatprep.subr.mxu0 0.0
  %1934 = vmatpush1.msra.mxu0 0.0
  %1935 = vmatprep.subr.mxu0 0.0
  %1936 = vmatpush1.msra.mxu0 0.0
  %1937 = vmatprep.subr.mxu0 0.0
  %1938 = vmatpush1.msra.mxu0 0.0
  %1939 = vmatprep.subr.mxu0 0.0
  %1940 = vmatpush1.msra.mxu0 0.0
  %1941 = vmatprep.subr.mxu0 0.0
  %1942 = vmatpush1.msra.mxu0 0.0
  %1943 = vmatprep.subr.mxu0 0.0
  %1944 = vmatpush1.msra.mxu0 0.0
  %1945 = vmatprep.subr.mxu0 0.0
  %1946 = vmatpush1.msra.mxu0 0.0
  %1947 = vmatprep.subr.mxu0 0.0
  %1948 = vmatpush1.msra.mxu0 0.0
  %1949 = vmatprep.subr.mxu0 0.0
  %1950 = vmatpush1.msra.mxu0 0.0
  %1951 = vmatprep.subr.mxu0 0.0
  %1952 = vmatpush1.msra.mxu0 0.0
  %1953 = vmatprep.mubr.f32.mxu0 0.0
  %1954 = vmatmul.mubr.f32.gmra.mrb[0].mxu0 %v1887
  %v1955 = vpop.f32.mrb[0].mxu0
  %v1956 = vadd.f32 0.0, %v1955
  %v1957 = vpop.f32.mrb[0].mxu0
  %1958 = vdwg.mxu0
  %v1959 = vadd.f32 %v1339, %v1956
  %v1960 = vxor.u32 %v1959, 2147483648
  %v1961 = vmul.f32 %v1960, 1.442695
  %v1962 = vpow.pop %v1961
  %v1963 = vadd.f32 %v1962, 1.0
  %v1964 = vrcp.pop %v1963
  %v1965 = vmul.f32 1.0, %v1964
  %v1966 = vadd.f32 %v1956, %v1440
  %1968 = vrot.lane.b32.xlu0 %v1966, 64
  %v1969 = vpop.permute.xlu0 %1968
  %v1971 = vmul.f32 %v1965, %v1969
  %1973 = vrot.lane.b32.xlu0 %v1971, 64
  %v1974 = vpop.permute.xlu0 %1973
  %v1976 = vadd.f32 %v1339, %v1974
  %v1977 = vtanh.pop %v1976
  %v1978 = vsub.f32 1.0, %v1965
  %1980 = vrot.lane.b32.xlu0 %v1977, 96
  %v1981 = vpop.permute.xlu0 %1980
  %v1983 = vmul.f32 %v1978, %v1981
  %v1984 = vmul.f32 %v1965, %v1883
  %v1985 = vadd.f32 %v1983, %v1984
  %v1986 = vmul.f32 %v955, %v1985
  %v1987 = vmul.f32 %v961, %v1883
  %v1988 = vadd.f32 %v1986, %v1987
  %1990 = vrot.lane.b32.xlu0 %v1988, 96
  %v1991 = vpop.permute.xlu0 %1990
  %v1992 = vsel %vm258, %v1991, 0
  %1994 = vmatprep.subr.mxu0 0.0
  %1995 = vmatpush1.msra.mxu0 %v1352
  %1996 = vmatprep.subr.mxu0 0.0
  %1997 = vmatpush1.msra.mxu0 %v1353
  %1998 = vmatprep.subr.mxu0 0.0
  %1999 = vmatpush1.msra.mxu0 %v1354
  %2000 = vmatprep.subr.mxu0 0.0
  %2001 = vmatpush1.msra.mxu0 %v1355
  %2002 = vmatprep.subr.mxu0 0.0
  %2003 = vmatpush1.msra.mxu0 0.0
  %2004 = vmatprep.subr.mxu0 0.0
  %2005 = vmatpush1.msra.mxu0 0.0
  %2006 = vmatprep.subr.mxu0 0.0
  %2007 = vmatpush1.msra.mxu0 0.0
  %2008 = vmatprep.subr.mxu0 0.0
  %2009 = vmatpush1.msra.mxu0 0.0
  %2010 = vmatprep.subr.mxu0 0.0
  %2011 = vmatpush1.msra.mxu0 0.0
  %2012 = vmatprep.subr.mxu0 0.0
  %2013 = vmatpush1.msra.mxu0 0.0
  %2014 = vmatprep.subr.mxu0 0.0
  %2015 = vmatpush1.msra.mxu0 0.0
  %2016 = vmatprep.subr.mxu0 0.0
  %2017 = vmatpush1.msra.mxu0 0.0
  %2018 = vmatprep.subr.mxu0 0.0
  %2019 = vmatpush1.msra.mxu0 0.0
  %2020 = vmatprep.subr.mxu0 0.0
  %2021 = vmatpush1.msra.mxu0 0.0
  %2022 = vmatprep.subr.mxu0 0.0
  %2023 = vmatpush1.msra.mxu0 0.0
  %2024 = vmatprep.subr.mxu0 0.0
  %2025 = vmatpush1.msra.mxu0 0.0
  %2026 = vmatprep.subr.mxu0 0.0
  %2027 = vmatpush1.msra.mxu0 0.0
  %2028 = vmatprep.subr.mxu0 0.0
  %2029 = vmatpush1.msra.mxu0 0.0
  %2030 = vmatprep.subr.mxu0 0.0
  %2031 = vmatpush1.msra.mxu0 0.0
  %2032 = vmatprep.subr.mxu0 0.0
  %2033 = vmatpush1.msra.mxu0 0.0
  %2034 = vmatprep.subr.mxu0 0.0
  %2035 = vmatpush1.msra.mxu0 0.0
  %2036 = vmatprep.subr.mxu0 0.0
  %2037 = vmatpush1.msra.mxu0 0.0
  %2038 = vmatprep.subr.mxu0 0.0
  %2039 = vmatpush1.msra.mxu0 0.0
  %2040 = vmatprep.subr.mxu0 0.0
  %2041 = vmatpush1.msra.mxu0 0.0
  %2042 = vmatprep.subr.mxu0 0.0
  %2043 = vmatpush1.msra.mxu0 0.0
  %2044 = vmatprep.subr.mxu0 0.0
  %2045 = vmatpush1.msra.mxu0 0.0
  %2046 = vmatprep.subr.mxu0 0.0
  %2047 = vmatpush1.msra.mxu0 0.0
  %2048 = vmatprep.subr.mxu0 0.0
  %2049 = vmatpush1.msra.mxu0 0.0
  %2050 = vmatprep.subr.mxu0 0.0
  %2051 = vmatpush1.msra.mxu0 0.0
  %2052 = vmatprep.subr.mxu0 0.0
  %2053 = vmatpush1.msra.mxu0 0.0
  %2054 = vmatprep.subr.mxu0 0.0
  %2055 = vmatpush1.msra.mxu0 0.0
  %2056 = vmatprep.subr.mxu0 0.0
  %2057 = vmatpush1.msra.mxu0 0.0
  %2058 = vmatprep.mubr.f32.mxu0 0.0
  %2059 = vmatmul.mubr.f32.gmra.mrb[0].mxu0 %v1992
  %v2060 = vpop.f32.mrb[0].mxu0
  %v2061 = vadd.f32 0.0, %v2060
  %v2062 = vpop.f32.mrb[0].mxu0
  %2063 = vdwg.mxu0
  %v2064 = vadd.f32 %v1344, %v2061
  %v2065 = vxor.u32 %v2064, 2147483648
  %v2066 = vmul.f32 %v2065, 1.442695
  %v2067 = vpow.pop %v2066
  %v2068 = vadd.f32 %v2067, 1.0
  %v2069 = vrcp.pop %v2068
  %v2070 = vmul.f32 1.0, %v2069
  %v2071 = vadd.f32 %v2061, %v1440
  %2073 = vrot.lane.b32.xlu0 %v2071, 64
  %v2074 = vpop.permute.xlu0 %2073
  %v2076 = vmul.f32 %v2070, %v2074
  %2078 = vrot.lane.b32.xlu0 %v2076, 64
  %v2079 = vpop.permute.xlu0 %2078
  %v2081 = vadd.f32 %v1344, %v2079
  %v2082 = vtanh.pop %v2081
  %v2083 = vsub.f32 1.0, %v2070
  %2085 = vrot.lane.b32.xlu0 %v2082, 96
  %v2086 = vpop.permute.xlu0 %2085
  %v2088 = vmul.f32 %v2083, %v2086
  %v2089 = vmul.f32 %v2070, %v1988
  %v2090 = vadd.f32 %v2088, %v2089
  %v2091 = vmul.f32 %v1072, %v2090
  %v2092 = vmul.f32 %v1078, %v1988
  %v2093 = vadd.f32 %v2091, %v2092
  %2095 = vrot.lane.b32.xlu0 %v2093, 96
  %v2096 = vpop.permute.xlu0 %2095
  %v2097 = vsel %vm258, %v2096, 0
  %2099 = vmatprep.subr.mxu0 0.0
  %2100 = vmatpush1.msra.mxu0 %v1352
  %2101 = vmatprep.subr.mxu0 0.0
  %2102 = vmatpush1.msra.mxu0 %v1353
  %2103 = vmatprep.subr.mxu0 0.0
  %2104 = vmatpush1.msra.mxu0 %v1354
  %2105 = vmatprep.subr.mxu0 0.0
  %2106 = vmatpush1.msra.mxu0 %v1355
  %2107 = vmatprep.subr.mxu0 0.0
  %2108 = vmatpush1.msra.mxu0 0.0
  %2109 = vmatprep.subr.mxu0 0.0
  %2110 = vmatpush1.msra.mxu0 0.0
  %2111 = vmatprep.subr.mxu0 0.0
  %2112 = vmatpush1.msra.mxu0 0.0
  %2113 = vmatprep.subr.mxu0 0.0
  %2114 = vmatpush1.msra.mxu0 0.0
  %2115 = vmatprep.subr.mxu0 0.0
  %2116 = vmatpush1.msra.mxu0 0.0
  %2117 = vmatprep.subr.mxu0 0.0
  %2118 = vmatpush1.msra.mxu0 0.0
  %2119 = vmatprep.subr.mxu0 0.0
  %2120 = vmatpush1.msra.mxu0 0.0
  %2121 = vmatprep.subr.mxu0 0.0
  %2122 = vmatpush1.msra.mxu0 0.0
  %2123 = vmatprep.subr.mxu0 0.0
  %2124 = vmatpush1.msra.mxu0 0.0
  %2125 = vmatprep.subr.mxu0 0.0
  %2126 = vmatpush1.msra.mxu0 0.0
  %2127 = vmatprep.subr.mxu0 0.0
  %2128 = vmatpush1.msra.mxu0 0.0
  %2129 = vmatprep.subr.mxu0 0.0
  %2130 = vmatpush1.msra.mxu0 0.0
  %2131 = vmatprep.subr.mxu0 0.0
  %2132 = vmatpush1.msra.mxu0 0.0
  %2133 = vmatprep.subr.mxu0 0.0
  %2134 = vmatpush1.msra.mxu0 0.0
  %2135 = vmatprep.subr.mxu0 0.0
  %2136 = vmatpush1.msra.mxu0 0.0
  %2137 = vmatprep.subr.mxu0 0.0
  %2138 = vmatpush1.msra.mxu0 0.0
  %2139 = vmatprep.subr.mxu0 0.0
  %2140 = vmatpush1.msra.mxu0 0.0
  %2141 = vmatprep.subr.mxu0 0.0
  %2142 = vmatpush1.msra.mxu0 0.0
  %2143 = vmatprep.subr.mxu0 0.0
  %2144 = vmatpush1.msra.mxu0 0.0
  %2145 = vmatprep.subr.mxu0 0.0
  %2146 = vmatpush1.msra.mxu0 0.0
  %2147 = vmatprep.subr.mxu0 0.0
  %2148 = vmatpush1.msra.mxu0 0.0
  %2149 = vmatprep.subr.mxu0 0.0
  %2150 = vmatpush1.msra.mxu0 0.0
  %2151 = vmatprep.subr.mxu0 0.0
  %2152 = vmatpush1.msra.mxu0 0.0
  %2153 = vmatprep.subr.mxu0 0.0
  %2154 = vmatpush1.msra.mxu0 0.0
  %2155 = vmatprep.subr.mxu0 0.0
  %2156 = vmatpush1.msra.mxu0 0.0
  %2157 = vmatprep.subr.mxu0 0.0
  %2158 = vmatpush1.msra.mxu0 0.0
  %2159 = vmatprep.subr.mxu0 0.0
  %2160 = vmatpush1.msra.mxu0 0.0
  %2161 = vmatprep.subr.mxu0 0.0
  %2162 = vmatpush1.msra.mxu0 0.0
  %2163 = vmatprep.mubr.f32.mxu0 0.0
  %2164 = vmatmul.mubr.f32.gmra.mrb[0].mxu0 %v2097
  %v2165 = vpop.f32.mrb[0].mxu0
  %v2166 = vadd.f32 0.0, %v2165
  %v2167 = vpop.f32.mrb[0].mxu0
  %2168 = vdwg.mxu0
  %v2169 = vadd.f32 %v1349, %v2166
  %v2170 = vxor.u32 %v2169, 2147483648
  %v2171 = vmul.f32 %v2170, 1.442695
  %v2172 = vpow.pop %v2171
  %v2173 = vadd.f32 %v2172, 1.0
  %v2174 = vrcp.pop %v2173
  %v2175 = vmul.f32 1.0, %v2174
  %v2176 = vadd.f32 %v2166, %v1440
  %2178 = vrot.lane.b32.xlu0 %v2176, 64
  %v2179 = vpop.permute.xlu0 %2178
  %v2181 = vmul.f32 %v2175, %v2179
  %2183 = vrot.lane.b32.xlu0 %v2181, 64
  %v2184 = vpop.permute.xlu0 %2183
  %v2186 = vadd.f32 %v1349, %v2184
  %v2187 = vtanh.pop %v2186
  %v2188 = vsub.f32 1.0, %v2175
  %2190 = vrot.lane.b32.xlu0 %v2187, 96
  %v2191 = vpop.permute.xlu0 %2190
  %v2193 = vmul.f32 %v2188, %v2191
  %v2194 = vmul.f32 %v2175, %v2093
  %v2195 = vadd.f32 %v2193, %v2194
  %v2196 = vmul.f32 %v1189, %v2195
  %v2197 = vmul.f32 %v1195, %v2093
  %v2198 = vadd.f32 %v2196, %v2197
  %v2199 = vld [vmem:[%s9] sm:$0xff]
  %v2200 = vld [vmem:[%s9 + $0x8] sm:$0xff]
  %v2201 = vld [vmem:[%s9 + $0x10] sm:$0xff]
  %v2202 = vld [vmem:[%s9 + $0x18] sm:$0xff]
  %v2203 = vld [vmem:[%s10] sm:$0x1]
  %v2205 = vlaneseq
  %v2206 = vshrl.u32 %v2205, 7
  %v2207 = vsub.s32 0, %v2206
  %v2208 = vrot.slane %v2203, %v2207
  %2211 = vrot.lane.b32.xlu0 %v2198, 96
  %v2212 = vpop.permute.xlu0 %2211
  %v2213 = vsel %vm258, %v2212, 0
  %2215 = vmatprep.subr.mxu0 0.0
  %2216 = vmatpush1.msra.mxu0 %v2199
  %2217 = vmatprep.subr.mxu0 0.0
  %2218 = vmatpush1.msra.mxu0 %v2200
  %2219 = vmatprep.subr.mxu0 0.0
  %2220 = vmatpush1.msra.mxu0 %v2201
  %2221 = vmatprep.subr.mxu0 0.0
  %2222 = vmatpush1.msra.mxu0 %v2202
  %2223 = vmatprep.subr.mxu0 0.0
  %2224 = vmatpush1.msra.mxu0 0.0
  %2225 = vmatprep.subr.mxu0 0.0
  %2226 = vmatpush1.msra.mxu0 0.0
  %2227 = vmatprep.subr.mxu0 0.0
  %2228 = vmatpush1.msra.mxu0 0.0
  %2229 = vmatprep.subr.mxu0 0.0
  %2230 = vmatpush1.msra.mxu0 0.0
  %2231 = vmatprep.subr.mxu0 0.0
  %2232 = vmatpush1.msra.mxu0 0.0
  %2233 = vmatprep.subr.mxu0 0.0
  %2234 = vmatpush1.msra.mxu0 0.0
  %2235 = vmatprep.subr.mxu0 0.0
  %2236 = vmatpush1.msra.mxu0 0.0
  %2237 = vmatprep.subr.mxu0 0.0
  %2238 = vmatpush1.msra.mxu0 0.0
  %2239 = vmatprep.subr.mxu0 0.0
  %2240 = vmatpush1.msra.mxu0 0.0
  %2241 = vmatprep.subr.mxu0 0.0
  %2242 = vmatpush1.msra.mxu0 0.0
  %2243 = vmatprep.subr.mxu0 0.0
  %2244 = vmatpush1.msra.mxu0 0.0
  %2245 = vmatprep.subr.mxu0 0.0
  %2246 = vmatpush1.msra.mxu0 0.0
  %2247 = vmatprep.subr.mxu0 0.0
  %2248 = vmatpush1.msra.mxu0 0.0
  %2249 = vmatprep.subr.mxu0 0.0
  %2250 = vmatpush1.msra.mxu0 0.0
  %2251 = vmatprep.subr.mxu0 0.0
  %2252 = vmatpush1.msra.mxu0 0.0
  %2253 = vmatprep.subr.mxu0 0.0
  %2254 = vmatpush1.msra.mxu0 0.0
  %2255 = vmatprep.subr.mxu0 0.0
  %2256 = vmatpush1.msra.mxu0 0.0
  %2257 = vmatprep.subr.mxu0 0.0
  %2258 = vmatpush1.msra.mxu0 0.0
  %2259 = vmatprep.subr.mxu0 0.0
  %2260 = vmatpush1.msra.mxu0 0.0
  %2261 = vmatprep.subr.mxu0 0.0
  %2262 = vmatpush1.msra.mxu0 0.0
  %2263 = vmatprep.subr.mxu0 0.0
  %2264 = vmatpush1.msra.mxu0 0.0
  %2265 = vmatprep.subr.mxu0 0.0
  %2266 = vmatpush1.msra.mxu0 0.0
  %2267 = vmatprep.subr.mxu0 0.0
  %2268 = vmatpush1.msra.mxu0 0.0
  %2269 = vmatprep.subr.mxu0 0.0
  %2270 = vmatpush1.msra.mxu0 0.0
  %2271 = vmatprep.subr.mxu0 0.0
  %2272 = vmatpush1.msra.mxu0 0.0
  %2273 = vmatprep.subr.mxu0 0.0
  %2274 = vmatpush1.msra.mxu0 0.0
  %2275 = vmatprep.subr.mxu0 0.0
  %2276 = vmatpush1.msra.mxu0 0.0
  %2277 = vmatprep.subr.mxu0 0.0
  %2278 = vmatpush1.msra.mxu0 0.0
  %2279 = vmatprep.mubr.f32.mxu0 0.0
  %2280 = vmatmul.mubr.f32.gmra.mrb[0].mxu0 %v2213
  %v2281 = vpop.f32.mrb[0].mxu0
  %v2282 = vadd.f32 %v2208, %v2281
  %v2283 = vpop.f32.mrb[0].mxu0
  %2284 = vdwg.mxu0
  %vm2285 = vcmask 31744
  %2286 = vst.msk [vmem:[%s11] sm:$0xff] %vm2285, %v2282
  // Predicated region
  $region46: #{text_classifier_forward.1} parent=0 // pred_check
    _
  $region47: #{text_classifier_forward.1} parent=0 // pred_check_branch
    %2288 = sbr.rel (0) target = $region49
  $region48: #{text_classifier_forward.1} parent=0 // pred_region
    _
  $region49: #{text_classifier_forward.1} parent=0 // pred_fallthru
    _
  // Predicated region
  $region50: #{text_classifier_forward.1} parent=0 // pred_check
    _
  $region51: #{text_classifier_forward.1} parent=0 // pred_check_branch
    %2290 = sbr.rel (0) target = $region53
  $region52: #{text_classifier_forward.1} parent=0 // pred_region
    _
  $region53: #{text_classifier_forward.1} parent=0 // pred_fallthru
    _

</llo_original>
